<compile_context>
chip_gen: v7x
topology: tpu7x:2x2x1
jax: 0.10.0
libtpu: 0.0.40
codegen_flags: <defaults>
</compile_context>

<pallas_src>
import jax
import jax.numpy as jnp
from jax.experimental import pallas as pl
from jax.experimental.pallas import tpu as pltpu

# ----------------------- hyper-parameters (small, synthetic) -----------------
DIM = 32                      # encoder_embed_dim
HEADS = 4                     # encoder_attention_heads
DIM_HEAD = 8                  # encoder_embed_dim_head
INNER = HEADS * DIM_HEAD      # attention inner dim
FF_MULT = 4                   # encoder_ff_mult
FF_HID = DIM * FF_MULT
CONV_EXP = 2                  # encoder_conv_expansion_factor
CONV_INNER = DIM * CONV_EXP
KSIZE = 7                     # encoder_conv_kernel_size (odd -> symmetric same pad)
PAD_L = KSIZE // 2
PAD_R = PAD_L - (KSIZE + 1) % 2
MAX_POS = 16                  # max_pos_emb
SCALE = DIM_HEAD ** -0.5
LN_EPS = 1e-5
BN_EPS = 1e-5

SEQ = 8                       # T
BATCH = 2                     # B


# ----------------------------- kernel helpers --------------------------------
def _layernorm(x, g, b):
    mu = jnp.mean(x, axis=-1, keepdims=True)
    var = jnp.mean((x - mu) ** 2, axis=-1, keepdims=True)
    return (x - mu) * jax.lax.rsqrt(var + LN_EPS) * g + b


def _ffn(x, g, b, w1, b1, w2, b2):
    """Pre-norm FeedForward branch (Swish): bf16 matmuls, f32 elementwise math."""
    xn = _layernorm(x, g, b)
    h = jnp.dot(xn.astype(jnp.bfloat16), w1, preferred_element_type=jnp.float32) + b1
    h = h * jax.nn.sigmoid(h)                                     # Swish (f32)
    y = jnp.dot(h.astype(jnp.bfloat16), w2, preferred_element_type=jnp.float32) + b2
    # TODO(synk): nn.Dropout omitted (eval-mode identity).
    return y


# ------------------------------ fused Pallas kernel ---------------------------
def conformer_kernel(
    x_ref,
    # ff1
    f1g_ref, f1b_ref, f1w1_ref, f1b1_ref, f1w2_ref, f1b2_ref,
    # attention
    ag_ref, ab_ref, wq_ref, wk_ref, wv_ref, wo_ref, bo_ref, rel_ref,
    # conv module
    cg_ref, cb_ref, p1aw_ref, p1ab_ref, p1gw_ref, p1gb_ref,
    dww_ref, dwb_ref, bns_ref, bnt_ref, p2w_ref, p2b_ref,
    # ff2
    f2g_ref, f2b_ref, f2w1_ref, f2b1_ref, f2w2_ref, f2b2_ref,
    # post norm
    pg_ref, pb_ref,
    o_ref,
):
    """Whole ConformerBlock for one batch element; residual stream never leaves VMEM."""
    x = x_ref[0]                                                  # (T, C) f32
    T = x.shape[0]

    # ---------------- ff1: x + 0.5 * FF(LN(x)) ----------------
    x = x + 0.5 * _ffn(x, f1g_ref[...], f1b_ref[...],
                       f1w1_ref[...], f1b1_ref[...], f1w2_ref[...], f1b2_ref[...])

    # ---------------- attention: x + Attn(LN(x)) ----------------
    xn = _layernorm(x, ag_ref[...], ab_ref[...])
    xnb = xn.astype(jnp.bfloat16)
    q = jnp.dot(xnb, wq_ref[...], preferred_element_type=jnp.float32)   # (T, INNER)
    k = jnp.dot(xnb, wk_ref[...], preferred_element_type=jnp.float32)
    v = jnp.dot(xnb, wv_ref[...], preferred_element_type=jnp.float32)
    rel = rel_ref[...]                                            # (T, T, Dh) f32
    heads = []
    for h in range(HEADS):                    # static unroll; heads fully independent
        lo = h * DIM_HEAD
        qh = q[:, lo:lo + DIM_HEAD]                               # (T, Dh)
        kh = k[:, lo:lo + DIM_HEAD]
        vh = v[:, lo:lo + DIM_HEAD]
        dots = jax.lax.dot_general(
            qh.astype(jnp.bfloat16), kh.astype(jnp.bfloat16),
            (((1,), (1,)), ((), ())), preferred_element_type=jnp.float32) * SCALE
        # TODO(synk): at realistic T build rel-pos logits from the (2*MAX_POS+1, Dh)
        # table via an MXU dot instead of materializing the (T, T, Dh) tensor.
        pos = jnp.sum(qh[:, None, :] * rel, axis=-1) * SCALE      # (T, T) f32
        logits = dots + pos
        m = jnp.max(logits, axis=-1, keepdims=True)
        e = jnp.exp(logits - m)
        attn = e * pl.reciprocal(jnp.sum(e, axis=-1, keepdims=True), approx=True)
        heads.append(jnp.dot(attn.astype(jnp.bfloat16), vh.astype(jnp.bfloat16),
                             preferred_element_type=jnp.float32))  # (T, Dh)
    out = jnp.concatenate(heads, axis=-1)                         # (T, INNER)
    x = x + jnp.dot(out.astype(jnp.bfloat16), wo_ref[...],
                    preferred_element_type=jnp.float32) + bo_ref[...]

    # ---------------- conv module: x + Conv(x) ----------------
    xn = _layernorm(x, cg_ref[...], cb_ref[...])
    xnb = xn.astype(jnp.bfloat16)
    a = jnp.dot(xnb, p1aw_ref[...], preferred_element_type=jnp.float32) + p1ab_ref[...]
    g = jnp.dot(xnb, p1gw_ref[...], preferred_element_type=jnp.float32) + p1gb_ref[...]
    y = a * jax.nn.sigmoid(g)                                     # GLU, (T, CI) f32
    # Depthwise conv as shifted static slices of a zero-padded buffer (VPU/XLU, no MXU).
    parts = []
    if PAD_L:
        parts.append(jnp.zeros((PAD_L, CONV_INNER), jnp.float32))
    parts.append(y)
    if PAD_R:
        parts.append(jnp.zeros((PAD_R, CONV_INNER), jnp.float32))
    ypad = jnp.concatenate(parts, axis=0) if len(parts) > 1 else y  # (T+K-1, CI)
    dw = dww_ref[...]                                             # (K, CI) f32
    acc = jnp.zeros_like(y)
    for kk in range(KSIZE):                                       # static unroll over taps
        acc = acc + ypad[kk:kk + T, :] * dw[kk:kk + 1, :]
    y = acc + dwb_ref[...]
    # TODO(synk): BatchNorm1d implemented in eval mode (running stats folded to scale/shift).
    y = y * bns_ref[...] + bnt_ref[...]
    y = y * jax.nn.sigmoid(y)                                     # Swish
    z = jnp.dot(y.astype(jnp.bfloat16), p2w_ref[...],
                preferred_element_type=jnp.float32) + p2b_ref[...]
    x = x + z

    # ---------------- ff2: x + 0.5 * FF(LN(x)) ----------------
    x = x + 0.5 * _ffn(x, f2g_ref[...], f2b_ref[...],
                       f2w1_ref[...], f2b1_ref[...], f2w2_ref[...], f2b2_ref[...])

    # ---------------- post norm ----------------
    o_ref[0] = _layernorm(x, pg_ref[...], pb_ref[...])


# ------------------------------ pallas_call glue ------------------------------
@jax.jit
def conformer_block(x_tbc, p):
    """(T, B, C) -> (T, B, C), same semantics as the PyTorch ConformerBlock (eval)."""
    bf = lambda w: w.astype(jnp.bfloat16)           # matmul operands in bf16
    xb = jnp.transpose(x_tbc, (1, 0, 2))            # internal (B, T, C) layout
    weights = (
        # ff1
        p['ff1_ln_g'], p['ff1_ln_b'], bf(p['ff1_w1']), p['ff1_b1'], bf(p['ff1_w2']), p['ff1_b2'],
        # attention
        p['attn_ln_g'], p['attn_ln_b'], bf(p['wq']), bf(p['wk']), bf(p['wv']),
        bf(p['wo']), p['bo'], p['rel'],
        # conv module
        p['conv_ln_g'], p['conv_ln_b'], bf(p['pw1a_w']), p['pw1a_b'], bf(p['pw1g_w']), p['pw1g_b'],
        p['dw_w'], p['dw_b'], p['bn_s'], p['bn_t'], bf(p['pw2_w']), p['pw2_b'],
        # ff2
        p['ff2_ln_g'], p['ff2_ln_b'], bf(p['ff2_w1']), p['ff2_b1'], bf(p['ff2_w2']), p['ff2_b2'],
        # post norm
        p['post_g'], p['post_b'],
    )
    B, T, C = xb.shape

    def wspec(w):
        nd = w.ndim
        return pl.BlockSpec(w.shape, lambda i, _nd=nd: (0,) * _nd)  # grid-invariant

    out = pl.pallas_call(
        conformer_kernel,
        out_shape=jax.ShapeDtypeStruct((B, T, C), xb.dtype),
        grid=(B,),
        in_specs=[pl.BlockSpec((1, T, C), lambda i: (i, 0, 0))]
                 + [wspec(w) for w in weights],
        out_specs=pl.BlockSpec((1, T, C), lambda i: (i, 0, 0)),
        compiler_params=pltpu.CompilerParams(dimension_semantics=("parallel",)),
    )(xb, *weights)
    return jnp.transpose(out, (1, 0, 2))


# ------------------------ deterministic parameter init ------------------------
def init_params(key):
    keys = jax.random.split(key, 40)
    it = iter(keys)

    def nrm(shape, scale=0.05):
        return scale * jax.random.normal(next(it), shape, jnp.float32)

    p = {}
    # ff1 (Scale(0.5, PreNorm(LN, FeedForward)))
    p['ff1_ln_g'] = 1.0 + nrm((1, DIM)); p['ff1_ln_b'] = nrm((1, DIM))
    p['ff1_w1'] = nrm((DIM, FF_HID));    p['ff1_b1'] = nrm((1, FF_HID))
    p['ff1_w2'] = nrm((FF_HID, DIM));    p['ff1_b2'] = nrm((1, DIM))
    # attention (PreNorm(LN, Attention))
    p['attn_ln_g'] = 1.0 + nrm((1, DIM)); p['attn_ln_b'] = nrm((1, DIM))
    p['wq'] = nrm((DIM, INNER)); p['wk'] = nrm((DIM, INNER)); p['wv'] = nrm((DIM, INNER))
    p['wo'] = nrm((INNER, DIM)); p['bo'] = nrm((1, DIM))
    emb = nrm((2 * MAX_POS + 1, DIM_HEAD))                        # rel_pos_emb table
    seq = jnp.arange(SEQ)
    dist = jnp.clip(seq[:, None] - seq[None, :], -MAX_POS, MAX_POS) + MAX_POS
    p['rel'] = emb[dist]                                          # (T, T, Dh)
    # conv module
    p['conv_ln_g'] = 1.0 + nrm((1, DIM)); p['conv_ln_b'] = nrm((1, DIM))
    p['pw1_w'] = nrm((DIM, 2 * CONV_INNER)); p['pw1_b'] = nrm((1, 2 * CONV_INNER))
    p['pw1a_w'] = p['pw1_w'][:, :CONV_INNER]; p['pw1a_b'] = p['pw1_b'][:, :CONV_INNER]
    p['pw1g_w'] = p['pw1_w'][:, CONV_INNER:]; p['pw1g_b'] = p['pw1_b'][:, CONV_INNER:]
    p['dw_w'] = nrm((KSIZE, CONV_INNER));    p['dw_b'] = nrm((1, CONV_INNER))
    bn_g = 1.0 + nrm((1, CONV_INNER)); bn_b = nrm((1, CONV_INNER))
    p['bn_g'] = bn_g; p['bn_b'] = bn_b
    # TODO(synk): eval BN fold assumes running_mean=0, running_var=1; fold real
    # checkpoint running stats here when loading trained weights.
    p['bn_s'] = bn_g / jnp.sqrt(1.0 + BN_EPS)
    p['bn_t'] = bn_b
    p['pw2_w'] = nrm((CONV_INNER, DIM)); p['pw2_b'] = nrm((1, DIM))
    # ff2
    p['ff2_ln_g'] = 1.0 + nrm((1, DIM)); p['ff2_ln_b'] = nrm((1, DIM))
    p['ff2_w1'] = nrm((DIM, FF_HID));    p['ff2_b1'] = nrm((1, FF_HID))
    p['ff2_w2'] = nrm((FF_HID, DIM));    p['ff2_b2'] = nrm((1, DIM))
    # post norm
    p['post_g'] = 1.0 + nrm((1, DIM)); p['post_b'] = nrm((1, DIM))
    return p


# ------------------------------- pure-JAX reference ---------------------------
def _ref_ln(x, g, b):
    mu = jnp.mean(x, axis=-1, keepdims=True)
    var = jnp.mean((x - mu) ** 2, axis=-1, keepdims=True)
    return (x - mu) / jnp.sqrt(var + LN_EPS) * g + b


def reference(x, p):
    def ff(xn, w1, b1, w2, b2):
        h = xn @ w1 + b1
        h = h * jax.nn.sigmoid(h)
        return h @ w2 + b2

    # ff1
    x = 0.5 * ff(_ref_ln(x, p['ff1_ln_g'], p['ff1_ln_b']),
                 p['ff1_w1'], p['ff1_b1'], p['ff1_w2'], p['ff1_b2']) + x
    # attention
    xn = _ref_ln(x, p['attn_ln_g'], p['attn_ln_b'])
    xb = jnp.transpose(xn, (1, 0, 2))                             # (B, T, C)

    def split(t):
        return jnp.transpose(t.reshape(BATCH, SEQ, HEADS, DIM_HEAD), (0, 2, 1, 3))

    q, k, v = split(xb @ p['wq']), split(xb @ p['wk']), split(xb @ p['wv'])
    dots = jnp.einsum('bhid,bhjd->bhij', q, k) * SCALE
    pos = jnp.einsum('bhnd,nrd->bhnr', q, p['rel']) * SCALE
    a = jax.nn.softmax(dots + pos, axis=-1)
    out = jnp.einsum('bhij,bhjd->bhid', a, v)
    out = jnp.transpose(out, (0, 2, 1, 3)).reshape(BATCH, SEQ, INNER)
    out = out @ p['wo'] + p['bo']
    x = jnp.transpose(out, (1, 0, 2)) + x
    # conv module
    xn = _ref_ln(x, p['conv_ln_g'], p['conv_ln_b'])
    xb = jnp.transpose(xn, (1, 0, 2))
    h = xb @ p['pw1_w'] + p['pw1_b']
    y = h[..., :CONV_INNER] * jax.nn.sigmoid(h[..., CONV_INNER:])
    y_pad = jnp.pad(y, ((0, 0), (PAD_L, PAD_R), (0, 0)))
    dw = sum(y_pad[:, kk:kk + SEQ, :] * p['dw_w'][kk] for kk in range(KSIZE))
    dw = dw + p['dw_b']
    dw = dw / jnp.sqrt(1.0 + BN_EPS) * p['bn_g'] + p['bn_b']      # eval-mode BN
    dw = dw * jax.nn.sigmoid(dw)
    z = dw @ p['pw2_w'] + p['pw2_b']
    x = jnp.transpose(z, (1, 0, 2)) + x
    # ff2
    x = 0.5 * ff(_ref_ln(x, p['ff2_ln_g'], p['ff2_ln_b']),
                 p['ff2_w1'], p['ff2_b1'], p['ff2_w2'], p['ff2_b2']) + x
    return _ref_ln(x, p['post_g'], p['post_b'])


# ----------------------------------- main --------------------------------------
if __name__ == "__main__":
    key = jax.random.PRNGKey(0)
    kx, kp = jax.random.split(key)
    x = jax.random.normal(kx, (SEQ, BATCH, DIM), jnp.float32)     # (T, B, C)
    params = init_params(kp)

    out = conformer_block(x, params)
    out = jax.block_until_ready(out)
    assert out.shape == (SEQ, BATCH, DIM)

    ref = reference(x, params)
    if not bool(jnp.allclose(out, ref, atol=1e-2, rtol=1e-2)):
        err = float(jnp.max(jnp.abs(out - ref)))
        raise AssertionError(
            f"Pallas output does not match JAX reference (max abs err {err:.3e})")
    print("KERNEL_OK")
</pallas_src>

<mosaic_0001>
module attributes {stable_mosaic.version = 11 : i64} {
  func.func @conformer_kernel(%arg0: i32, %arg1: memref<1x8x32xf32, #tpu.memory_space<vmem>>, %arg2: memref<1x32xf32, #tpu.memory_space<vmem>>, %arg3: memref<1x32xf32, #tpu.memory_space<vmem>>, %arg4: memref<32x128xbf16, #tpu.memory_space<vmem>>, %arg5: memref<1x128xf32, #tpu.memory_space<vmem>>, %arg6: memref<128x32xbf16, #tpu.memory_space<vmem>>, %arg7: memref<1x32xf32, #tpu.memory_space<vmem>>, %arg8: memref<1x32xf32, #tpu.memory_space<vmem>>, %arg9: memref<1x32xf32, #tpu.memory_space<vmem>>, %arg10: memref<32x32xbf16, #tpu.memory_space<vmem>>, %arg11: memref<32x32xbf16, #tpu.memory_space<vmem>>, %arg12: memref<32x32xbf16, #tpu.memory_space<vmem>>, %arg13: memref<32x32xbf16, #tpu.memory_space<vmem>>, %arg14: memref<1x32xf32, #tpu.memory_space<vmem>>, %arg15: memref<8x8x8xf32, #tpu.memory_space<vmem>>, %arg16: memref<1x32xf32, #tpu.memory_space<vmem>>, %arg17: memref<1x32xf32, #tpu.memory_space<vmem>>, %arg18: memref<32x64xbf16, #tpu.memory_space<vmem>>, %arg19: memref<1x64xf32, #tpu.memory_space<vmem>>, %arg20: memref<32x64xbf16, #tpu.memory_space<vmem>>, %arg21: memref<1x64xf32, #tpu.memory_space<vmem>>, %arg22: memref<7x64xf32, #tpu.memory_space<vmem>>, %arg23: memref<1x64xf32, #tpu.memory_space<vmem>>, %arg24: memref<1x64xf32, #tpu.memory_space<vmem>>, %arg25: memref<1x64xf32, #tpu.memory_space<vmem>>, %arg26: memref<64x32xbf16, #tpu.memory_space<vmem>>, %arg27: memref<1x32xf32, #tpu.memory_space<vmem>>, %arg28: memref<1x32xf32, #tpu.memory_space<vmem>>, %arg29: memref<1x32xf32, #tpu.memory_space<vmem>>, %arg30: memref<32x128xbf16, #tpu.memory_space<vmem>>, %arg31: memref<1x128xf32, #tpu.memory_space<vmem>>, %arg32: memref<128x32xbf16, #tpu.memory_space<vmem>>, %arg33: memref<1x32xf32, #tpu.memory_space<vmem>>, %arg34: memref<1x32xf32, #tpu.memory_space<vmem>>, %arg35: memref<1x32xf32, #tpu.memory_space<vmem>>, %arg36: memref<1x8x32xf32, #tpu.memory_space<vmem>>) attributes {dimension_semantics = [#tpu.dimension_semantics<parallel>], iteration_bounds = array<i64: 2>, scalar_prefetch = 0 : i64, scratch_operands = 0 : i64, tpu.core_type = #tpu.core_type<tc>, window_params = [{transform_indices = @transform_0, window_bounds = array<i64: 1, 8, 32>}, {pipeline_mode = #tpu.pipeline_mode<synchronous>, transform_indices = @transform_1, window_bounds = array<i64: 1, 32>}, {pipeline_mode = #tpu.pipeline_mode<synchronous>, transform_indices = @transform_2, window_bounds = array<i64: 1, 32>}, {pipeline_mode = #tpu.pipeline_mode<synchronous>, transform_indices = @transform_3, window_bounds = array<i64: 32, 128>}, {pipeline_mode = #tpu.pipeline_mode<synchronous>, transform_indices = @transform_4, window_bounds = array<i64: 1, 128>}, {pipeline_mode = #tpu.pipeline_mode<synchronous>, transform_indices = @transform_5, window_bounds = array<i64: 128, 32>}, {pipeline_mode = #tpu.pipeline_mode<synchronous>, transform_indices = @transform_6, window_bounds = array<i64: 1, 32>}, {pipeline_mode = #tpu.pipeline_mode<synchronous>, transform_indices = @transform_7, window_bounds = array<i64: 1, 32>}, {pipeline_mode = #tpu.pipeline_mode<synchronous>, transform_indices = @transform_8, window_bounds = array<i64: 1, 32>}, {pipeline_mode = #tpu.pipeline_mode<synchronous>, transform_indices = @transform_9, window_bounds = array<i64: 32, 32>}, {pipeline_mode = #tpu.pipeline_mode<synchronous>, transform_indices = @transform_10, window_bounds = array<i64: 32, 32>}, {pipeline_mode = #tpu.pipeline_mode<synchronous>, transform_indices = @transform_11, window_bounds = array<i64: 32, 32>}, {pipeline_mode = #tpu.pipeline_mode<synchronous>, transform_indices = @transform_12, window_bounds = array<i64: 32, 32>}, {pipeline_mode = #tpu.pipeline_mode<synchronous>, transform_indices = @transform_13, window_bounds = array<i64: 1, 32>}, {pipeline_mode = #tpu.pipeline_mode<synchronous>, transform_indices = @transform_14, window_bounds = array<i64: 8, 8, 8>}, {pipeline_mode = #tpu.pipeline_mode<synchronous>, transform_indices = @transform_15, window_bounds = array<i64: 1, 32>}, {pipeline_mode = #tpu.pipeline_mode<synchronous>, transform_indices = @transform_16, window_bounds = array<i64: 1, 32>}, {pipeline_mode = #tpu.pipeline_mode<synchronous>, transform_indices = @transform_17, window_bounds = array<i64: 32, 64>}, {pipeline_mode = #tpu.pipeline_mode<synchronous>, transform_indices = @transform_18, window_bounds = array<i64: 1, 64>}, {pipeline_mode = #tpu.pipeline_mode<synchronous>, transform_indices = @transform_19, window_bounds = array<i64: 32, 64>}, {pipeline_mode = #tpu.pipeline_mode<synchronous>, transform_indices = @transform_20, window_bounds = array<i64: 1, 64>}, {pipeline_mode = #tpu.pipeline_mode<synchronous>, transform_indices = @transform_21, window_bounds = array<i64: 7, 64>}, {pipeline_mode = #tpu.pipeline_mode<synchronous>, transform_indices = @transform_22, window_bounds = array<i64: 1, 64>}, {pipeline_mode = #tpu.pipeline_mode<synchronous>, transform_indices = @transform_23, window_bounds = array<i64: 1, 64>}, {pipeline_mode = #tpu.pipeline_mode<synchronous>, transform_indices = @transform_24, window_bounds = array<i64: 1, 64>}, {pipeline_mode = #tpu.pipeline_mode<synchronous>, transform_indices = @transform_25, window_bounds = array<i64: 64, 32>}, {pipeline_mode = #tpu.pipeline_mode<synchronous>, transform_indices = @transform_26, window_bounds = array<i64: 1, 32>}, {pipeline_mode = #tpu.pipeline_mode<synchronous>, transform_indices = @transform_27, window_bounds = array<i64: 1, 32>}, {pipeline_mode = #tpu.pipeline_mode<synchronous>, transform_indices = @transform_28, window_bounds = array<i64: 1, 32>}, {pipeline_mode = #tpu.pipeline_mode<synchronous>, transform_indices = @transform_29, window_bounds = array<i64: 32, 128>}, {pipeline_mode = #tpu.pipeline_mode<synchronous>, transform_indices = @transform_30, window_bounds = array<i64: 1, 128>}, {pipeline_mode = #tpu.pipeline_mode<synchronous>, transform_indices = @transform_31, window_bounds = array<i64: 128, 32>}, {pipeline_mode = #tpu.pipeline_mode<synchronous>, transform_indices = @transform_32, window_bounds = array<i64: 1, 32>}, {pipeline_mode = #tpu.pipeline_mode<synchronous>, transform_indices = @transform_33, window_bounds = array<i64: 1, 32>}, {pipeline_mode = #tpu.pipeline_mode<synchronous>, transform_indices = @transform_34, window_bounds = array<i64: 1, 32>}, {transform_indices = @transform_35, window_bounds = array<i64: 1, 8, 32>}]} {
    %c0 = arith.constant 0 : index
    %c0_0 = arith.constant 0 : index
    %c0_1 = arith.constant 0 : index
    %0 = vector.load %arg1[%c0, %c0_0, %c0_1] : memref<1x8x32xf32, #tpu.memory_space<vmem>>, vector<1x8x32xf32>
    %1 = vector.shape_cast %0 : vector<1x8x32xf32> to vector<8x32xf32>
    %c0_2 = arith.constant 0 : index
    %c0_3 = arith.constant 0 : index
    %2 = vector.load %arg2[%c0_2, %c0_3] : memref<1x32xf32, #tpu.memory_space<vmem>>, vector<1x32xf32>
    %c0_4 = arith.constant 0 : index
    %c0_5 = arith.constant 0 : index
    %3 = vector.load %arg3[%c0_4, %c0_5] : memref<1x32xf32, #tpu.memory_space<vmem>>, vector<1x32xf32>
    %c0_6 = arith.constant 0 : index
    %c0_7 = arith.constant 0 : index
    %4 = vector.load %arg4[%c0_6, %c0_7] : memref<32x128xbf16, #tpu.memory_space<vmem>>, vector<32x128xbf16>
    %c0_8 = arith.constant 0 : index
    %c0_9 = arith.constant 0 : index
    %5 = vector.load %arg5[%c0_8, %c0_9] : memref<1x128xf32, #tpu.memory_space<vmem>>, vector<1x128xf32>
    %c0_10 = arith.constant 0 : index
    %c0_11 = arith.constant 0 : index
    %6 = vector.load %arg6[%c0_10, %c0_11] : memref<128x32xbf16, #tpu.memory_space<vmem>>, vector<128x32xbf16>
    %c0_12 = arith.constant 0 : index
    %c0_13 = arith.constant 0 : index
    %7 = vector.load %arg7[%c0_12, %c0_13] : memref<1x32xf32, #tpu.memory_space<vmem>>, vector<1x32xf32>
    %cst = arith.constant dense<0.000000e+00> : vector<8xf32>
    %8 = vector.multi_reduction <add>, %1, %cst [1] : vector<8x32xf32> to vector<8xf32>
    %9 = vector.shape_cast %8 : vector<8xf32> to vector<8x1xf32>
    %cst_14 = arith.constant 3.200000e+01 : f32
    %10 = vector.broadcast %cst_14 : f32 to vector<8x1xf32>
    %11 = arith.divf %9, %10 : vector<8x1xf32>
    %12 = vector.broadcast %11 : vector<8x1xf32> to vector<8x32xf32>
    %13 = arith.subf %1, %12 : vector<8x32xf32>
    %14 = arith.mulf %13, %13 : vector<8x32xf32>
    %cst_15 = arith.constant dense<0.000000e+00> : vector<8xf32>
    %15 = vector.multi_reduction <add>, %14, %cst_15 [1] : vector<8x32xf32> to vector<8xf32>
    %16 = vector.shape_cast %15 : vector<8xf32> to vector<8x1xf32>
    %cst_16 = arith.constant 3.200000e+01 : f32
    %17 = vector.broadcast %cst_16 : f32 to vector<8x1xf32>
    %18 = arith.divf %16, %17 : vector<8x1xf32>
    %19 = vector.broadcast %11 : vector<8x1xf32> to vector<8x32xf32>
    %20 = arith.subf %1, %19 : vector<8x32xf32>
    %cst_17 = arith.constant 9.99999974E-6 : f32
    %21 = vector.broadcast %cst_17 : f32 to vector<8x1xf32>
    %22 = arith.addf %18, %21 : vector<8x1xf32>
    %23 = math.rsqrt %22 : vector<8x1xf32>
    %24 = vector.broadcast %23 : vector<8x1xf32> to vector<8x32xf32>
    %25 = arith.mulf %20, %24 : vector<8x32xf32>
    %26 = vector.broadcast %2 : vector<1x32xf32> to vector<8x32xf32>
    %27 = arith.mulf %25, %26 : vector<8x32xf32>
    %28 = vector.broadcast %3 : vector<1x32xf32> to vector<8x32xf32>
    %29 = arith.addf %27, %28 : vector<8x32xf32>
    %30 = arith.truncf %29 : vector<8x32xf32> to vector<8x32xbf16>
    %cst_18 = arith.constant dense<0.000000e+00> : vector<8x128xf32>
    %31 = tpu.matmul %30, %4, %cst_18 {dimension_numbers = #tpu.dot_dimension_numbers<[1], [0], [0], [1], [0, 0, 1, 1], [], []>} : vector<8x32xbf16>, vector<32x128xbf16>, vector<8x128xf32> -> vector<8x128xf32>
    %32 = vector.broadcast %5 : vector<1x128xf32> to vector<8x128xf32>
    %33 = arith.addf %31, %32 : vector<8x128xf32>
    %34 = arith.negf %33 : vector<8x128xf32>
    %35 = math.exp %34 : vector<8x128xf32>
    %cst_19 = arith.constant 1.000000e+00 : f32
    %36 = vector.broadcast %cst_19 : f32 to vector<8x128xf32>
    %37 = arith.addf %36, %35 : vector<8x128xf32>
    %38 = arith.divf %36, %37 : vector<8x128xf32>
    %39 = arith.mulf %33, %38 : vector<8x128xf32>
    %40 = arith.truncf %39 : vector<8x128xf32> to vector<8x128xbf16>
    %cst_20 = arith.constant dense<0.000000e+00> : vector<8x32xf32>
    %41 = tpu.matmul %40, %6, %cst_20 {dimension_numbers = #tpu.dot_dimension_numbers<[1], [0], [0], [1], [0, 0, 1, 1], [], []>} : vector<8x128xbf16>, vector<128x32xbf16>, vector<8x32xf32> -> vector<8x32xf32>
    %42 = vector.broadcast %7 : vector<1x32xf32> to vector<8x32xf32>
    %43 = arith.addf %41, %42 : vector<8x32xf32>
    %cst_21 = arith.constant 5.000000e-01 : f32
    %44 = vector.broadcast %cst_21 : f32 to vector<8x32xf32>
    %45 = arith.mulf %44, %43 : vector<8x32xf32>
    %46 = arith.addf %1, %45 : vector<8x32xf32>
    %c0_22 = arith.constant 0 : index
    %c0_23 = arith.constant 0 : index
    %47 = vector.load %arg8[%c0_22, %c0_23] : memref<1x32xf32, #tpu.memory_space<vmem>>, vector<1x32xf32>
    %c0_24 = arith.constant 0 : index
    %c0_25 = arith.constant 0 : index
    %48 = vector.load %arg9[%c0_24, %c0_25] : memref<1x32xf32, #tpu.memory_space<vmem>>, vector<1x32xf32>
    %cst_26 = arith.constant dense<0.000000e+00> : vector<8xf32>
    %49 = vector.multi_reduction <add>, %46, %cst_26 [1] : vector<8x32xf32> to vector<8xf32>
    %50 = vector.shape_cast %49 : vector<8xf32> to vector<8x1xf32>
    %cst_27 = arith.constant 3.200000e+01 : f32
    %51 = vector.broadcast %cst_27 : f32 to vector<8x1xf32>
    %52 = arith.divf %50, %51 : vector<8x1xf32>
    %53 = vector.broadcast %52 : vector<8x1xf32> to vector<8x32xf32>
    %54 = arith.subf %46, %53 : vector<8x32xf32>
    %55 = arith.mulf %54, %54 : vector<8x32xf32>
    %cst_28 = arith.constant dense<0.000000e+00> : vector<8xf32>
    %56 = vector.multi_reduction <add>, %55, %cst_28 [1] : vector<8x32xf32> to vector<8xf32>
    %57 = vector.shape_cast %56 : vector<8xf32> to vector<8x1xf32>
    %cst_29 = arith.constant 3.200000e+01 : f32
    %58 = vector.broadcast %cst_29 : f32 to vector<8x1xf32>
    %59 = arith.divf %57, %58 : vector<8x1xf32>
    %60 = vector.broadcast %52 : vector<8x1xf32> to vector<8x32xf32>
    %61 = arith.subf %46, %60 : vector<8x32xf32>
    %cst_30 = arith.constant 9.99999974E-6 : f32
    %62 = vector.broadcast %cst_30 : f32 to vector<8x1xf32>
    %63 = arith.addf %59, %62 : vector<8x1xf32>
    %64 = math.rsqrt %63 : vector<8x1xf32>
    %65 = vector.broadcast %64 : vector<8x1xf32> to vector<8x32xf32>
    %66 = arith.mulf %61, %65 : vector<8x32xf32>
    %67 = vector.broadcast %47 : vector<1x32xf32> to vector<8x32xf32>
    %68 = arith.mulf %66, %67 : vector<8x32xf32>
    %69 = vector.broadcast %48 : vector<1x32xf32> to vector<8x32xf32>
    %70 = arith.addf %68, %69 : vector<8x32xf32>
    %71 = arith.truncf %70 : vector<8x32xf32> to vector<8x32xbf16>
    %c0_31 = arith.constant 0 : index
    %c0_32 = arith.constant 0 : index
    %72 = vector.load %arg10[%c0_31, %c0_32] : memref<32x32xbf16, #tpu.memory_space<vmem>>, vector<32x32xbf16>
    %cst_33 = arith.constant dense<0.000000e+00> : vector<8x32xf32>
    %73 = tpu.matmul %71, %72, %cst_33 {dimension_numbers = #tpu.dot_dimension_numbers<[1], [0], [0], [1], [0, 0, 1, 1], [], []>} : vector<8x32xbf16>, vector<32x32xbf16>, vector<8x32xf32> -> vector<8x32xf32>
    %c0_34 = arith.constant 0 : index
    %c0_35 = arith.constant 0 : index
    %74 = vector.load %arg11[%c0_34, %c0_35] : memref<32x32xbf16, #tpu.memory_space<vmem>>, vector<32x32xbf16>
    %cst_36 = arith.constant dense<0.000000e+00> : vector<8x32xf32>
    %75 = tpu.matmul %71, %74, %cst_36 {dimension_numbers = #tpu.dot_dimension_numbers<[1], [0], [0], [1], [0, 0, 1, 1], [], []>} : vector<8x32xbf16>, vector<32x32xbf16>, vector<8x32xf32> -> vector<8x32xf32>
    %c0_37 = arith.constant 0 : index
    %c0_38 = arith.constant 0 : index
    %76 = vector.load %arg12[%c0_37, %c0_38] : memref<32x32xbf16, #tpu.memory_space<vmem>>, vector<32x32xbf16>
    %cst_39 = arith.constant dense<0.000000e+00> : vector<8x32xf32>
    %77 = tpu.matmul %71, %76, %cst_39 {dimension_numbers = #tpu.dot_dimension_numbers<[1], [0], [0], [1], [0, 0, 1, 1], [], []>} : vector<8x32xbf16>, vector<32x32xbf16>, vector<8x32xf32> -> vector<8x32xf32>
    %c0_40 = arith.constant 0 : index
    %c0_41 = arith.constant 0 : index
    %c0_42 = arith.constant 0 : index
    %78 = vector.load %arg15[%c0_40, %c0_41, %c0_42] : memref<8x8x8xf32, #tpu.memory_space<vmem>>, vector<8x8x8xf32>
    %79 = vector.extract_strided_slice %73 {offsets = [0, 0], sizes = [8, 8], strides = [1, 1]} : vector<8x32xf32> to vector<8x8xf32>
    %80 = vector.extract_strided_slice %75 {offsets = [0, 0], sizes = [8, 8], strides = [1, 1]} : vector<8x32xf32> to vector<8x8xf32>
    %81 = vector.extract_strided_slice %77 {offsets = [0, 0], sizes = [8, 8], strides = [1, 1]} : vector<8x32xf32> to vector<8x8xf32>
    %82 = arith.truncf %79 : vector<8x8xf32> to vector<8x8xbf16>
    %83 = arith.truncf %80 : vector<8x8xf32> to vector<8x8xbf16>
    %cst_43 = arith.constant dense<0.000000e+00> : vector<8x8xf32>
    %84 = tpu.matmul %82, %83, %cst_43 {dimension_numbers = #tpu.dot_dimension_numbers<[1], [1], [0], [0], [0, 0, 1, 0], [], []>} : vector<8x8xbf16>, vector<8x8xbf16>, vector<8x8xf32> -> vector<8x8xf32>
    %cst_44 = arith.constant 0.353553385 : f32
    %85 = vector.broadcast %cst_44 : f32 to vector<8x8xf32>
    %86 = arith.mulf %84, %85 : vector<8x8xf32>
    %87 = vector.shape_cast %79 : vector<8x8xf32> to vector<8x1x8xf32>
    %88 = vector.broadcast %87 : vector<8x1x8xf32> to vector<8x8x8xf32>
    %89 = arith.mulf %88, %78 : vector<8x8x8xf32>
    %cst_45 = arith.constant dense<0.000000e+00> : vector<8x8xf32>
    %90 = vector.multi_reduction <add>, %89, %cst_45 [2] : vector<8x8x8xf32> to vector<8x8xf32>
    %cst_46 = arith.constant 0.353553385 : f32
    %91 = vector.broadcast %cst_46 : f32 to vector<8x8xf32>
    %92 = arith.mulf %90, %91 : vector<8x8xf32>
    %93 = arith.addf %86, %92 : vector<8x8xf32>
    %cst_47 = arith.constant dense<0xFF800000> : vector<8xf32>
    %94 = vector.multi_reduction <maximumf>, %93, %cst_47 [1] : vector<8x8xf32> to vector<8xf32>
    %95 = vector.shape_cast %94 : vector<8xf32> to vector<8x1xf32>
    %96 = vector.broadcast %95 : vector<8x1xf32> to vector<8x8xf32>
    %97 = arith.subf %93, %96 : vector<8x8xf32>
    %98 = math.exp %97 : vector<8x8xf32>
    %cst_48 = arith.constant dense<0.000000e+00> : vector<8xf32>
    %99 = vector.multi_reduction <add>, %98, %cst_48 [1] : vector<8x8xf32> to vector<8xf32>
    %100 = vector.shape_cast %99 : vector<8xf32> to vector<8x1xf32>
    %101 = tpu.reciprocal %100 {approx = true} : vector<8x1xf32> -> vector<8x1xf32>
    %102 = vector.broadcast %101 : vector<8x1xf32> to vector<8x8xf32>
    %103 = arith.mulf %98, %102 : vector<8x8xf32>
    %104 = arith.truncf %103 : vector<8x8xf32> to vector<8x8xbf16>
    %105 = arith.truncf %81 : vector<8x8xf32> to vector<8x8xbf16>
    %cst_49 = arith.constant dense<0.000000e+00> : vector<8x8xf32>
    %106 = tpu.matmul %104, %105, %cst_49 {dimension_numbers = #tpu.dot_dimension_numbers<[1], [0], [0], [1], [0, 0, 1, 1], [], []>} : vector<8x8xbf16>, vector<8x8xbf16>, vector<8x8xf32> -> vector<8x8xf32>
    %107 = vector.extract_strided_slice %73 {offsets = [0, 8], sizes = [8, 8], strides = [1, 1]} : vector<8x32xf32> to vector<8x8xf32>
    %108 = vector.extract_strided_slice %75 {offsets = [0, 8], sizes = [8, 8], strides = [1, 1]} : vector<8x32xf32> to vector<8x8xf32>
    %109 = vector.extract_strided_slice %77 {offsets = [0, 8], sizes = [8, 8], strides = [1, 1]} : vector<8x32xf32> to vector<8x8xf32>
    %110 = arith.truncf %107 : vector<8x8xf32> to vector<8x8xbf16>
    %111 = arith.truncf %108 : vector<8x8xf32> to vector<8x8xbf16>
    %cst_50 = arith.constant dense<0.000000e+00> : vector<8x8xf32>
    %112 = tpu.matmul %110, %111, %cst_50 {dimension_numbers = #tpu.dot_dimension_numbers<[1], [1], [0], [0], [0, 0, 1, 0], [], []>} : vector<8x8xbf16>, vector<8x8xbf16>, vector<8x8xf32> -> vector<8x8xf32>
    %cst_51 = arith.constant 0.353553385 : f32
    %113 = vector.broadcast %cst_51 : f32 to vector<8x8xf32>
    %114 = arith.mulf %112, %113 : vector<8x8xf32>
    %115 = vector.shape_cast %107 : vector<8x8xf32> to vector<8x1x8xf32>
    %116 = vector.broadcast %115 : vector<8x1x8xf32> to vector<8x8x8xf32>
    %117 = arith.mulf %116, %78 : vector<8x8x8xf32>
    %cst_52 = arith.constant dense<0.000000e+00> : vector<8x8xf32>
    %118 = vector.multi_reduction <add>, %117, %cst_52 [2] : vector<8x8x8xf32> to vector<8x8xf32>
    %cst_53 = arith.constant 0.353553385 : f32
    %119 = vector.broadcast %cst_53 : f32 to vector<8x8xf32>
    %120 = arith.mulf %118, %119 : vector<8x8xf32>
    %121 = arith.addf %114, %120 : vector<8x8xf32>
    %cst_54 = arith.constant dense<0xFF800000> : vector<8xf32>
    %122 = vector.multi_reduction <maximumf>, %121, %cst_54 [1] : vector<8x8xf32> to vector<8xf32>
    %123 = vector.shape_cast %122 : vector<8xf32> to vector<8x1xf32>
    %124 = vector.broadcast %123 : vector<8x1xf32> to vector<8x8xf32>
    %125 = arith.subf %121, %124 : vector<8x8xf32>
    %126 = math.exp %125 : vector<8x8xf32>
    %cst_55 = arith.constant dense<0.000000e+00> : vector<8xf32>
    %127 = vector.multi_reduction <add>, %126, %cst_55 [1] : vector<8x8xf32> to vector<8xf32>
    %128 = vector.shape_cast %127 : vector<8xf32> to vector<8x1xf32>
    %129 = tpu.reciprocal %128 {approx = true} : vector<8x1xf32> -> vector<8x1xf32>
    %130 = vector.broadcast %129 : vector<8x1xf32> to vector<8x8xf32>
    %131 = arith.mulf %126, %130 : vector<8x8xf32>
    %132 = arith.truncf %131 : vector<8x8xf32> to vector<8x8xbf16>
    %133 = arith.truncf %109 : vector<8x8xf32> to vector<8x8xbf16>
    %cst_56 = arith.constant dense<0.000000e+00> : vector<8x8xf32>
    %134 = tpu.matmul %132, %133, %cst_56 {dimension_numbers = #tpu.dot_dimension_numbers<[1], [0], [0], [1], [0, 0, 1, 1], [], []>} : vector<8x8xbf16>, vector<8x8xbf16>, vector<8x8xf32> -> vector<8x8xf32>
    %135 = vector.extract_strided_slice %73 {offsets = [0, 16], sizes = [8, 8], strides = [1, 1]} : vector<8x32xf32> to vector<8x8xf32>
    %136 = vector.extract_strided_slice %75 {offsets = [0, 16], sizes = [8, 8], strides = [1, 1]} : vector<8x32xf32> to vector<8x8xf32>
    %137 = vector.extract_strided_slice %77 {offsets = [0, 16], sizes = [8, 8], strides = [1, 1]} : vector<8x32xf32> to vector<8x8xf32>
    %138 = arith.truncf %135 : vector<8x8xf32> to vector<8x8xbf16>
    %139 = arith.truncf %136 : vector<8x8xf32> to vector<8x8xbf16>
    %cst_57 = arith.constant dense<0.000000e+00> : vector<8x8xf32>
    %140 = tpu.matmul %138, %139, %cst_57 {dimension_numbers = #tpu.dot_dimension_numbers<[1], [1], [0], [0], [0, 0, 1, 0], [], []>} : vector<8x8xbf16>, vector<8x8xbf16>, vector<8x8xf32> -> vector<8x8xf32>
    %cst_58 = arith.constant 0.353553385 : f32
    %141 = vector.broadcast %cst_58 : f32 to vector<8x8xf32>
    %142 = arith.mulf %140, %141 : vector<8x8xf32>
    %143 = vector.shape_cast %135 : vector<8x8xf32> to vector<8x1x8xf32>
    %144 = vector.broadcast %143 : vector<8x1x8xf32> to vector<8x8x8xf32>
    %145 = arith.mulf %144, %78 : vector<8x8x8xf32>
    %cst_59 = arith.constant dense<0.000000e+00> : vector<8x8xf32>
    %146 = vector.multi_reduction <add>, %145, %cst_59 [2] : vector<8x8x8xf32> to vector<8x8xf32>
    %cst_60 = arith.constant 0.353553385 : f32
    %147 = vector.broadcast %cst_60 : f32 to vector<8x8xf32>
    %148 = arith.mulf %146, %147 : vector<8x8xf32>
    %149 = arith.addf %142, %148 : vector<8x8xf32>
    %cst_61 = arith.constant dense<0xFF800000> : vector<8xf32>
    %150 = vector.multi_reduction <maximumf>, %149, %cst_61 [1] : vector<8x8xf32> to vector<8xf32>
    %151 = vector.shape_cast %150 : vector<8xf32> to vector<8x1xf32>
    %152 = vector.broadcast %151 : vector<8x1xf32> to vector<8x8xf32>
    %153 = arith.subf %149, %152 : vector<8x8xf32>
    %154 = math.exp %153 : vector<8x8xf32>
    %cst_62 = arith.constant dense<0.000000e+00> : vector<8xf32>
    %155 = vector.multi_reduction <add>, %154, %cst_62 [1] : vector<8x8xf32> to vector<8xf32>
    %156 = vector.shape_cast %155 : vector<8xf32> to vector<8x1xf32>
    %157 = tpu.reciprocal %156 {approx = true} : vector<8x1xf32> -> vector<8x1xf32>
    %158 = vector.broadcast %157 : vector<8x1xf32> to vector<8x8xf32>
    %159 = arith.mulf %154, %158 : vector<8x8xf32>
    %160 = arith.truncf %159 : vector<8x8xf32> to vector<8x8xbf16>
    %161 = arith.truncf %137 : vector<8x8xf32> to vector<8x8xbf16>
    %cst_63 = arith.constant dense<0.000000e+00> : vector<8x8xf32>
    %162 = tpu.matmul %160, %161, %cst_63 {dimension_numbers = #tpu.dot_dimension_numbers<[1], [0], [0], [1], [0, 0, 1, 1], [], []>} : vector<8x8xbf16>, vector<8x8xbf16>, vector<8x8xf32> -> vector<8x8xf32>
    %163 = vector.extract_strided_slice %73 {offsets = [0, 24], sizes = [8, 8], strides = [1, 1]} : vector<8x32xf32> to vector<8x8xf32>
    %164 = vector.extract_strided_slice %75 {offsets = [0, 24], sizes = [8, 8], strides = [1, 1]} : vector<8x32xf32> to vector<8x8xf32>
    %165 = vector.extract_strided_slice %77 {offsets = [0, 24], sizes = [8, 8], strides = [1, 1]} : vector<8x32xf32> to vector<8x8xf32>
    %166 = arith.truncf %163 : vector<8x8xf32> to vector<8x8xbf16>
    %167 = arith.truncf %164 : vector<8x8xf32> to vector<8x8xbf16>
    %cst_64 = arith.constant dense<0.000000e+00> : vector<8x8xf32>
    %168 = tpu.matmul %166, %167, %cst_64 {dimension_numbers = #tpu.dot_dimension_numbers<[1], [1], [0], [0], [0, 0, 1, 0], [], []>} : vector<8x8xbf16>, vector<8x8xbf16>, vector<8x8xf32> -> vector<8x8xf32>
    %cst_65 = arith.constant 0.353553385 : f32
    %169 = vector.broadcast %cst_65 : f32 to vector<8x8xf32>
    %170 = arith.mulf %168, %169 : vector<8x8xf32>
    %171 = vector.shape_cast %163 : vector<8x8xf32> to vector<8x1x8xf32>
    %172 = vector.broadcast %171 : vector<8x1x8xf32> to vector<8x8x8xf32>
    %173 = arith.mulf %172, %78 : vector<8x8x8xf32>
    %cst_66 = arith.constant dense<0.000000e+00> : vector<8x8xf32>
    %174 = vector.multi_reduction <add>, %173, %cst_66 [2] : vector<8x8x8xf32> to vector<8x8xf32>
    %cst_67 = arith.constant 0.353553385 : f32
    %175 = vector.broadcast %cst_67 : f32 to vector<8x8xf32>
    %176 = arith.mulf %174, %175 : vector<8x8xf32>
    %177 = arith.addf %170, %176 : vector<8x8xf32>
    %cst_68 = arith.constant dense<0xFF800000> : vector<8xf32>
    %178 = vector.multi_reduction <maximumf>, %177, %cst_68 [1] : vector<8x8xf32> to vector<8xf32>
    %179 = vector.shape_cast %178 : vector<8xf32> to vector<8x1xf32>
    %180 = vector.broadcast %179 : vector<8x1xf32> to vector<8x8xf32>
    %181 = arith.subf %177, %180 : vector<8x8xf32>
    %182 = math.exp %181 : vector<8x8xf32>
    %cst_69 = arith.constant dense<0.000000e+00> : vector<8xf32>
    %183 = vector.multi_reduction <add>, %182, %cst_69 [1] : vector<8x8xf32> to vector<8xf32>
    %184 = vector.shape_cast %183 : vector<8xf32> to vector<8x1xf32>
    %185 = tpu.reciprocal %184 {approx = true} : vector<8x1xf32> -> vector<8x1xf32>
    %186 = vector.broadcast %185 : vector<8x1xf32> to vector<8x8xf32>
    %187 = arith.mulf %182, %186 : vector<8x8xf32>
    %188 = arith.truncf %187 : vector<8x8xf32> to vector<8x8xbf16>
    %189 = arith.truncf %165 : vector<8x8xf32> to vector<8x8xbf16>
    %cst_70 = arith.constant dense<0.000000e+00> : vector<8x8xf32>
    %190 = tpu.matmul %188, %189, %cst_70 {dimension_numbers = #tpu.dot_dimension_numbers<[1], [0], [0], [1], [0, 0, 1, 1], [], []>} : vector<8x8xbf16>, vector<8x8xbf16>, vector<8x8xf32> -> vector<8x8xf32>
    %191 = tpu.concatenate %106, %134, %162, %190 in 1 : vector<8x8xf32>, vector<8x8xf32>, vector<8x8xf32>, vector<8x8xf32> -> vector<8x32xf32>
    %192 = arith.truncf %191 : vector<8x32xf32> to vector<8x32xbf16>
    %c0_71 = arith.constant 0 : index
    %c0_72 = arith.constant 0 : index
    %193 = vector.load %arg13[%c0_71, %c0_72] : memref<32x32xbf16, #tpu.memory_space<vmem>>, vector<32x32xbf16>
    %cst_73 = arith.constant dense<0.000000e+00> : vector<8x32xf32>
    %194 = tpu.matmul %192, %193, %cst_73 {dimension_numbers = #tpu.dot_dimension_numbers<[1], [0], [0], [1], [0, 0, 1, 1], [], []>} : vector<8x32xbf16>, vector<32x32xbf16>, vector<8x32xf32> -> vector<8x32xf32>
    %195 = arith.addf %46, %194 : vector<8x32xf32>
    %c0_74 = arith.constant 0 : index
    %c0_75 = arith.constant 0 : index
    %196 = vector.load %arg14[%c0_74, %c0_75] : memref<1x32xf32, #tpu.memory_space<vmem>>, vector<1x32xf32>
    %197 = vector.broadcast %196 : vector<1x32xf32> to vector<8x32xf32>
    %198 = arith.addf %195, %197 : vector<8x32xf32>
    %c0_76 = arith.constant 0 : index
    %c0_77 = arith.constant 0 : index
    %199 = vector.load %arg16[%c0_76, %c0_77] : memref<1x32xf32, #tpu.memory_space<vmem>>, vector<1x32xf32>
    %c0_78 = arith.constant 0 : index
    %c0_79 = arith.constant 0 : index
    %200 = vector.load %arg17[%c0_78, %c0_79] : memref<1x32xf32, #tpu.memory_space<vmem>>, vector<1x32xf32>
    %cst_80 = arith.constant dense<0.000000e+00> : vector<8xf32>
    %201 = vector.multi_reduction <add>, %198, %cst_80 [1] : vector<8x32xf32> to vector<8xf32>
    %202 = vector.shape_cast %201 : vector<8xf32> to vector<8x1xf32>
    %cst_81 = arith.constant 3.200000e+01 : f32
    %203 = vector.broadcast %cst_81 : f32 to vector<8x1xf32>
    %204 = arith.divf %202, %203 : vector<8x1xf32>
    %205 = vector.broadcast %204 : vector<8x1xf32> to vector<8x32xf32>
    %206 = arith.subf %198, %205 : vector<8x32xf32>
    %207 = arith.mulf %206, %206 : vector<8x32xf32>
    %cst_82 = arith.constant dense<0.000000e+00> : vector<8xf32>
    %208 = vector.multi_reduction <add>, %207, %cst_82 [1] : vector<8x32xf32> to vector<8xf32>
    %209 = vector.shape_cast %208 : vector<8xf32> to vector<8x1xf32>
    %cst_83 = arith.constant 3.200000e+01 : f32
    %210 = vector.broadcast %cst_83 : f32 to vector<8x1xf32>
    %211 = arith.divf %209, %210 : vector<8x1xf32>
    %212 = vector.broadcast %204 : vector<8x1xf32> to vector<8x32xf32>
    %213 = arith.subf %198, %212 : vector<8x32xf32>
    %cst_84 = arith.constant 9.99999974E-6 : f32
    %214 = vector.broadcast %cst_84 : f32 to vector<8x1xf32>
    %215 = arith.addf %211, %214 : vector<8x1xf32>
    %216 = math.rsqrt %215 : vector<8x1xf32>
    %217 = vector.broadcast %216 : vector<8x1xf32> to vector<8x32xf32>
    %218 = arith.mulf %213, %217 : vector<8x32xf32>
    %219 = vector.broadcast %199 : vector<1x32xf32> to vector<8x32xf32>
    %220 = arith.mulf %218, %219 : vector<8x32xf32>
    %221 = vector.broadcast %200 : vector<1x32xf32> to vector<8x32xf32>
    %222 = arith.addf %220, %221 : vector<8x32xf32>
    %223 = arith.truncf %222 : vector<8x32xf32> to vector<8x32xbf16>
    %c0_85 = arith.constant 0 : index
    %c0_86 = arith.constant 0 : index
    %224 = vector.load %arg18[%c0_85, %c0_86] : memref<32x64xbf16, #tpu.memory_space<vmem>>, vector<32x64xbf16>
    %cst_87 = arith.constant dense<0.000000e+00> : vector<8x64xf32>
    %225 = tpu.matmul %223, %224, %cst_87 {dimension_numbers = #tpu.dot_dimension_numbers<[1], [0], [0], [1], [0, 0, 1, 1], [], []>} : vector<8x32xbf16>, vector<32x64xbf16>, vector<8x64xf32> -> vector<8x64xf32>
    %c0_88 = arith.constant 0 : index
    %c0_89 = arith.constant 0 : index
    %226 = vector.load %arg19[%c0_88, %c0_89] : memref<1x64xf32, #tpu.memory_space<vmem>>, vector<1x64xf32>
    %227 = vector.broadcast %226 : vector<1x64xf32> to vector<8x64xf32>
    %228 = arith.addf %225, %227 : vector<8x64xf32>
    %c0_90 = arith.constant 0 : index
    %c0_91 = arith.constant 0 : index
    %229 = vector.load %arg20[%c0_90, %c0_91] : memref<32x64xbf16, #tpu.memory_space<vmem>>, vector<32x64xbf16>
    %cst_92 = arith.constant dense<0.000000e+00> : vector<8x64xf32>
    %230 = tpu.matmul %223, %229, %cst_92 {dimension_numbers = #tpu.dot_dimension_numbers<[1], [0], [0], [1], [0, 0, 1, 1], [], []>} : vector<8x32xbf16>, vector<32x64xbf16>, vector<8x64xf32> -> vector<8x64xf32>
    %c0_93 = arith.constant 0 : index
    %c0_94 = arith.constant 0 : index
    %231 = vector.load %arg21[%c0_93, %c0_94] : memref<1x64xf32, #tpu.memory_space<vmem>>, vector<1x64xf32>
    %232 = vector.broadcast %231 : vector<1x64xf32> to vector<8x64xf32>
    %233 = arith.addf %230, %232 : vector<8x64xf32>
    %234 = arith.negf %233 : vector<8x64xf32>
    %235 = math.exp %234 : vector<8x64xf32>
    %cst_95 = arith.constant 1.000000e+00 : f32
    %236 = vector.broadcast %cst_95 : f32 to vector<8x64xf32>
    %237 = arith.addf %236, %235 : vector<8x64xf32>
    %238 = arith.divf %236, %237 : vector<8x64xf32>
    %239 = arith.mulf %228, %238 : vector<8x64xf32>
    %cst_96 = arith.constant 0.000000e+00 : f32
    %240 = vector.broadcast %cst_96 : f32 to vector<3x64xf32>
    %cst_97 = arith.constant 0.000000e+00 : f32
    %241 = vector.broadcast %cst_97 : f32 to vector<3x64xf32>
    %242 = tpu.concatenate %240, %239, %241 in 0 : vector<3x64xf32>, vector<8x64xf32>, vector<3x64xf32> -> vector<14x64xf32>
    %c0_98 = arith.constant 0 : index
    %c0_99 = arith.constant 0 : index
    %243 = vector.load %arg22[%c0_98, %c0_99] : memref<7x64xf32, #tpu.memory_space<vmem>>, vector<7x64xf32>
    %cst_100 = arith.constant 0.000000e+00 : f32
    %244 = vector.broadcast %cst_100 : f32 to vector<8x64xf32>
    %245 = vector.extract_strided_slice %242 {offsets = [0, 0], sizes = [8, 64], strides = [1, 1]} : vector<14x64xf32> to vector<8x64xf32>
    %246 = vector.extract_strided_slice %243 {offsets = [0, 0], sizes = [1, 64], strides = [1, 1]} : vector<7x64xf32> to vector<1x64xf32>
    %247 = vector.broadcast %246 : vector<1x64xf32> to vector<8x64xf32>
    %248 = arith.mulf %245, %247 : vector<8x64xf32>
    %249 = arith.addf %244, %248 : vector<8x64xf32>
    %250 = vector.extract_strided_slice %242 {offsets = [1, 0], sizes = [8, 64], strides = [1, 1]} : vector<14x64xf32> to vector<8x64xf32>
    %251 = vector.extract_strided_slice %243 {offsets = [1, 0], sizes = [1, 64], strides = [1, 1]} : vector<7x64xf32> to vector<1x64xf32>
    %252 = vector.broadcast %251 : vector<1x64xf32> to vector<8x64xf32>
    %253 = arith.mulf %250, %252 : vector<8x64xf32>
    %254 = arith.addf %249, %253 : vector<8x64xf32>
    %255 = vector.extract_strided_slice %242 {offsets = [2, 0], sizes = [8, 64], strides = [1, 1]} : vector<14x64xf32> to vector<8x64xf32>
    %256 = vector.extract_strided_slice %243 {offsets = [2, 0], sizes = [1, 64], strides = [1, 1]} : vector<7x64xf32> to vector<1x64xf32>
    %257 = vector.broadcast %256 : vector<1x64xf32> to vector<8x64xf32>
    %258 = arith.mulf %255, %257 : vector<8x64xf32>
    %259 = arith.addf %254, %258 : vector<8x64xf32>
    %260 = vector.extract_strided_slice %242 {offsets = [3, 0], sizes = [8, 64], strides = [1, 1]} : vector<14x64xf32> to vector<8x64xf32>
    %261 = vector.extract_strided_slice %243 {offsets = [3, 0], sizes = [1, 64], strides = [1, 1]} : vector<7x64xf32> to vector<1x64xf32>
    %262 = vector.broadcast %261 : vector<1x64xf32> to vector<8x64xf32>
    %263 = arith.mulf %260, %262 : vector<8x64xf32>
    %264 = arith.addf %259, %263 : vector<8x64xf32>
    %265 = vector.extract_strided_slice %242 {offsets = [4, 0], sizes = [8, 64], strides = [1, 1]} : vector<14x64xf32> to vector<8x64xf32>
    %266 = vector.extract_strided_slice %243 {offsets = [4, 0], sizes = [1, 64], strides = [1, 1]} : vector<7x64xf32> to vector<1x64xf32>
    %267 = vector.broadcast %266 : vector<1x64xf32> to vector<8x64xf32>
    %268 = arith.mulf %265, %267 : vector<8x64xf32>
    %269 = arith.addf %264, %268 : vector<8x64xf32>
    %270 = vector.extract_strided_slice %242 {offsets = [5, 0], sizes = [8, 64], strides = [1, 1]} : vector<14x64xf32> to vector<8x64xf32>
    %271 = vector.extract_strided_slice %243 {offsets = [5, 0], sizes = [1, 64], strides = [1, 1]} : vector<7x64xf32> to vector<1x64xf32>
    %272 = vector.broadcast %271 : vector<1x64xf32> to vector<8x64xf32>
    %273 = arith.mulf %270, %272 : vector<8x64xf32>
    %274 = arith.addf %269, %273 : vector<8x64xf32>
    %275 = vector.extract_strided_slice %242 {offsets = [6, 0], sizes = [8, 64], strides = [1, 1]} : vector<14x64xf32> to vector<8x64xf32>
    %276 = vector.extract_strided_slice %243 {offsets = [6, 0], sizes = [1, 64], strides = [1, 1]} : vector<7x64xf32> to vector<1x64xf32>
    %277 = vector.broadcast %276 : vector<1x64xf32> to vector<8x64xf32>
    %278 = arith.mulf %275, %277 : vector<8x64xf32>
    %279 = arith.addf %274, %278 : vector<8x64xf32>
    %c0_101 = arith.constant 0 : index
    %c0_102 = arith.constant 0 : index
    %280 = vector.load %arg23[%c0_101, %c0_102] : memref<1x64xf32, #tpu.memory_space<vmem>>, vector<1x64xf32>
    %281 = vector.broadcast %280 : vector<1x64xf32> to vector<8x64xf32>
    %282 = arith.addf %279, %281 : vector<8x64xf32>
    %c0_103 = arith.constant 0 : index
    %c0_104 = arith.constant 0 : index
    %283 = vector.load %arg24[%c0_103, %c0_104] : memref<1x64xf32, #tpu.memory_space<vmem>>, vector<1x64xf32>
    %284 = vector.broadcast %283 : vector<1x64xf32> to vector<8x64xf32>
    %285 = arith.mulf %282, %284 : vector<8x64xf32>
    %c0_105 = arith.constant 0 : index
    %c0_106 = arith.constant 0 : index
    %286 = vector.load %arg25[%c0_105, %c0_106] : memref<1x64xf32, #tpu.memory_space<vmem>>, vector<1x64xf32>
    %287 = vector.broadcast %286 : vector<1x64xf32> to vector<8x64xf32>
    %288 = arith.addf %285, %287 : vector<8x64xf32>
    %289 = arith.negf %288 : vector<8x64xf32>
    %290 = math.exp %289 : vector<8x64xf32>
    %cst_107 = arith.constant 1.000000e+00 : f32
    %291 = vector.broadcast %cst_107 : f32 to vector<8x64xf32>
    %292 = arith.addf %291, %290 : vector<8x64xf32>
    %293 = arith.divf %291, %292 : vector<8x64xf32>
    %294 = arith.mulf %288, %293 : vector<8x64xf32>
    %295 = arith.truncf %294 : vector<8x64xf32> to vector<8x64xbf16>
    %c0_108 = arith.constant 0 : index
    %c0_109 = arith.constant 0 : index
    %296 = vector.load %arg26[%c0_108, %c0_109] : memref<64x32xbf16, #tpu.memory_space<vmem>>, vector<64x32xbf16>
    %cst_110 = arith.constant dense<0.000000e+00> : vector<8x32xf32>
    %297 = tpu.matmul %295, %296, %cst_110 {dimension_numbers = #tpu.dot_dimension_numbers<[1], [0], [0], [1], [0, 0, 1, 1], [], []>} : vector<8x64xbf16>, vector<64x32xbf16>, vector<8x32xf32> -> vector<8x32xf32>
    %c0_111 = arith.constant 0 : index
    %c0_112 = arith.constant 0 : index
    %298 = vector.load %arg27[%c0_111, %c0_112] : memref<1x32xf32, #tpu.memory_space<vmem>>, vector<1x32xf32>
    %299 = vector.broadcast %298 : vector<1x32xf32> to vector<8x32xf32>
    %300 = arith.addf %297, %299 : vector<8x32xf32>
    %301 = arith.addf %198, %300 : vector<8x32xf32>
    %c0_113 = arith.constant 0 : index
    %c0_114 = arith.constant 0 : index
    %302 = vector.load %arg28[%c0_113, %c0_114] : memref<1x32xf32, #tpu.memory_space<vmem>>, vector<1x32xf32>
    %c0_115 = arith.constant 0 : index
    %c0_116 = arith.constant 0 : index
    %303 = vector.load %arg29[%c0_115, %c0_116] : memref<1x32xf32, #tpu.memory_space<vmem>>, vector<1x32xf32>
    %c0_117 = arith.constant 0 : index
    %c0_118 = arith.constant 0 : index
    %304 = vector.load %arg30[%c0_117, %c0_118] : memref<32x128xbf16, #tpu.memory_space<vmem>>, vector<32x128xbf16>
    %c0_119 = arith.constant 0 : index
    %c0_120 = arith.constant 0 : index
    %305 = vector.load %arg31[%c0_119, %c0_120] : memref<1x128xf32, #tpu.memory_space<vmem>>, vector<1x128xf32>
    %c0_121 = arith.constant 0 : index
    %c0_122 = arith.constant 0 : index
    %306 = vector.load %arg32[%c0_121, %c0_122] : memref<128x32xbf16, #tpu.memory_space<vmem>>, vector<128x32xbf16>
    %c0_123 = arith.constant 0 : index
    %c0_124 = arith.constant 0 : index
    %307 = vector.load %arg33[%c0_123, %c0_124] : memref<1x32xf32, #tpu.memory_space<vmem>>, vector<1x32xf32>
    %cst_125 = arith.constant dense<0.000000e+00> : vector<8xf32>
    %308 = vector.multi_reduction <add>, %301, %cst_125 [1] : vector<8x32xf32> to vector<8xf32>
    %309 = vector.shape_cast %308 : vector<8xf32> to vector<8x1xf32>
    %cst_126 = arith.constant 3.200000e+01 : f32
    %310 = vector.broadcast %cst_126 : f32 to vector<8x1xf32>
    %311 = arith.divf %309, %310 : vector<8x1xf32>
    %312 = vector.broadcast %311 : vector<8x1xf32> to vector<8x32xf32>
    %313 = arith.subf %301, %312 : vector<8x32xf32>
    %314 = arith.mulf %313, %313 : vector<8x32xf32>
    %cst_127 = arith.constant dense<0.000000e+00> : vector<8xf32>
    %315 = vector.multi_reduction <add>, %314, %cst_127 [1] : vector<8x32xf32> to vector<8xf32>
    %316 = vector.shape_cast %315 : vector<8xf32> to vector<8x1xf32>
    %cst_128 = arith.constant 3.200000e+01 : f32
    %317 = vector.broadcast %cst_128 : f32 to vector<8x1xf32>
    %318 = arith.divf %316, %317 : vector<8x1xf32>
    %319 = vector.broadcast %311 : vector<8x1xf32> to vector<8x32xf32>
    %320 = arith.subf %301, %319 : vector<8x32xf32>
    %cst_129 = arith.constant 9.99999974E-6 : f32
    %321 = vector.broadcast %cst_129 : f32 to vector<8x1xf32>
    %322 = arith.addf %318, %321 : vector<8x1xf32>
    %323 = math.rsqrt %322 : vector<8x1xf32>
    %324 = vector.broadcast %323 : vector<8x1xf32> to vector<8x32xf32>
    %325 = arith.mulf %320, %324 : vector<8x32xf32>
    %326 = vector.broadcast %302 : vector<1x32xf32> to vector<8x32xf32>
    %327 = arith.mulf %325, %326 : vector<8x32xf32>
    %328 = vector.broadcast %303 : vector<1x32xf32> to vector<8x32xf32>
    %329 = arith.addf %327, %328 : vector<8x32xf32>
    %330 = arith.truncf %329 : vector<8x32xf32> to vector<8x32xbf16>
    %cst_130 = arith.constant dense<0.000000e+00> : vector<8x128xf32>
    %331 = tpu.matmul %330, %304, %cst_130 {dimension_numbers = #tpu.dot_dimension_numbers<[1], [0], [0], [1], [0, 0, 1, 1], [], []>} : vector<8x32xbf16>, vector<32x128xbf16>, vector<8x128xf32> -> vector<8x128xf32>
    %332 = vector.broadcast %305 : vector<1x128xf32> to vector<8x128xf32>
    %333 = arith.addf %331, %332 : vector<8x128xf32>
    %334 = arith.negf %333 : vector<8x128xf32>
    %335 = math.exp %334 : vector<8x128xf32>
    %cst_131 = arith.constant 1.000000e+00 : f32
    %336 = vector.broadcast %cst_131 : f32 to vector<8x128xf32>
    %337 = arith.addf %336, %335 : vector<8x128xf32>
    %338 = arith.divf %336, %337 : vector<8x128xf32>
    %339 = arith.mulf %333, %338 : vector<8x128xf32>
    %340 = arith.truncf %339 : vector<8x128xf32> to vector<8x128xbf16>
    %cst_132 = arith.constant dense<0.000000e+00> : vector<8x32xf32>
    %341 = tpu.matmul %340, %306, %cst_132 {dimension_numbers = #tpu.dot_dimension_numbers<[1], [0], [0], [1], [0, 0, 1, 1], [], []>} : vector<8x128xbf16>, vector<128x32xbf16>, vector<8x32xf32> -> vector<8x32xf32>
    %342 = vector.broadcast %307 : vector<1x32xf32> to vector<8x32xf32>
    %343 = arith.addf %341, %342 : vector<8x32xf32>
    %cst_133 = arith.constant 5.000000e-01 : f32
    %344 = vector.broadcast %cst_133 : f32 to vector<8x32xf32>
    %345 = arith.mulf %344, %343 : vector<8x32xf32>
    %346 = arith.addf %301, %345 : vector<8x32xf32>
    %c0_134 = arith.constant 0 : index
    %c0_135 = arith.constant 0 : index
    %347 = vector.load %arg34[%c0_134, %c0_135] : memref<1x32xf32, #tpu.memory_space<vmem>>, vector<1x32xf32>
    %c0_136 = arith.constant 0 : index
    %c0_137 = arith.constant 0 : index
    %348 = vector.load %arg35[%c0_136, %c0_137] : memref<1x32xf32, #tpu.memory_space<vmem>>, vector<1x32xf32>
    %cst_138 = arith.constant dense<0.000000e+00> : vector<8xf32>
    %349 = vector.multi_reduction <add>, %346, %cst_138 [1] : vector<8x32xf32> to vector<8xf32>
    %350 = vector.shape_cast %349 : vector<8xf32> to vector<8x1xf32>
    %cst_139 = arith.constant 3.200000e+01 : f32
    %351 = vector.broadcast %cst_139 : f32 to vector<8x1xf32>
    %352 = arith.divf %350, %351 : vector<8x1xf32>
    %353 = vector.broadcast %352 : vector<8x1xf32> to vector<8x32xf32>
    %354 = arith.subf %346, %353 : vector<8x32xf32>
    %355 = arith.mulf %354, %354 : vector<8x32xf32>
    %cst_140 = arith.constant dense<0.000000e+00> : vector<8xf32>
    %356 = vector.multi_reduction <add>, %355, %cst_140 [1] : vector<8x32xf32> to vector<8xf32>
    %357 = vector.shape_cast %356 : vector<8xf32> to vector<8x1xf32>
    %cst_141 = arith.constant 3.200000e+01 : f32
    %358 = vector.broadcast %cst_141 : f32 to vector<8x1xf32>
    %359 = arith.divf %357, %358 : vector<8x1xf32>
    %360 = vector.broadcast %352 : vector<8x1xf32> to vector<8x32xf32>
    %361 = arith.subf %346, %360 : vector<8x32xf32>
    %cst_142 = arith.constant 9.99999974E-6 : f32
    %362 = vector.broadcast %cst_142 : f32 to vector<8x1xf32>
    %363 = arith.addf %359, %362 : vector<8x1xf32>
    %364 = math.rsqrt %363 : vector<8x1xf32>
    %365 = vector.broadcast %364 : vector<8x1xf32> to vector<8x32xf32>
    %366 = arith.mulf %361, %365 : vector<8x32xf32>
    %367 = vector.broadcast %347 : vector<1x32xf32> to vector<8x32xf32>
    %368 = arith.mulf %366, %367 : vector<8x32xf32>
    %369 = vector.broadcast %348 : vector<1x32xf32> to vector<8x32xf32>
    %370 = arith.addf %368, %369 : vector<8x32xf32>
    %c0_143 = arith.constant 0 : index
    %c0_144 = arith.constant 0 : index
    %c0_145 = arith.constant 0 : index
    %371 = vector.load %arg36[%c0_143, %c0_144, %c0_145] : memref<1x8x32xf32, #tpu.memory_space<vmem>>, vector<1x8x32xf32>
    %372 = vector.shape_cast %371 : vector<1x8x32xf32> to vector<8x32xf32>
    %373 = vector.shape_cast %370 : vector<8x32xf32> to vector<1x8x32xf32>
    tpu.vector_store %arg36[%c0_143, %c0_144, %c0_145], %373 {strides = array<i32>} : memref<1x8x32xf32, #tpu.memory_space<vmem>>, vector<1x8x32xf32>,
    return
  }
  func.func @transform_0(%arg0: i32) -> (i32, i32, i32) {
    %c0_i32 = arith.constant 0 : i32
    %c0_i32_0 = arith.constant 0 : i32
    %c0_i32_1 = arith.constant 0 : i32
    return %arg0, %c0_i32, %c0_i32_0 : i32, i32, i32
  }
  func.func @transform_1(%arg0: i32) -> (i32, i32) {
    %c0_i32 = arith.constant 0 : i32
    %c0_i32_0 = arith.constant 0 : i32
    %c0_i32_1 = arith.constant 0 : i32
    return %c0_i32, %c0_i32_0 : i32, i32
  }
  func.func @transform_2(%arg0: i32) -> (i32, i32) {
    %c0_i32 = arith.constant 0 : i32
    %c0_i32_0 = arith.constant 0 : i32
    %c0_i32_1 = arith.constant 0 : i32
    return %c0_i32, %c0_i32_0 : i32, i32
  }
  func.func @transform_3(%arg0: i32) -> (i32, i32) {
    %c0_i32 = arith.constant 0 : i32
    %c0_i32_0 = arith.constant 0 : i32
    %c0_i32_1 = arith.constant 0 : i32
    return %c0_i32, %c0_i32_0 : i32, i32
  }
  func.func @transform_4(%arg0: i32) -> (i32, i32) {
    %c0_i32 = arith.constant 0 : i32
    %c0_i32_0 = arith.constant 0 : i32
    %c0_i32_1 = arith.constant 0 : i32
    return %c0_i32, %c0_i32_0 : i32, i32
  }
  func.func @transform_5(%arg0: i32) -> (i32, i32) {
    %c0_i32 = arith.constant 0 : i32
    %c0_i32_0 = arith.constant 0 : i32
    %c0_i32_1 = arith.constant 0 : i32
    return %c0_i32, %c0_i32_0 : i32, i32
  }
  func.func @transform_6(%arg0: i32) -> (i32, i32) {
    %c0_i32 = arith.constant 0 : i32
    %c0_i32_0 = arith.constant 0 : i32
    %c0_i32_1 = arith.constant 0 : i32
    return %c0_i32, %c0_i32_0 : i32, i32
  }
  func.func @transform_7(%arg0: i32) -> (i32, i32) {
    %c0_i32 = arith.constant 0 : i32
    %c0_i32_0 = arith.constant 0 : i32
    %c0_i32_1 = arith.constant 0 : i32
    return %c0_i32, %c0_i32_0 : i32, i32
  }
  func.func @transform_8(%arg0: i32) -> (i32, i32) {
    %c0_i32 = arith.constant 0 : i32
    %c0_i32_0 = arith.constant 0 : i32
    %c0_i32_1 = arith.constant 0 : i32
    return %c0_i32, %c0_i32_0 : i32, i32
  }
  func.func @transform_9(%arg0: i32) -> (i32, i32) {
    %c0_i32 = arith.constant 0 : i32
    %c0_i32_0 = arith.constant 0 : i32
    %c0_i32_1 = arith.constant 0 : i32
    return %c0_i32, %c0_i32_0 : i32, i32
  }
  func.func @transform_10(%arg0: i32) -> (i32, i32) {
    %c0_i32 = arith.constant 0 : i32
    %c0_i32_0 = arith.constant 0 : i32
    %c0_i32_1 = arith.constant 0 : i32
    return %c0_i32, %c0_i32_0 : i32, i32
  }
  func.func @transform_11(%arg0: i32) -> (i32, i32) {
    %c0_i32 = arith.constant 0 : i32
    %c0_i32_0 = arith.constant 0 : i32
    %c0_i32_1 = arith.constant 0 : i32
    return %c0_i32, %c0_i32_0 : i32, i32
  }
  func.func @transform_12(%arg0: i32) -> (i32, i32) {
    %c0_i32 = arith.constant 0 : i32
    %c0_i32_0 = arith.constant 0 : i32
    %c0_i32_1 = arith.constant 0 : i32
    return %c0_i32, %c0_i32_0 : i32, i32
  }
  func.func @transform_13(%arg0: i32) -> (i32, i32) {
    %c0_i32 = arith.constant 0 : i32
    %c0_i32_0 = arith.constant 0 : i32
    %c0_i32_1 = arith.constant 0 : i32
    return %c0_i32, %c0_i32_0 : i32, i32
  }
  func.func @transform_14(%arg0: i32) -> (i32, i32, i32) {
    %c0_i32 = arith.constant 0 : i32
    %c0_i32_0 = arith.constant 0 : i32
    %c0_i32_1 = arith.constant 0 : i32
    %c0_i32_2 = arith.constant 0 : i32
    return %c0_i32, %c0_i32_0, %c0_i32_1 : i32, i32, i32
  }
  func.func @transform_15(%arg0: i32) -> (i32, i32) {
    %c0_i32 = arith.constant 0 : i32
    %c0_i32_0 = arith.constant 0 : i32
    %c0_i32_1 = arith.constant 0 : i32
    return %c0_i32, %c0_i32_0 : i32, i32
  }
  func.func @transform_16(%arg0: i32) -> (i32, i32) {
    %c0_i32 = arith.constant 0 : i32
    %c0_i32_0 = arith.constant 0 : i32
    %c0_i32_1 = arith.constant 0 : i32
    return %c0_i32, %c0_i32_0 : i32, i32
  }
  func.func @transform_17(%arg0: i32) -> (i32, i32) {
    %c0_i32 = arith.constant 0 : i32
    %c0_i32_0 = arith.constant 0 : i32
    %c0_i32_1 = arith.constant 0 : i32
    return %c0_i32, %c0_i32_0 : i32, i32
  }
  func.func @transform_18(%arg0: i32) -> (i32, i32) {
    %c0_i32 = arith.constant 0 : i32
    %c0_i32_0 = arith.constant 0 : i32
    %c0_i32_1 = arith.constant 0 : i32
    return %c0_i32, %c0_i32_0 : i32, i32
  }
  func.func @transform_19(%arg0: i32) -> (i32, i32) {
    %c0_i32 = arith.constant 0 : i32
    %c0_i32_0 = arith.constant 0 : i32
    %c0_i32_1 = arith.constant 0 : i32
    return %c0_i32, %c0_i32_0 : i32, i32
  }
  func.func @transform_20(%arg0: i32) -> (i32, i32) {
    %c0_i32 = arith.constant 0 : i32
    %c0_i32_0 = arith.constant 0 : i32
    %c0_i32_1 = arith.constant 0 : i32
    return %c0_i32, %c0_i32_0 : i32, i32
  }
  func.func @transform_21(%arg0: i32) -> (i32, i32) {
    %c0_i32 = arith.constant 0 : i32
    %c0_i32_0 = arith.constant 0 : i32
    %c0_i32_1 = arith.constant 0 : i32
    return %c0_i32, %c0_i32_0 : i32, i32
  }
  func.func @transform_22(%arg0: i32) -> (i32, i32) {
    %c0_i32 = arith.constant 0 : i32
    %c0_i32_0 = arith.constant 0 : i32
    %c0_i32_1 = arith.constant 0 : i32
    return %c0_i32, %c0_i32_0 : i32, i32
  }
  func.func @transform_23(%arg0: i32) -> (i32, i32) {
    %c0_i32 = arith.constant 0 : i32
    %c0_i32_0 = arith.constant 0 : i32
    %c0_i32_1 = arith.constant 0 : i32
    return %c0_i32, %c0_i32_0 : i32, i32
  }
  func.func @transform_24(%arg0: i32) -> (i32, i32) {
    %c0_i32 = arith.constant 0 : i32
    %c0_i32_0 = arith.constant 0 : i32
    %c0_i32_1 = arith.constant 0 : i32
    return %c0_i32, %c0_i32_0 : i32, i32
  }
  func.func @transform_25(%arg0: i32) -> (i32, i32) {
    %c0_i32 = arith.constant 0 : i32
    %c0_i32_0 = arith.constant 0 : i32
    %c0_i32_1 = arith.constant 0 : i32
    return %c0_i32, %c0_i32_0 : i32, i32
  }
  func.func @transform_26(%arg0: i32) -> (i32, i32) {
    %c0_i32 = arith.constant 0 : i32
    %c0_i32_0 = arith.constant 0 : i32
    %c0_i32_1 = arith.constant 0 : i32
    return %c0_i32, %c0_i32_0 : i32, i32
  }
  func.func @transform_27(%arg0: i32) -> (i32, i32) {
    %c0_i32 = arith.constant 0 : i32
    %c0_i32_0 = arith.constant 0 : i32
    %c0_i32_1 = arith.constant 0 : i32
    return %c0_i32, %c0_i32_0 : i32, i32
  }
  func.func @transform_28(%arg0: i32) -> (i32, i32) {
    %c0_i32 = arith.constant 0 : i32
    %c0_i32_0 = arith.constant 0 : i32
    %c0_i32_1 = arith.constant 0 : i32
    return %c0_i32, %c0_i32_0 : i32, i32
  }
  func.func @transform_29(%arg0: i32) -> (i32, i32) {
    %c0_i32 = arith.constant 0 : i32
    %c0_i32_0 = arith.constant 0 : i32
    %c0_i32_1 = arith.constant 0 : i32
    return %c0_i32, %c0_i32_0 : i32, i32
  }
  func.func @transform_30(%arg0: i32) -> (i32, i32) {
    %c0_i32 = arith.constant 0 : i32
    %c0_i32_0 = arith.constant 0 : i32
    %c0_i32_1 = arith.constant 0 : i32
    return %c0_i32, %c0_i32_0 : i32, i32
  }
  func.func @transform_31(%arg0: i32) -> (i32, i32) {
    %c0_i32 = arith.constant 0 : i32
    %c0_i32_0 = arith.constant 0 : i32
    %c0_i32_1 = arith.constant 0 : i32
    return %c0_i32, %c0_i32_0 : i32, i32
  }
  func.func @transform_32(%arg0: i32) -> (i32, i32) {
    %c0_i32 = arith.constant 0 : i32
    %c0_i32_0 = arith.constant 0 : i32
    %c0_i32_1 = arith.constant 0 : i32
    return %c0_i32, %c0_i32_0 : i32, i32
  }
  func.func @transform_33(%arg0: i32) -> (i32, i32) {
    %c0_i32 = arith.constant 0 : i32
    %c0_i32_0 = arith.constant 0 : i32
    %c0_i32_1 = arith.constant 0 : i32
    return %c0_i32, %c0_i32_0 : i32, i32
  }
  func.func @transform_34(%arg0: i32) -> (i32, i32) {
    %c0_i32 = arith.constant 0 : i32
    %c0_i32_0 = arith.constant 0 : i32
    %c0_i32_1 = arith.constant 0 : i32
    return %c0_i32, %c0_i32_0 : i32, i32
  }
  func.func @transform_35(%arg0: i32) -> (i32, i32, i32) {
    %c0_i32 = arith.constant 0 : i32
    %c0_i32_0 = arith.constant 0 : i32
    %c0_i32_1 = arith.constant 0 : i32
    return %arg0, %c0_i32, %c0_i32_0 : i32, i32, i32
  }
}

</mosaic_0001>

<llo_original>
// kernel: conformer_block.1
$region0: #{conformer_block.1}
  #allocation0 [shape = 'u32[]', space=smem, size = 0x4, offset = 0x4, fixed_abs, tag = 'smem constant byte address 0x4 - core index']
  #allocation1 [shape = 'u32[144,128]{1,0:T(1,128)}', space=vmem, size = 0x12000, scoped, tag = 'internal scratch']
  %s0 = inlined_call_operand.smem [shape: u32[36], index: -1, kind: input, shape index: {}]
  %s1 = sld [smem:[%s0]]
  %s2 = scalar_lea.smem %s0, 1
  %s3 = sld [smem:[%s2]]
  %s4 = scalar_lea.smem %s0, 2
  %s5 = sld [smem:[%s4]]
  %s6 = scalar_lea.smem %s0, 3
  %s7 = sld [smem:[%s6]]
  %s8 = scalar_lea.smem %s0, 4
  %s9 = sld [smem:[%s8]]
  %s10 = scalar_lea.smem %s0, 5
  %s11 = sld [smem:[%s10]]
  %s12 = scalar_lea.smem %s0, 6
  %s13 = sld [smem:[%s12]]
  %s14 = scalar_lea.smem %s0, 7
  %s15 = sld [smem:[%s14]]
  %s16 = scalar_lea.smem %s0, 8
  %s17 = sld [smem:[%s16]]
  %s18 = scalar_lea.smem %s0, 9
  %s19 = sld [smem:[%s18]]
  %s20 = scalar_lea.smem %s0, 10
  %s21 = sld [smem:[%s20]]
  %s22 = scalar_lea.smem %s0, 11
  %s23 = sld [smem:[%s22]]
  %s24 = scalar_lea.smem %s0, 12
  %s25 = sld [smem:[%s24]]
  %s26 = scalar_lea.smem %s0, 13
  %s27 = sld [smem:[%s26]]
  %s28 = scalar_lea.smem %s0, 14
  %s29 = sld [smem:[%s28]]
  %s30 = scalar_lea.smem %s0, 15
  %s31 = sld [smem:[%s30]]
  %s32 = scalar_lea.smem %s0, 16
  %s33 = sld [smem:[%s32]]
  %s34 = scalar_lea.smem %s0, 17
  %s35 = sld [smem:[%s34]]
  %s36 = scalar_lea.smem %s0, 18
  %s37 = sld [smem:[%s36]]
  %s38 = scalar_lea.smem %s0, 19
  %s39 = sld [smem:[%s38]]
  %s40 = scalar_lea.smem %s0, 20
  %s41 = sld [smem:[%s40]]
  %s42 = scalar_lea.smem %s0, 21
  %s43 = sld [smem:[%s42]]
  %s44 = scalar_lea.smem %s0, 22
  %s45 = sld [smem:[%s44]]
  %s46 = scalar_lea.smem %s0, 23
  %s47 = sld [smem:[%s46]]
  %s48 = scalar_lea.smem %s0, 24
  %s49 = sld [smem:[%s48]]
  %s50 = scalar_lea.smem %s0, 25
  %s51 = sld [smem:[%s50]]
  %s52 = scalar_lea.smem %s0, 26
  %s53 = sld [smem:[%s52]]
  %s54 = scalar_lea.smem %s0, 27
  %s55 = sld [smem:[%s54]]
  %s56 = scalar_lea.smem %s0, 28
  %s57 = sld [smem:[%s56]]
  %s58 = scalar_lea.smem %s0, 29
  %s59 = sld [smem:[%s58]]
  %s60 = scalar_lea.smem %s0, 30
  %s61 = sld [smem:[%s60]]
  %s62 = scalar_lea.smem %s0, 31
  %s63 = sld [smem:[%s62]]
  %s64 = scalar_lea.smem %s0, 32
  %s65 = sld [smem:[%s64]]
  %s66 = scalar_lea.smem %s0, 33
  %s67 = sld [smem:[%s66]]
  %s68 = scalar_lea.smem %s0, 34
  %s69 = sld [smem:[%s68]]
  %s70 = scalar_lea.smem %s0, 35
  %s71 = sld [smem:[%s70]]
  %s72 = sld [smem:[#allocation0]]
  $region173: #{conformer_block.1} parent=0
    _
  %s74 = ssub.s32 1, %s72
  %s75 = scalar_select 0, %s74, %s72
  loop: start=0, step=1, limit=4
  $region2: #{conformer_block.1} parent=0 // loop_pre_header
    _
  $region3: #{conformer_block.1} parent=0 // loop_header
    %s77 = sphi 0, %s81
    %p78 = scmp.ge.s32.totalorder %s77, 4
    %s87 = sphi 0, %s89
    %s90 = sphi 0, %s87
    %s91 = sphi 0, %s90
    %s107 = sphi 0, %s91
    %s111 = sphi 0, %s111
    %s113 = sphi 0, %s111
    %s114 = sphi 0, %s113
    %s128 = sphi 0, %s114
    %s132 = sphi 0, %s132
    %s134 = sphi 0, %s132
    %s135 = sphi 0, %s134
    %s149 = sphi 0, %s135
    %s153 = sphi 0, %s153
    %s155 = sphi 0, %s153
    %s156 = sphi 0, %s155
    %s170 = sphi 0, %s156
    %s174 = sphi 0, %s174
    %s176 = sphi 0, %s174
    %s177 = sphi 0, %s176
    %s191 = sphi 0, %s177
    %s195 = sphi 0, %s195
    %s197 = sphi 0, %s195
    %s198 = sphi 0, %s197
    %s212 = sphi 0, %s198
    %s216 = sphi 0, %s216
    %s218 = sphi 0, %s216
    %s219 = sphi 0, %s218
    %s233 = sphi 0, %s219
    %s237 = sphi 0, %s237
    %s239 = sphi 0, %s237
    %s240 = sphi 0, %s239
    %s254 = sphi 0, %s240
    %s258 = sphi 0, %s258
    %s260 = sphi 0, %s258
    %s261 = sphi 0, %s260
    %s275 = sphi 0, %s261
    %s279 = sphi 0, %s279
    %s281 = sphi 0, %s279
    %s282 = sphi 0, %s281
    %s296 = sphi 0, %s282
    %s300 = sphi 0, %s300
    %s302 = sphi 0, %s300
    %s303 = sphi 0, %s302
    %s317 = sphi 0, %s303
    %s321 = sphi 0, %s321
    %s323 = sphi 0, %s321
    %s324 = sphi 0, %s323
    %s338 = sphi 0, %s324
    %s342 = sphi 0, %s342
    %s344 = sphi 0, %s342
    %s345 = sphi 0, %s344
    %s359 = sphi 0, %s345
    %s363 = sphi 0, %s363
    %s365 = sphi 0, %s363
    %s366 = sphi 0, %s365
    %s380 = sphi 0, %s366
    %s384 = sphi 0, %s384
    %s386 = sphi 0, %s384
    %s387 = sphi 0, %s386
    %s401 = sphi 0, %s387
    %s405 = sphi 0, %s405
    %s407 = sphi 0, %s405
    %s408 = sphi 0, %s407
    %s422 = sphi 0, %s408
    %s426 = sphi 0, %s426
    %s428 = sphi 0, %s426
    %s429 = sphi 0, %s428
    %s443 = sphi 0, %s429
    %s447 = sphi 0, %s447
    %s449 = sphi 0, %s447
    %s450 = sphi 0, %s449
    %s464 = sphi 0, %s450
    %s468 = sphi 0, %s468
    %s470 = sphi 0, %s468
    %s471 = sphi 0, %s470
    %s485 = sphi 0, %s471
    %s489 = sphi 0, %s489
    %s491 = sphi 0, %s489
    %s492 = sphi 0, %s491
    %s506 = sphi 0, %s492
    %s510 = sphi 0, %s510
    %s512 = sphi 0, %s510
    %s513 = sphi 0, %s512
    %s527 = sphi 0, %s513
    %s531 = sphi 0, %s531
    %s533 = sphi 0, %s531
    %s534 = sphi 0, %s533
    %s548 = sphi 0, %s534
    %s552 = sphi 0, %s552
    %s554 = sphi 0, %s552
    %s555 = sphi 0, %s554
    %s569 = sphi 0, %s555
    %s573 = sphi 0, %s573
    %s575 = sphi 0, %s573
    %s576 = sphi 0, %s575
    %s590 = sphi 0, %s576
    %s594 = sphi 0, %s594
    %s596 = sphi 0, %s594
    %s597 = sphi 0, %s596
    %s611 = sphi 0, %s597
    %s615 = sphi 0, %s615
    %s617 = sphi 0, %s615
    %s618 = sphi 0, %s617
    %s632 = sphi 0, %s618
    %s636 = sphi 0, %s636
    %s638 = sphi 0, %s636
    %s639 = sphi 0, %s638
    %s653 = sphi 0, %s639
    %s657 = sphi 0, %s657
    %s659 = sphi 0, %s657
    %s660 = sphi 0, %s659
    %s674 = sphi 0, %s660
    %s678 = sphi 0, %s678
    %s680 = sphi 0, %s678
    %s681 = sphi 0, %s680
    %s695 = sphi 0, %s681
    %s699 = sphi 0, %s699
    %s701 = sphi 0, %s699
    %s702 = sphi 0, %s701
    %s716 = sphi 0, %s702
    %s720 = sphi 0, %s720
    %s722 = sphi 0, %s720
    %s723 = sphi 0, %s722
    %s737 = sphi 0, %s723
    %s741 = sphi 0, %s741
    %s743 = sphi 0, %s741
    %s744 = sphi 0, %s743
    %s758 = sphi 0, %s744
    %s762 = sphi 0, %s762
    %s764 = sphi 0, %s762
    %s765 = sphi 0, %s764
    %s779 = sphi 0, %s765
    %s783 = sphi 0, %s783
    %s785 = sphi 0, %s783
    %s786 = sphi 0, %s785
    %s800 = sphi 0, %s786
    %s804 = sphi 0, %s804
    %s806 = sphi 0, %s804
    %s807 = sphi 0, %s806
    %s821 = sphi 0, %s807
    %s827 = sphi 0, %s829
    %s830 = sphi 0, %s827
    %s831 = sphi 0, %s830
    %s847 = sphi 0, %s831
  $region4: #{conformer_block.1} parent=0 // loop_header_branch
    %80 = sbr.rel (%p78) target = $region8
  $region5: #{conformer_block.1} parent=0 // loop_body
    %s82 = ssub.s32 %s77, 1
    %s83 = ssub.s32 %s77, 2
    %s84 = sadd.s32 %s77, 1
    %s85 = ssub.s32 %s77, %s84
    %p86 = scmp.eq.s32.totalorder %s85, 0
    %s88 = sadd.s32 %s87, 1
    %s89 = scalar_select %p86, %s87, %s88
    %p92 = pneg %p86
    %p93 = scmp.eq.s32.totalorder %s77, 1
    %p94 = por %p92, %p93
    %p95 = scmp.ne.s32.totalorder %s87, %s90
    %p96 = scmp.eq.s32.totalorder %s77, 0
    %p97 = por %p95, %p96
    %p98 = scmp.ne.s32.totalorder %s87, %s90
    %p99 = scmp.eq.s32.totalorder %s82, 1
    %p100 = por %p98, %p99
    %p101 = scmp.ne.s32.totalorder %s90, %s91
    %p102 = scmp.eq.s32.totalorder %s82, 0
    %p103 = por %p101, %p102
    %p104 = scmp.ne.s32.totalorder %s90, %s91
    %p105 = scmp.eq.s32.totalorder %s83, 1
    %p106 = por %p104, %p105
    %p108 = scmp.ne.s32.totalorder %s91, %s107
    %p109 = scmp.eq.s32.totalorder %s83, 0
    %p110 = por %p108, %p109
    %s112 = sadd.s32 %s111, 1
    %p115 = scmp.eq.s32.totalorder %s77, 1
    %p116 = scmp.ne.s32.totalorder %s111, %s113
    %p117 = scmp.eq.s32.totalorder %s77, 0
    %p118 = por %p116, %p117
    %p119 = scmp.ne.s32.totalorder %s111, %s113
    %p120 = scmp.eq.s32.totalorder %s82, 1
    %p121 = por %p119, %p120
    %p122 = scmp.ne.s32.totalorder %s113, %s114
    %p123 = scmp.eq.s32.totalorder %s82, 0
    %p124 = por %p122, %p123
    %p125 = scmp.ne.s32.totalorder %s113, %s114
    %p126 = scmp.eq.s32.totalorder %s83, 1
    %p127 = por %p125, %p126
    %p129 = scmp.ne.s32.totalorder %s114, %s128
    %p130 = scmp.eq.s32.totalorder %s83, 0
    %p131 = por %p129, %p130
    %s133 = sadd.s32 %s132, 1
    %p136 = scmp.eq.s32.totalorder %s77, 1
    %p137 = scmp.ne.s32.totalorder %s132, %s134
    %p138 = scmp.eq.s32.totalorder %s77, 0
    %p139 = por %p137, %p138
    %p140 = scmp.ne.s32.totalorder %s132, %s134
    %p141 = scmp.eq.s32.totalorder %s82, 1
    %p142 = por %p140, %p141
    %p143 = scmp.ne.s32.totalorder %s134, %s135
    %p144 = scmp.eq.s32.totalorder %s82, 0
    %p145 = por %p143, %p144
    %p146 = scmp.ne.s32.totalorder %s134, %s135
    %p147 = scmp.eq.s32.totalorder %s83, 1
    %p148 = por %p146, %p147
    %p150 = scmp.ne.s32.totalorder %s135, %s149
    %p151 = scmp.eq.s32.totalorder %s83, 0
    %p152 = por %p150, %p151
    %s154 = sadd.s32 %s153, 1
    %p157 = scmp.eq.s32.totalorder %s77, 1
    %p158 = scmp.ne.s32.totalorder %s153, %s155
    %p159 = scmp.eq.s32.totalorder %s77, 0
    %p160 = por %p158, %p159
    %p161 = scmp.ne.s32.totalorder %s153, %s155
    %p162 = scmp.eq.s32.totalorder %s82, 1
    %p163 = por %p161, %p162
    %p164 = scmp.ne.s32.totalorder %s155, %s156
    %p165 = scmp.eq.s32.totalorder %s82, 0
    %p166 = por %p164, %p165
    %p167 = scmp.ne.s32.totalorder %s155, %s156
    %p168 = scmp.eq.s32.totalorder %s83, 1
    %p169 = por %p167, %p168
    %p171 = scmp.ne.s32.totalorder %s156, %s170
    %p172 = scmp.eq.s32.totalorder %s83, 0
    %p173 = por %p171, %p172
    %s175 = sadd.s32 %s174, 1
    %p178 = scmp.eq.s32.totalorder %s77, 1
    %p179 = scmp.ne.s32.totalorder %s174, %s176
    %p180 = scmp.eq.s32.totalorder %s77, 0
    %p181 = por %p179, %p180
    %p182 = scmp.ne.s32.totalorder %s174, %s176
    %p183 = scmp.eq.s32.totalorder %s82, 1
    %p184 = por %p182, %p183
    %p185 = scmp.ne.s32.totalorder %s176, %s177
    %p186 = scmp.eq.s32.totalorder %s82, 0
    %p187 = por %p185, %p186
    %p188 = scmp.ne.s32.totalorder %s176, %s177
    %p189 = scmp.eq.s32.totalorder %s83, 1
    %p190 = por %p188, %p189
    %p192 = scmp.ne.s32.totalorder %s177, %s191
    %p193 = scmp.eq.s32.totalorder %s83, 0
    %p194 = por %p192, %p193
    %s196 = sadd.s32 %s195, 1
    %p199 = scmp.eq.s32.totalorder %s77, 1
    %p200 = scmp.ne.s32.totalorder %s195, %s197
    %p201 = scmp.eq.s32.totalorder %s77, 0
    %p202 = por %p200, %p201
    %p203 = scmp.ne.s32.totalorder %s195, %s197
    %p204 = scmp.eq.s32.totalorder %s82, 1
    %p205 = por %p203, %p204
    %p206 = scmp.ne.s32.totalorder %s197, %s198
    %p207 = scmp.eq.s32.totalorder %s82, 0
    %p208 = por %p206, %p207
    %p209 = scmp.ne.s32.totalorder %s197, %s198
    %p210 = scmp.eq.s32.totalorder %s83, 1
    %p211 = por %p209, %p210
    %p213 = scmp.ne.s32.totalorder %s198, %s212
    %p214 = scmp.eq.s32.totalorder %s83, 0
    %p215 = por %p213, %p214
    %s217 = sadd.s32 %s216, 1
    %p220 = scmp.eq.s32.totalorder %s77, 1
    %p221 = scmp.ne.s32.totalorder %s216, %s218
    %p222 = scmp.eq.s32.totalorder %s77, 0
    %p223 = por %p221, %p222
    %p224 = scmp.ne.s32.totalorder %s216, %s218
    %p225 = scmp.eq.s32.totalorder %s82, 1
    %p226 = por %p224, %p225
    %p227 = scmp.ne.s32.totalorder %s218, %s219
    %p228 = scmp.eq.s32.totalorder %s82, 0
    %p229 = por %p227, %p228
    %p230 = scmp.ne.s32.totalorder %s218, %s219
    %p231 = scmp.eq.s32.totalorder %s83, 1
    %p232 = por %p230, %p231
    %p234 = scmp.ne.s32.totalorder %s219, %s233
    %p235 = scmp.eq.s32.totalorder %s83, 0
    %p236 = por %p234, %p235
    %s238 = sadd.s32 %s237, 1
    %p241 = scmp.eq.s32.totalorder %s77, 1
    %p242 = scmp.ne.s32.totalorder %s237, %s239
    %p243 = scmp.eq.s32.totalorder %s77, 0
    %p244 = por %p242, %p243
    %p245 = scmp.ne.s32.totalorder %s237, %s239
    %p246 = scmp.eq.s32.totalorder %s82, 1
    %p247 = por %p245, %p246
    %p248 = scmp.ne.s32.totalorder %s239, %s240
    %p249 = scmp.eq.s32.totalorder %s82, 0
    %p250 = por %p248, %p249
    %p251 = scmp.ne.s32.totalorder %s239, %s240
    %p252 = scmp.eq.s32.totalorder %s83, 1
    %p253 = por %p251, %p252
    %p255 = scmp.ne.s32.totalorder %s240, %s254
    %p256 = scmp.eq.s32.totalorder %s83, 0
    %p257 = por %p255, %p256
    %s259 = sadd.s32 %s258, 1
    %p262 = scmp.eq.s32.totalorder %s77, 1
    %p263 = scmp.ne.s32.totalorder %s258, %s260
    %p264 = scmp.eq.s32.totalorder %s77, 0
    %p265 = por %p263, %p264
    %p266 = scmp.ne.s32.totalorder %s258, %s260
    %p267 = scmp.eq.s32.totalorder %s82, 1
    %p268 = por %p266, %p267
    %p269 = scmp.ne.s32.totalorder %s260, %s261
    %p270 = scmp.eq.s32.totalorder %s82, 0
    %p271 = por %p269, %p270
    %p272 = scmp.ne.s32.totalorder %s260, %s261
    %p273 = scmp.eq.s32.totalorder %s83, 1
    %p274 = por %p272, %p273
    %p276 = scmp.ne.s32.totalorder %s261, %s275
    %p277 = scmp.eq.s32.totalorder %s83, 0
    %p278 = por %p276, %p277
    %s280 = sadd.s32 %s279, 1
    %p283 = scmp.eq.s32.totalorder %s77, 1
    %p284 = scmp.ne.s32.totalorder %s279, %s281
    %p285 = scmp.eq.s32.totalorder %s77, 0
    %p286 = por %p284, %p285
    %p287 = scmp.ne.s32.totalorder %s279, %s281
    %p288 = scmp.eq.s32.totalorder %s82, 1
    %p289 = por %p287, %p288
    %p290 = scmp.ne.s32.totalorder %s281, %s282
    %p291 = scmp.eq.s32.totalorder %s82, 0
    %p292 = por %p290, %p291
    %p293 = scmp.ne.s32.totalorder %s281, %s282
    %p294 = scmp.eq.s32.totalorder %s83, 1
    %p295 = por %p293, %p294
    %p297 = scmp.ne.s32.totalorder %s282, %s296
    %p298 = scmp.eq.s32.totalorder %s83, 0
    %p299 = por %p297, %p298
    %s301 = sadd.s32 %s300, 1
    %p304 = scmp.eq.s32.totalorder %s77, 1
    %p305 = scmp.ne.s32.totalorder %s300, %s302
    %p306 = scmp.eq.s32.totalorder %s77, 0
    %p307 = por %p305, %p306
    %p308 = scmp.ne.s32.totalorder %s300, %s302
    %p309 = scmp.eq.s32.totalorder %s82, 1
    %p310 = por %p308, %p309
    %p311 = scmp.ne.s32.totalorder %s302, %s303
    %p312 = scmp.eq.s32.totalorder %s82, 0
    %p313 = por %p311, %p312
    %p314 = scmp.ne.s32.totalorder %s302, %s303
    %p315 = scmp.eq.s32.totalorder %s83, 1
    %p316 = por %p314, %p315
    %p318 = scmp.ne.s32.totalorder %s303, %s317
    %p319 = scmp.eq.s32.totalorder %s83, 0
    %p320 = por %p318, %p319
    %s322 = sadd.s32 %s321, 1
    %p325 = scmp.eq.s32.totalorder %s77, 1
    %p326 = scmp.ne.s32.totalorder %s321, %s323
    %p327 = scmp.eq.s32.totalorder %s77, 0
    %p328 = por %p326, %p327
    %p329 = scmp.ne.s32.totalorder %s321, %s323
    %p330 = scmp.eq.s32.totalorder %s82, 1
    %p331 = por %p329, %p330
    %p332 = scmp.ne.s32.totalorder %s323, %s324
    %p333 = scmp.eq.s32.totalorder %s82, 0
    %p334 = por %p332, %p333
    %p335 = scmp.ne.s32.totalorder %s323, %s324
    %p336 = scmp.eq.s32.totalorder %s83, 1
    %p337 = por %p335, %p336
    %p339 = scmp.ne.s32.totalorder %s324, %s338
    %p340 = scmp.eq.s32.totalorder %s83, 0
    %p341 = por %p339, %p340
    %s343 = sadd.s32 %s342, 1
    %p346 = scmp.eq.s32.totalorder %s77, 1
    %p347 = scmp.ne.s32.totalorder %s342, %s344
    %p348 = scmp.eq.s32.totalorder %s77, 0
    %p349 = por %p347, %p348
    %p350 = scmp.ne.s32.totalorder %s342, %s344
    %p351 = scmp.eq.s32.totalorder %s82, 1
    %p352 = por %p350, %p351
    %p353 = scmp.ne.s32.totalorder %s344, %s345
    %p354 = scmp.eq.s32.totalorder %s82, 0
    %p355 = por %p353, %p354
    %p356 = scmp.ne.s32.totalorder %s344, %s345
    %p357 = scmp.eq.s32.totalorder %s83, 1
    %p358 = por %p356, %p357
    %p360 = scmp.ne.s32.totalorder %s345, %s359
    %p361 = scmp.eq.s32.totalorder %s83, 0
    %p362 = por %p360, %p361
    %s364 = sadd.s32 %s363, 1
    %p367 = scmp.eq.s32.totalorder %s77, 1
    %p368 = scmp.ne.s32.totalorder %s363, %s365
    %p369 = scmp.eq.s32.totalorder %s77, 0
    %p370 = por %p368, %p369
    %p371 = scmp.ne.s32.totalorder %s363, %s365
    %p372 = scmp.eq.s32.totalorder %s82, 1
    %p373 = por %p371, %p372
    %p374 = scmp.ne.s32.totalorder %s365, %s366
    %p375 = scmp.eq.s32.totalorder %s82, 0
    %p376 = por %p374, %p375
    %p377 = scmp.ne.s32.totalorder %s365, %s366
    %p378 = scmp.eq.s32.totalorder %s83, 1
    %p379 = por %p377, %p378
    %p381 = scmp.ne.s32.totalorder %s366, %s380
    %p382 = scmp.eq.s32.totalorder %s83, 0
    %p383 = por %p381, %p382
    %s385 = sadd.s32 %s384, 1
    %p388 = scmp.eq.s32.totalorder %s77, 1
    %p389 = scmp.ne.s32.totalorder %s384, %s386
    %p390 = scmp.eq.s32.totalorder %s77, 0
    %p391 = por %p389, %p390
    %p392 = scmp.ne.s32.totalorder %s384, %s386
    %p393 = scmp.eq.s32.totalorder %s82, 1
    %p394 = por %p392, %p393
    %p395 = scmp.ne.s32.totalorder %s386, %s387
    %p396 = scmp.eq.s32.totalorder %s82, 0
    %p397 = por %p395, %p396
    %p398 = scmp.ne.s32.totalorder %s386, %s387
    %p399 = scmp.eq.s32.totalorder %s83, 1
    %p400 = por %p398, %p399
    %p402 = scmp.ne.s32.totalorder %s387, %s401
    %p403 = scmp.eq.s32.totalorder %s83, 0
    %p404 = por %p402, %p403
    %s406 = sadd.s32 %s405, 1
    %p409 = scmp.eq.s32.totalorder %s77, 1
    %p410 = scmp.ne.s32.totalorder %s405, %s407
    %p411 = scmp.eq.s32.totalorder %s77, 0
    %p412 = por %p410, %p411
    %p413 = scmp.ne.s32.totalorder %s405, %s407
    %p414 = scmp.eq.s32.totalorder %s82, 1
    %p415 = por %p413, %p414
    %p416 = scmp.ne.s32.totalorder %s407, %s408
    %p417 = scmp.eq.s32.totalorder %s82, 0
    %p418 = por %p416, %p417
    %p419 = scmp.ne.s32.totalorder %s407, %s408
    %p420 = scmp.eq.s32.totalorder %s83, 1
    %p421 = por %p419, %p420
    %p423 = scmp.ne.s32.totalorder %s408, %s422
    %p424 = scmp.eq.s32.totalorder %s83, 0
    %p425 = por %p423, %p424
    %s427 = sadd.s32 %s426, 1
    %p430 = scmp.eq.s32.totalorder %s77, 1
    %p431 = scmp.ne.s32.totalorder %s426, %s428
    %p432 = scmp.eq.s32.totalorder %s77, 0
    %p433 = por %p431, %p432
    %p434 = scmp.ne.s32.totalorder %s426, %s428
    %p435 = scmp.eq.s32.totalorder %s82, 1
    %p436 = por %p434, %p435
    %p437 = scmp.ne.s32.totalorder %s428, %s429
    %p438 = scmp.eq.s32.totalorder %s82, 0
    %p439 = por %p437, %p438
    %p440 = scmp.ne.s32.totalorder %s428, %s429
    %p441 = scmp.eq.s32.totalorder %s83, 1
    %p442 = por %p440, %p441
    %p444 = scmp.ne.s32.totalorder %s429, %s443
    %p445 = scmp.eq.s32.totalorder %s83, 0
    %p446 = por %p444, %p445
    %s448 = sadd.s32 %s447, 1
    %p451 = scmp.eq.s32.totalorder %s77, 1
    %p452 = scmp.ne.s32.totalorder %s447, %s449
    %p453 = scmp.eq.s32.totalorder %s77, 0
    %p454 = por %p452, %p453
    %p455 = scmp.ne.s32.totalorder %s447, %s449
    %p456 = scmp.eq.s32.totalorder %s82, 1
    %p457 = por %p455, %p456
    %p458 = scmp.ne.s32.totalorder %s449, %s450
    %p459 = scmp.eq.s32.totalorder %s82, 0
    %p460 = por %p458, %p459
    %p461 = scmp.ne.s32.totalorder %s449, %s450
    %p462 = scmp.eq.s32.totalorder %s83, 1
    %p463 = por %p461, %p462
    %p465 = scmp.ne.s32.totalorder %s450, %s464
    %p466 = scmp.eq.s32.totalorder %s83, 0
    %p467 = por %p465, %p466
    %s469 = sadd.s32 %s468, 1
    %p472 = scmp.eq.s32.totalorder %s77, 1
    %p473 = scmp.ne.s32.totalorder %s468, %s470
    %p474 = scmp.eq.s32.totalorder %s77, 0
    %p475 = por %p473, %p474
    %p476 = scmp.ne.s32.totalorder %s468, %s470
    %p477 = scmp.eq.s32.totalorder %s82, 1
    %p478 = por %p476, %p477
    %p479 = scmp.ne.s32.totalorder %s470, %s471
    %p480 = scmp.eq.s32.totalorder %s82, 0
    %p481 = por %p479, %p480
    %p482 = scmp.ne.s32.totalorder %s470, %s471
    %p483 = scmp.eq.s32.totalorder %s83, 1
    %p484 = por %p482, %p483
    %p486 = scmp.ne.s32.totalorder %s471, %s485
    %p487 = scmp.eq.s32.totalorder %s83, 0
    %p488 = por %p486, %p487
    %s490 = sadd.s32 %s489, 1
    %p493 = scmp.eq.s32.totalorder %s77, 1
    %p494 = scmp.ne.s32.totalorder %s489, %s491
    %p495 = scmp.eq.s32.totalorder %s77, 0
    %p496 = por %p494, %p495
    %p497 = scmp.ne.s32.totalorder %s489, %s491
    %p498 = scmp.eq.s32.totalorder %s82, 1
    %p499 = por %p497, %p498
    %p500 = scmp.ne.s32.totalorder %s491, %s492
    %p501 = scmp.eq.s32.totalorder %s82, 0
    %p502 = por %p500, %p501
    %p503 = scmp.ne.s32.totalorder %s491, %s492
    %p504 = scmp.eq.s32.totalorder %s83, 1
    %p505 = por %p503, %p504
    %p507 = scmp.ne.s32.totalorder %s492, %s506
    %p508 = scmp.eq.s32.totalorder %s83, 0
    %p509 = por %p507, %p508
    %s511 = sadd.s32 %s510, 1
    %p514 = scmp.eq.s32.totalorder %s77, 1
    %p515 = scmp.ne.s32.totalorder %s510, %s512
    %p516 = scmp.eq.s32.totalorder %s77, 0
    %p517 = por %p515, %p516
    %p518 = scmp.ne.s32.totalorder %s510, %s512
    %p519 = scmp.eq.s32.totalorder %s82, 1
    %p520 = por %p518, %p519
    %p521 = scmp.ne.s32.totalorder %s512, %s513
    %p522 = scmp.eq.s32.totalorder %s82, 0
    %p523 = por %p521, %p522
    %p524 = scmp.ne.s32.totalorder %s512, %s513
    %p525 = scmp.eq.s32.totalorder %s83, 1
    %p526 = por %p524, %p525
    %p528 = scmp.ne.s32.totalorder %s513, %s527
    %p529 = scmp.eq.s32.totalorder %s83, 0
    %p530 = por %p528, %p529
    %s532 = sadd.s32 %s531, 1
    %p535 = scmp.eq.s32.totalorder %s77, 1
    %p536 = scmp.ne.s32.totalorder %s531, %s533
    %p537 = scmp.eq.s32.totalorder %s77, 0
    %p538 = por %p536, %p537
    %p539 = scmp.ne.s32.totalorder %s531, %s533
    %p540 = scmp.eq.s32.totalorder %s82, 1
    %p541 = por %p539, %p540
    %p542 = scmp.ne.s32.totalorder %s533, %s534
    %p543 = scmp.eq.s32.totalorder %s82, 0
    %p544 = por %p542, %p543
    %p545 = scmp.ne.s32.totalorder %s533, %s534
    %p546 = scmp.eq.s32.totalorder %s83, 1
    %p547 = por %p545, %p546
    %p549 = scmp.ne.s32.totalorder %s534, %s548
    %p550 = scmp.eq.s32.totalorder %s83, 0
    %p551 = por %p549, %p550
    %s553 = sadd.s32 %s552, 1
    %p556 = scmp.eq.s32.totalorder %s77, 1
    %p557 = scmp.ne.s32.totalorder %s552, %s554
    %p558 = scmp.eq.s32.totalorder %s77, 0
    %p559 = por %p557, %p558
    %p560 = scmp.ne.s32.totalorder %s552, %s554
    %p561 = scmp.eq.s32.totalorder %s82, 1
    %p562 = por %p560, %p561
    %p563 = scmp.ne.s32.totalorder %s554, %s555
    %p564 = scmp.eq.s32.totalorder %s82, 0
    %p565 = por %p563, %p564
    %p566 = scmp.ne.s32.totalorder %s554, %s555
    %p567 = scmp.eq.s32.totalorder %s83, 1
    %p568 = por %p566, %p567
    %p570 = scmp.ne.s32.totalorder %s555, %s569
    %p571 = scmp.eq.s32.totalorder %s83, 0
    %p572 = por %p570, %p571
    %s574 = sadd.s32 %s573, 1
    %p577 = scmp.eq.s32.totalorder %s77, 1
    %p578 = scmp.ne.s32.totalorder %s573, %s575
    %p579 = scmp.eq.s32.totalorder %s77, 0
    %p580 = por %p578, %p579
    %p581 = scmp.ne.s32.totalorder %s573, %s575
    %p582 = scmp.eq.s32.totalorder %s82, 1
    %p583 = por %p581, %p582
    %p584 = scmp.ne.s32.totalorder %s575, %s576
    %p585 = scmp.eq.s32.totalorder %s82, 0
    %p586 = por %p584, %p585
    %p587 = scmp.ne.s32.totalorder %s575, %s576
    %p588 = scmp.eq.s32.totalorder %s83, 1
    %p589 = por %p587, %p588
    %p591 = scmp.ne.s32.totalorder %s576, %s590
    %p592 = scmp.eq.s32.totalorder %s83, 0
    %p593 = por %p591, %p592
    %s595 = sadd.s32 %s594, 1
    %p598 = scmp.eq.s32.totalorder %s77, 1
    %p599 = scmp.ne.s32.totalorder %s594, %s596
    %p600 = scmp.eq.s32.totalorder %s77, 0
    %p601 = por %p599, %p600
    %p602 = scmp.ne.s32.totalorder %s594, %s596
    %p603 = scmp.eq.s32.totalorder %s82, 1
    %p604 = por %p602, %p603
    %p605 = scmp.ne.s32.totalorder %s596, %s597
    %p606 = scmp.eq.s32.totalorder %s82, 0
    %p607 = por %p605, %p606
    %p608 = scmp.ne.s32.totalorder %s596, %s597
    %p609 = scmp.eq.s32.totalorder %s83, 1
    %p610 = por %p608, %p609
    %p612 = scmp.ne.s32.totalorder %s597, %s611
    %p613 = scmp.eq.s32.totalorder %s83, 0
    %p614 = por %p612, %p613
    %s616 = sadd.s32 %s615, 1
    %p619 = scmp.eq.s32.totalorder %s77, 1
    %p620 = scmp.ne.s32.totalorder %s615, %s617
    %p621 = scmp.eq.s32.totalorder %s77, 0
    %p622 = por %p620, %p621
    %p623 = scmp.ne.s32.totalorder %s615, %s617
    %p624 = scmp.eq.s32.totalorder %s82, 1
    %p625 = por %p623, %p624
    %p626 = scmp.ne.s32.totalorder %s617, %s618
    %p627 = scmp.eq.s32.totalorder %s82, 0
    %p628 = por %p626, %p627
    %p629 = scmp.ne.s32.totalorder %s617, %s618
    %p630 = scmp.eq.s32.totalorder %s83, 1
    %p631 = por %p629, %p630
    %p633 = scmp.ne.s32.totalorder %s618, %s632
    %p634 = scmp.eq.s32.totalorder %s83, 0
    %p635 = por %p633, %p634
    %s637 = sadd.s32 %s636, 1
    %p640 = scmp.eq.s32.totalorder %s77, 1
    %p641 = scmp.ne.s32.totalorder %s636, %s638
    %p642 = scmp.eq.s32.totalorder %s77, 0
    %p643 = por %p641, %p642
    %p644 = scmp.ne.s32.totalorder %s636, %s638
    %p645 = scmp.eq.s32.totalorder %s82, 1
    %p646 = por %p644, %p645
    %p647 = scmp.ne.s32.totalorder %s638, %s639
    %p648 = scmp.eq.s32.totalorder %s82, 0
    %p649 = por %p647, %p648
    %p650 = scmp.ne.s32.totalorder %s638, %s639
    %p651 = scmp.eq.s32.totalorder %s83, 1
    %p652 = por %p650, %p651
    %p654 = scmp.ne.s32.totalorder %s639, %s653
    %p655 = scmp.eq.s32.totalorder %s83, 0
    %p656 = por %p654, %p655
    %s658 = sadd.s32 %s657, 1
    %p661 = scmp.eq.s32.totalorder %s77, 1
    %p662 = scmp.ne.s32.totalorder %s657, %s659
    %p663 = scmp.eq.s32.totalorder %s77, 0
    %p664 = por %p662, %p663
    %p665 = scmp.ne.s32.totalorder %s657, %s659
    %p666 = scmp.eq.s32.totalorder %s82, 1
    %p667 = por %p665, %p666
    %p668 = scmp.ne.s32.totalorder %s659, %s660
    %p669 = scmp.eq.s32.totalorder %s82, 0
    %p670 = por %p668, %p669
    %p671 = scmp.ne.s32.totalorder %s659, %s660
    %p672 = scmp.eq.s32.totalorder %s83, 1
    %p673 = por %p671, %p672
    %p675 = scmp.ne.s32.totalorder %s660, %s674
    %p676 = scmp.eq.s32.totalorder %s83, 0
    %p677 = por %p675, %p676
    %s679 = sadd.s32 %s678, 1
    %p682 = scmp.eq.s32.totalorder %s77, 1
    %p683 = scmp.ne.s32.totalorder %s678, %s680
    %p684 = scmp.eq.s32.totalorder %s77, 0
    %p685 = por %p683, %p684
    %p686 = scmp.ne.s32.totalorder %s678, %s680
    %p687 = scmp.eq.s32.totalorder %s82, 1
    %p688 = por %p686, %p687
    %p689 = scmp.ne.s32.totalorder %s680, %s681
    %p690 = scmp.eq.s32.totalorder %s82, 0
    %p691 = por %p689, %p690
    %p692 = scmp.ne.s32.totalorder %s680, %s681
    %p693 = scmp.eq.s32.totalorder %s83, 1
    %p694 = por %p692, %p693
    %p696 = scmp.ne.s32.totalorder %s681, %s695
    %p697 = scmp.eq.s32.totalorder %s83, 0
    %p698 = por %p696, %p697
    %s700 = sadd.s32 %s699, 1
    %p703 = scmp.eq.s32.totalorder %s77, 1
    %p704 = scmp.ne.s32.totalorder %s699, %s701
    %p705 = scmp.eq.s32.totalorder %s77, 0
    %p706 = por %p704, %p705
    %p707 = scmp.ne.s32.totalorder %s699, %s701
    %p708 = scmp.eq.s32.totalorder %s82, 1
    %p709 = por %p707, %p708
    %p710 = scmp.ne.s32.totalorder %s701, %s702
    %p711 = scmp.eq.s32.totalorder %s82, 0
    %p712 = por %p710, %p711
    %p713 = scmp.ne.s32.totalorder %s701, %s702
    %p714 = scmp.eq.s32.totalorder %s83, 1
    %p715 = por %p713, %p714
    %p717 = scmp.ne.s32.totalorder %s702, %s716
    %p718 = scmp.eq.s32.totalorder %s83, 0
    %p719 = por %p717, %p718
    %s721 = sadd.s32 %s720, 1
    %p724 = scmp.eq.s32.totalorder %s77, 1
    %p725 = scmp.ne.s32.totalorder %s720, %s722
    %p726 = scmp.eq.s32.totalorder %s77, 0
    %p727 = por %p725, %p726
    %p728 = scmp.ne.s32.totalorder %s720, %s722
    %p729 = scmp.eq.s32.totalorder %s82, 1
    %p730 = por %p728, %p729
    %p731 = scmp.ne.s32.totalorder %s722, %s723
    %p732 = scmp.eq.s32.totalorder %s82, 0
    %p733 = por %p731, %p732
    %p734 = scmp.ne.s32.totalorder %s722, %s723
    %p735 = scmp.eq.s32.totalorder %s83, 1
    %p736 = por %p734, %p735
    %p738 = scmp.ne.s32.totalorder %s723, %s737
    %p739 = scmp.eq.s32.totalorder %s83, 0
    %p740 = por %p738, %p739
    %s742 = sadd.s32 %s741, 1
    %p745 = scmp.eq.s32.totalorder %s77, 1
    %p746 = scmp.ne.s32.totalorder %s741, %s743
    %p747 = scmp.eq.s32.totalorder %s77, 0
    %p748 = por %p746, %p747
    %p749 = scmp.ne.s32.totalorder %s741, %s743
    %p750 = scmp.eq.s32.totalorder %s82, 1
    %p751 = por %p749, %p750
    %p752 = scmp.ne.s32.totalorder %s743, %s744
    %p753 = scmp.eq.s32.totalorder %s82, 0
    %p754 = por %p752, %p753
    %p755 = scmp.ne.s32.totalorder %s743, %s744
    %p756 = scmp.eq.s32.totalorder %s83, 1
    %p757 = por %p755, %p756
    %p759 = scmp.ne.s32.totalorder %s744, %s758
    %p760 = scmp.eq.s32.totalorder %s83, 0
    %p761 = por %p759, %p760
    %s763 = sadd.s32 %s762, 1
    %p766 = scmp.eq.s32.totalorder %s77, 1
    %p767 = scmp.ne.s32.totalorder %s762, %s764
    %p768 = scmp.eq.s32.totalorder %s77, 0
    %p769 = por %p767, %p768
    %p770 = scmp.ne.s32.totalorder %s762, %s764
    %p771 = scmp.eq.s32.totalorder %s82, 1
    %p772 = por %p770, %p771
    %p773 = scmp.ne.s32.totalorder %s764, %s765
    %p774 = scmp.eq.s32.totalorder %s82, 0
    %p775 = por %p773, %p774
    %p776 = scmp.ne.s32.totalorder %s764, %s765
    %p777 = scmp.eq.s32.totalorder %s83, 1
    %p778 = por %p776, %p777
    %p780 = scmp.ne.s32.totalorder %s765, %s779
    %p781 = scmp.eq.s32.totalorder %s83, 0
    %p782 = por %p780, %p781
    %s784 = sadd.s32 %s783, 1
    %p787 = scmp.eq.s32.totalorder %s77, 1
    %p788 = scmp.ne.s32.totalorder %s783, %s785
    %p789 = scmp.eq.s32.totalorder %s77, 0
    %p790 = por %p788, %p789
    %p791 = scmp.ne.s32.totalorder %s783, %s785
    %p792 = scmp.eq.s32.totalorder %s82, 1
    %p793 = por %p791, %p792
    %p794 = scmp.ne.s32.totalorder %s785, %s786
    %p795 = scmp.eq.s32.totalorder %s82, 0
    %p796 = por %p794, %p795
    %p797 = scmp.ne.s32.totalorder %s785, %s786
    %p798 = scmp.eq.s32.totalorder %s83, 1
    %p799 = por %p797, %p798
    %p801 = scmp.ne.s32.totalorder %s786, %s800
    %p802 = scmp.eq.s32.totalorder %s83, 0
    %p803 = por %p801, %p802
    %s805 = sadd.s32 %s804, 1
    %p808 = scmp.eq.s32.totalorder %s77, 1
    %p809 = scmp.ne.s32.totalorder %s804, %s806
    %p810 = scmp.eq.s32.totalorder %s77, 0
    %p811 = por %p809, %p810
    %p812 = scmp.ne.s32.totalorder %s804, %s806
    %p813 = scmp.eq.s32.totalorder %s82, 1
    %p814 = por %p812, %p813
    %p815 = scmp.ne.s32.totalorder %s806, %s807
    %p816 = scmp.eq.s32.totalorder %s82, 0
    %p817 = por %p815, %p816
    %p818 = scmp.ne.s32.totalorder %s806, %s807
    %p819 = scmp.eq.s32.totalorder %s83, 1
    %p820 = por %p818, %p819
    %p822 = scmp.ne.s32.totalorder %s807, %s821
    %p823 = scmp.eq.s32.totalorder %s83, 0
    %p824 = por %p822, %p823
    %s825 = ssub.s32 %s77, %s84
    %p826 = scmp.eq.s32.totalorder %s825, 0
    %s828 = sadd.s32 %s827, 1
    %s829 = scalar_select %p826, %s827, %s828
    %p832 = pneg %p826
    %p833 = scmp.eq.s32.totalorder %s77, 1
    %p834 = por %p832, %p833
    %p835 = scmp.ne.s32.totalorder %s827, %s830
    %p836 = scmp.eq.s32.totalorder %s77, 0
    %p837 = por %p835, %p836
    %p838 = scmp.ne.s32.totalorder %s827, %s830
    %p839 = scmp.eq.s32.totalorder %s82, 1
    %p840 = por %p838, %p839
    %p841 = scmp.ne.s32.totalorder %s830, %s831
    %p842 = scmp.eq.s32.totalorder %s82, 0
    %p843 = por %p841, %p842
    %p844 = scmp.ne.s32.totalorder %s830, %s831
    %p845 = scmp.eq.s32.totalorder %s83, 1
    %p846 = por %p844, %p845
    %p848 = scmp.ne.s32.totalorder %s831, %s847
    %p849 = scmp.eq.s32.totalorder %s83, 0
    %p850 = por %p848, %p849
    %p851 = scmp.le.s32.totalorder 1, %s77
    %p852 = scmp.lt.s32.totalorder %s77, 3
    %p853 = pnand %p851, %p852
    %p854 = pneg %p853
    // Predicated region
    $region9: #{conformer_block.1} parent=5 // pred_check
      _
    $region10: #{conformer_block.1} parent=5 // pred_check_branch
      %856 = sbr.rel (%p853) target = $region12
    $region11: #{conformer_block.1} parent=5 // pred_region
      %s857 = ssub.s32 %s77, 1
      // Predicated region
      $region13: #{conformer_block.1} parent=11 // pred_check
        %p858 = pneg %p124
      $region14: #{conformer_block.1} parent=11 // pred_check_branch
        %860 = sbr.rel (%p858) target = $region16
      $region15: #{conformer_block.1} parent=11 // pred_region
        _
      $region16: #{conformer_block.1} parent=11 // pred_fallthru
        _
      // Predicated region
      $region17: #{conformer_block.1} parent=11 // pred_check
        %p861 = pneg %p145
      $region18: #{conformer_block.1} parent=11 // pred_check_branch
        %863 = sbr.rel (%p861) target = $region20
      $region19: #{conformer_block.1} parent=11 // pred_region
        _
      $region20: #{conformer_block.1} parent=11 // pred_fallthru
        _
      // Predicated region
      $region21: #{conformer_block.1} parent=11 // pred_check
        %p864 = pneg %p166
      $region22: #{conformer_block.1} parent=11 // pred_check_branch
        %866 = sbr.rel (%p864) target = $region24
      $region23: #{conformer_block.1} parent=11 // pred_region
        _
      $region24: #{conformer_block.1} parent=11 // pred_fallthru
        _
      // Predicated region
      $region25: #{conformer_block.1} parent=11 // pred_check
        %p867 = pneg %p187
      $region26: #{conformer_block.1} parent=11 // pred_check_branch
        %869 = sbr.rel (%p867) target = $region28
      $region27: #{conformer_block.1} parent=11 // pred_region
        _
      $region28: #{conformer_block.1} parent=11 // pred_fallthru
        _
      // Predicated region
      $region29: #{conformer_block.1} parent=11 // pred_check
        %p870 = pneg %p208
      $region30: #{conformer_block.1} parent=11 // pred_check_branch
        %872 = sbr.rel (%p870) target = $region32
      $region31: #{conformer_block.1} parent=11 // pred_region
        _
      $region32: #{conformer_block.1} parent=11 // pred_fallthru
        _
      // Predicated region
      $region33: #{conformer_block.1} parent=11 // pred_check
        %p873 = pneg %p229
      $region34: #{conformer_block.1} parent=11 // pred_check_branch
        %875 = sbr.rel (%p873) target = $region36
      $region35: #{conformer_block.1} parent=11 // pred_region
        _
      $region36: #{conformer_block.1} parent=11 // pred_fallthru
        _
      // Predicated region
      $region37: #{conformer_block.1} parent=11 // pred_check
        %p876 = pneg %p250
      $region38: #{conformer_block.1} parent=11 // pred_check_branch
        %878 = sbr.rel (%p876) target = $region40
      $region39: #{conformer_block.1} parent=11 // pred_region
        _
      $region40: #{conformer_block.1} parent=11 // pred_fallthru
        _
      // Predicated region
      $region41: #{conformer_block.1} parent=11 // pred_check
        %p879 = pneg %p271
      $region42: #{conformer_block.1} parent=11 // pred_check_branch
        %881 = sbr.rel (%p879) target = $region44
      $region43: #{conformer_block.1} parent=11 // pred_region
        _
      $region44: #{conformer_block.1} parent=11 // pred_fallthru
        _
      // Predicated region
      $region45: #{conformer_block.1} parent=11 // pred_check
        %p882 = pneg %p292
      $region46: #{conformer_block.1} parent=11 // pred_check_branch
        %884 = sbr.rel (%p882) target = $region48
      $region47: #{conformer_block.1} parent=11 // pred_region
        _
      $region48: #{conformer_block.1} parent=11 // pred_fallthru
        _
      // Predicated region
      $region49: #{conformer_block.1} parent=11 // pred_check
        %p885 = pneg %p313
      $region50: #{conformer_block.1} parent=11 // pred_check_branch
        %887 = sbr.rel (%p885) target = $region52
      $region51: #{conformer_block.1} parent=11 // pred_region
        _
      $region52: #{conformer_block.1} parent=11 // pred_fallthru
        _
      // Predicated region
      $region53: #{conformer_block.1} parent=11 // pred_check
        %p888 = pneg %p334
      $region54: #{conformer_block.1} parent=11 // pred_check_branch
        %890 = sbr.rel (%p888) target = $region56
      $region55: #{conformer_block.1} parent=11 // pred_region
        _
      $region56: #{conformer_block.1} parent=11 // pred_fallthru
        _
      // Predicated region
      $region57: #{conformer_block.1} parent=11 // pred_check
        %p891 = pneg %p355
      $region58: #{conformer_block.1} parent=11 // pred_check_branch
        %893 = sbr.rel (%p891) target = $region60
      $region59: #{conformer_block.1} parent=11 // pred_region
        _
      $region60: #{conformer_block.1} parent=11 // pred_fallthru
        _
      // Predicated region
      $region61: #{conformer_block.1} parent=11 // pred_check
        %p894 = pneg %p376
      $region62: #{conformer_block.1} parent=11 // pred_check_branch
        %896 = sbr.rel (%p894) target = $region64
      $region63: #{conformer_block.1} parent=11 // pred_region
        _
      $region64: #{conformer_block.1} parent=11 // pred_fallthru
        _
      // Predicated region
      $region65: #{conformer_block.1} parent=11 // pred_check
        %p897 = pneg %p397
      $region66: #{conformer_block.1} parent=11 // pred_check_branch
        %899 = sbr.rel (%p897) target = $region68
      $region67: #{conformer_block.1} parent=11 // pred_region
        _
      $region68: #{conformer_block.1} parent=11 // pred_fallthru
        _
      // Predicated region
      $region69: #{conformer_block.1} parent=11 // pred_check
        %p900 = pneg %p418
      $region70: #{conformer_block.1} parent=11 // pred_check_branch
        %902 = sbr.rel (%p900) target = $region72
      $region71: #{conformer_block.1} parent=11 // pred_region
        _
      $region72: #{conformer_block.1} parent=11 // pred_fallthru
        _
      // Predicated region
      $region73: #{conformer_block.1} parent=11 // pred_check
        %p903 = pneg %p439
      $region74: #{conformer_block.1} parent=11 // pred_check_branch
        %905 = sbr.rel (%p903) target = $region76
      $region75: #{conformer_block.1} parent=11 // pred_region
        _
      $region76: #{conformer_block.1} parent=11 // pred_fallthru
        _
      // Predicated region
      $region77: #{conformer_block.1} parent=11 // pred_check
        %p906 = pneg %p460
      $region78: #{conformer_block.1} parent=11 // pred_check_branch
        %908 = sbr.rel (%p906) target = $region80
      $region79: #{conformer_block.1} parent=11 // pred_region
        _
      $region80: #{conformer_block.1} parent=11 // pred_fallthru
        _
      // Predicated region
      $region81: #{conformer_block.1} parent=11 // pred_check
        %p909 = pneg %p481
      $region82: #{conformer_block.1} parent=11 // pred_check_branch
        %911 = sbr.rel (%p909) target = $region84
      $region83: #{conformer_block.1} parent=11 // pred_region
        _
      $region84: #{conformer_block.1} parent=11 // pred_fallthru
        _
      // Predicated region
      $region85: #{conformer_block.1} parent=11 // pred_check
        %p912 = pneg %p502
      $region86: #{conformer_block.1} parent=11 // pred_check_branch
        %914 = sbr.rel (%p912) target = $region88
      $region87: #{conformer_block.1} parent=11 // pred_region
        _
      $region88: #{conformer_block.1} parent=11 // pred_fallthru
        _
      // Predicated region
      $region89: #{conformer_block.1} parent=11 // pred_check
        %p915 = pneg %p523
      $region90: #{conformer_block.1} parent=11 // pred_check_branch
        %917 = sbr.rel (%p915) target = $region92
      $region91: #{conformer_block.1} parent=11 // pred_region
        _
      $region92: #{conformer_block.1} parent=11 // pred_fallthru
        _
      // Predicated region
      $region93: #{conformer_block.1} parent=11 // pred_check
        %p918 = pneg %p544
      $region94: #{conformer_block.1} parent=11 // pred_check_branch
        %920 = sbr.rel (%p918) target = $region96
      $region95: #{conformer_block.1} parent=11 // pred_region
        _
      $region96: #{conformer_block.1} parent=11 // pred_fallthru
        _
      // Predicated region
      $region97: #{conformer_block.1} parent=11 // pred_check
        %p921 = pneg %p565
      $region98: #{conformer_block.1} parent=11 // pred_check_branch
        %923 = sbr.rel (%p921) target = $region100
      $region99: #{conformer_block.1} parent=11 // pred_region
        _
      $region100: #{conformer_block.1} parent=11 // pred_fallthru
        _
      // Predicated region
      $region101: #{conformer_block.1} parent=11 // pred_check
        %p924 = pneg %p586
      $region102: #{conformer_block.1} parent=11 // pred_check_branch
        %926 = sbr.rel (%p924) target = $region104
      $region103: #{conformer_block.1} parent=11 // pred_region
        _
      $region104: #{conformer_block.1} parent=11 // pred_fallthru
        _
      // Predicated region
      $region105: #{conformer_block.1} parent=11 // pred_check
        %p927 = pneg %p607
      $region106: #{conformer_block.1} parent=11 // pred_check_branch
        %929 = sbr.rel (%p927) target = $region108
      $region107: #{conformer_block.1} parent=11 // pred_region
        _
      $region108: #{conformer_block.1} parent=11 // pred_fallthru
        _
      // Predicated region
      $region109: #{conformer_block.1} parent=11 // pred_check
        %p930 = pneg %p628
      $region110: #{conformer_block.1} parent=11 // pred_check_branch
        %932 = sbr.rel (%p930) target = $region112
      $region111: #{conformer_block.1} parent=11 // pred_region
        _
      $region112: #{conformer_block.1} parent=11 // pred_fallthru
        _
      // Predicated region
      $region113: #{conformer_block.1} parent=11 // pred_check
        %p933 = pneg %p649
      $region114: #{conformer_block.1} parent=11 // pred_check_branch
        %935 = sbr.rel (%p933) target = $region116
      $region115: #{conformer_block.1} parent=11 // pred_region
        _
      $region116: #{conformer_block.1} parent=11 // pred_fallthru
        _
      // Predicated region
      $region117: #{conformer_block.1} parent=11 // pred_check
        %p936 = pneg %p670
      $region118: #{conformer_block.1} parent=11 // pred_check_branch
        %938 = sbr.rel (%p936) target = $region120
      $region119: #{conformer_block.1} parent=11 // pred_region
        _
      $region120: #{conformer_block.1} parent=11 // pred_fallthru
        _
      // Predicated region
      $region121: #{conformer_block.1} parent=11 // pred_check
        %p939 = pneg %p691
      $region122: #{conformer_block.1} parent=11 // pred_check_branch
        %941 = sbr.rel (%p939) target = $region124
      $region123: #{conformer_block.1} parent=11 // pred_region
        _
      $region124: #{conformer_block.1} parent=11 // pred_fallthru
        _
      // Predicated region
      $region125: #{conformer_block.1} parent=11 // pred_check
        %p942 = pneg %p712
      $region126: #{conformer_block.1} parent=11 // pred_check_branch
        %944 = sbr.rel (%p942) target = $region128
      $region127: #{conformer_block.1} parent=11 // pred_region
        _
      $region128: #{conformer_block.1} parent=11 // pred_fallthru
        _
      // Predicated region
      $region129: #{conformer_block.1} parent=11 // pred_check
        %p945 = pneg %p733
      $region130: #{conformer_block.1} parent=11 // pred_check_branch
        %947 = sbr.rel (%p945) target = $region132
      $region131: #{conformer_block.1} parent=11 // pred_region
        _
      $region132: #{conformer_block.1} parent=11 // pred_fallthru
        _
      // Predicated region
      $region133: #{conformer_block.1} parent=11 // pred_check
        %p948 = pneg %p754
      $region134: #{conformer_block.1} parent=11 // pred_check_branch
        %950 = sbr.rel (%p948) target = $region136
      $region135: #{conformer_block.1} parent=11 // pred_region
        _
      $region136: #{conformer_block.1} parent=11 // pred_fallthru
        _
      // Predicated region
      $region137: #{conformer_block.1} parent=11 // pred_check
        %p951 = pneg %p775
      $region138: #{conformer_block.1} parent=11 // pred_check_branch
        %953 = sbr.rel (%p951) target = $region140
      $region139: #{conformer_block.1} parent=11 // pred_region
        _
      $region140: #{conformer_block.1} parent=11 // pred_fallthru
        _
      // Predicated region
      $region141: #{conformer_block.1} parent=11 // pred_check
        %p954 = pneg %p796
      $region142: #{conformer_block.1} parent=11 // pred_check_branch
        %956 = sbr.rel (%p954) target = $region144
      $region143: #{conformer_block.1} parent=11 // pred_region
        _
      $region144: #{conformer_block.1} parent=11 // pred_fallthru
        _
      // Predicated region
      $region145: #{conformer_block.1} parent=11 // pred_check
        %p957 = pneg %p817
      $region146: #{conformer_block.1} parent=11 // pred_check_branch
        %959 = sbr.rel (%p957) target = $region148
      $region147: #{conformer_block.1} parent=11 // pred_region
        _
      $region148: #{conformer_block.1} parent=11 // pred_fallthru
        _
    $region12: #{conformer_block.1} parent=5 // pred_fallthru
      _
    %p960 = scmp.lt.s32.totalorder %s77, 2
    // Predicated region
    $region149: #{conformer_block.1} parent=5 // pred_check
      %p961 = pneg %p960
    $region150: #{conformer_block.1} parent=5 // pred_check_branch
      %963 = sbr.rel (%p961) target = $region152
    $region151: #{conformer_block.1} parent=5 // pred_region
      // Predicated region
      $region153: #{conformer_block.1} parent=151 // pred_check
        %p964 = pneg %p97
      $region154: #{conformer_block.1} parent=151 // pred_check_branch
        %966 = sbr.rel (%p964) target = $region156
      $region155: #{conformer_block.1} parent=151 // pred_region
        %p967 = scmp.lt.s32.totalorder %s77, 1
        %s968 = scalar_select %p967, %s77, 1
        %s969 = smul.addr %s968, 8
        %s970 = scalar_lea.vmem %s1, %s969
      $region156: #{conformer_block.1} parent=151 // pred_fallthru
        _
    $region152: #{conformer_block.1} parent=5 // pred_fallthru
      _
    %p971 = scmp.le.s32.totalorder 1, %s77
    %p972 = scmp.lt.s32.totalorder %s77, 3
    %p973 = pnand %p971, %p972
    %p974 = pneg %p973
    // Predicated region
    $region157: #{conformer_block.1} parent=5 // pred_check
      _
    $region158: #{conformer_block.1} parent=5 // pred_check_branch
      %976 = sbr.rel (%p973) target = $region160
    $region159: #{conformer_block.1} parent=5 // pred_region
      %s977 = ssub.s32 %s77, 1
      %p978 = scmp.lt.s32.totalorder %s82, 1
      %s979 = scalar_select %p978, %s82, 1
      %s980 = smul.addr %s979, 8
      %s981 = scalar_lea.vmem %s1, %s980
      %p982 = pneg %p103
      %p983 = pneg %p100
      %p984 = pneg %p124
      %p985 = pneg %p121
      %p986 = pneg %p145
      %p987 = pneg %p142
      %p988 = pneg %p166
      %p989 = pneg %p163
      %p990 = pneg %p187
      %p991 = pneg %p184
      %p992 = pneg %p208
      %p993 = pneg %p205
      %p994 = pneg %p229
      %p995 = pneg %p226
      %p996 = pneg %p250
      %p997 = pneg %p247
      %p998 = pneg %p271
      %p999 = pneg %p268
      %p1000 = pneg %p292
      %p1001 = pneg %p289
      %p1002 = pneg %p313
      %p1003 = pneg %p310
      %p1004 = pneg %p334
      %p1005 = pneg %p331
      %p1006 = pneg %p355
      %p1007 = pneg %p352
      %p1008 = pneg %p376
      %p1009 = pneg %p373
      %p1010 = pneg %p397
      %p1011 = pneg %p394
      %p1012 = pneg %p418
      %p1013 = pneg %p415
      %p1014 = pneg %p439
      %p1015 = pneg %p436
      %p1016 = pneg %p460
      %p1017 = pneg %p457
      %p1018 = pneg %p481
      %p1019 = pneg %p478
      %p1020 = pneg %p502
      %p1021 = pneg %p499
      %p1022 = pneg %p523
      %p1023 = pneg %p520
      %p1024 = pneg %p544
      %p1025 = pneg %p541
      %p1026 = pneg %p565
      %p1027 = pneg %p562
      %p1028 = pneg %p586
      %p1029 = pneg %p583
      %p1030 = pneg %p607
      %p1031 = pneg %p604
      %p1032 = pneg %p628
      %p1033 = pneg %p625
      %p1034 = pneg %p649
      %p1035 = pneg %p646
      %p1036 = pneg %p670
      %p1037 = pneg %p667
      %p1038 = pneg %p691
      %p1039 = pneg %p688
      %p1040 = pneg %p712
      %p1041 = pneg %p709
      %p1042 = pneg %p733
      %p1043 = pneg %p730
      %p1044 = pneg %p754
      %p1045 = pneg %p751
      %p1046 = pneg %p775
      %p1047 = pneg %p772
      %p1048 = pneg %p796
      %p1049 = pneg %p793
      %p1050 = pneg %p817
      %p1051 = pneg %p814
      %p1052 = pneg %p843
      %p1053 = pneg %p840
      %p1054 = scmp.lt.s32.totalorder %s82, 1
      %s1055 = scalar_select %p1054, %s82, 1
      %s1056 = smul.addr %s1055, 8
      %s1057 = scalar_lea.vmem %s71, %s1056
      %p1058 = scmp.lt.s32.totalorder %s82, 1
      %s1059 = scalar_select %p1058, %s82, 1
      %s1060 = smul.addr %s1059, 8
      %s1061 = scalar_lea.vmem %s1, %s1060
      %p1062 = scmp.lt.s32.totalorder %s82, 1
      %s1063 = scalar_select %p1062, %s82, 1
      %s1064 = smul.addr %s1063, 8
      %s1065 = scalar_lea.vmem %s71, %s1064
      %v1067 = vld [vmem:[%s1061] sm:$0xff]
      %v1068 = vld [vmem:[%s3] sm:$0x1]
      %v1069 = vld [vmem:[%s5] sm:$0x1]
      %v1070 = vld [vmem:[%s7] sm:$0xf]
      %v1071 = vld [vmem:[%s7 + $0x4] sm:$0xf]
      %v1072 = vld [vmem:[%s7 + $0x8] sm:$0xf]
      %v1073 = vld [vmem:[%s7 + $0xc] sm:$0xf]
      %v1074 = vld [vmem:[%s9] sm:$0x1]
      %v1075 = vld [vmem:[%s11] sm:$0xf]
      %v1076 = vld [vmem:[%s11 + $0x4] sm:$0xf]
      %v1077 = vld [vmem:[%s11 + $0x8] sm:$0xf]
      %v1078 = vld [vmem:[%s11 + $0xc] sm:$0xf]
      %v1079 = vld [vmem:[%s11 + $0x10] sm:$0xf]
      %v1080 = vld [vmem:[%s11 + $0x14] sm:$0xf]
      %v1081 = vld [vmem:[%s11 + $0x18] sm:$0xf]
      %v1082 = vld [vmem:[%s11 + $0x1c] sm:$0xf]
      %v1083 = vld [vmem:[%s11 + $0x20] sm:$0xf]
      %v1084 = vld [vmem:[%s11 + $0x24] sm:$0xf]
      %v1085 = vld [vmem:[%s11 + $0x28] sm:$0xf]
      %v1086 = vld [vmem:[%s11 + $0x2c] sm:$0xf]
      %v1087 = vld [vmem:[%s11 + $0x30] sm:$0xf]
      %v1088 = vld [vmem:[%s11 + $0x34] sm:$0xf]
      %v1089 = vld [vmem:[%s11 + $0x38] sm:$0xf]
      %v1090 = vld [vmem:[%s11 + $0x3c] sm:$0xf]
      %v1091 = vld [vmem:[%s13] sm:$0x1]
      %vm1092 = vcmask 261120
      %v1093 = vsel %vm1092, %v1067, 0.0
      %1094 = vadd.xlane.f32.xlu0 %v1093
      %v1095 = vpop.xlane.xlu0 %1094
      %v1096 = vrcp.pop 32.0
      %v1097 = vmul.f32 %v1095, %v1096
      %v1098 = vsub.f32 %v1067, %v1097
      %v1099 = vmul.f32 %v1098, %v1098
      %v1100 = vsel %vm1092, %v1099, 0.0
      %1101 = vadd.xlane.f32.xlu0 %v1100
      %v1102 = vpop.xlane.xlu0 %1101
      %v1103 = vmul.f32 %v1102, %v1096
      %v1104 = vadd.f32 %v1103, 1e-05
      %v1105 = vrsqrt.pop %v1104
      %v1106 = vmul.f32 %v1098, %v1105
      %v1108 = vlaneseq
      %v1109 = vshrl.u32 %v1108, 7
      %v1110 = vsub.s32 0, %v1109
      %v1111 = vrot.slane %v1068, %v1110
      %v1113 = vmul.f32 %v1106, %v1111
      %v1115 = vlaneseq
      %v1116 = vshrl.u32 %v1115, 7
      %v1117 = vsub.s32 0, %v1116
      %v1118 = vrot.slane %v1069, %v1117
      %v1120 = vadd.f32 %v1113, %v1118
      %v1121 = vpack.c.bf16 %v1120, %v1120
      %v1123 = vlaneseq
      %v1124 = vshrl.u32 %v1123, 7
      %v1125 = vsub.s32 0, %v1124
      %v1126 = vrot.slane %v1074, %v1125
      %v1132 = vunpack.c.l.b16 %v1070
      %v1133 = vunpack.c.l.b16 %v1071
      %v1134 = vunpack.c.l.b16 %v1072
      %v1135 = vunpack.c.l.b16 %v1073
      %v1136 = vpack.c.b16 %v1133, %v1132
      %v1137 = vpack.c.b16 %v1135, %v1134
      %v1141 = vsel %vm1092, %v1121, 0
      %1143 = vmatprep.subr.bf16.mxu0 0
      %1144 = vmatpush1.bf16.msra.mxu0 %v1136
      %1145 = vmatprep.subr.bf16.mxu0 0
      %1146 = vmatpush1.bf16.msra.mxu0 %v1137
      %1147 = vmatprep.subr.bf16.mxu0 0
      %1148 = vmatpush1.bf16.msra.mxu0 0
      %1149 = vmatprep.subr.bf16.mxu0 0
      %1150 = vmatpush1.bf16.msra.mxu0 0
      %1151 = vmatprep.subr.bf16.mxu0 0
      %1152 = vmatpush1.bf16.msra.mxu0 0
      %1153 = vmatprep.subr.bf16.mxu0 0
      %1154 = vmatpush1.bf16.msra.mxu0 0
      %1155 = vmatprep.subr.bf16.mxu0 0
      %1156 = vmatpush1.bf16.msra.mxu0 0
      %1157 = vmatprep.subr.bf16.mxu0 0
      %1158 = vmatpush1.bf16.msra.mxu0 0
      %1159 = vmatprep.subr.bf16.mxu0 0
      %1160 = vmatpush1.bf16.msra.mxu0 0
      %1161 = vmatprep.subr.bf16.mxu0 0
      %1162 = vmatpush1.bf16.msra.mxu0 0
      %1163 = vmatprep.subr.bf16.mxu0 0
      %1164 = vmatpush1.bf16.msra.mxu0 0
      %1165 = vmatprep.subr.bf16.mxu0 0
      %1166 = vmatpush1.bf16.msra.mxu0 0
      %1167 = vmatprep.subr.bf16.mxu0 0
      %1168 = vmatpush1.bf16.msra.mxu0 0
      %1169 = vmatprep.subr.bf16.mxu0 0
      %1170 = vmatpush1.bf16.msra.mxu0 0
      %1171 = vmatprep.subr.bf16.mxu0 0
      %1172 = vmatpush1.bf16.msra.mxu0 0
      %1173 = vmatprep.subr.bf16.mxu0 0
      %1174 = vmatpush1.bf16.msra.mxu0 0
      %1175 = vmatprep.mubr.bf16.mxu0 0
      %1176 = vmatmul.mubr.bf16.gmra.mrb[0].mxu0 %v1141
      %v1177 = vpop.f32.mrb[0].mxu0
      %v1178 = vadd.f32 %v1126, %v1177
      %v1179 = vpop.f32.mrb[0].mxu0
      %v1180 = vpop.f32.mrb[0].mxu0
      %v1181 = vpop.f32.mrb[0].mxu0
      %1182 = vdwg.mxu0
      %v1183 = vxor.u32 %v1178, 2147483648
      %v1184 = vmul.f32 %v1183, 1.442695
      %v1185 = vpow.pop %v1184
      %v1186 = vadd.f32 %v1185, 1.0
      %v1187 = vrcp.pop %v1186
      %v1188 = vmul.f32 1.0, %v1187
      %v1189 = vmul.f32 %v1178, %v1188
      %v1190 = vpack.c.bf16 %v1189, %v1189
      %v1192 = vlaneseq
      %v1193 = vshrl.u32 %v1192, 7
      %v1194 = vsub.s32 0, %v1193
      %v1195 = vrot.slane %v1091, %v1194
      %v1213 = vunpack.c.l.b16 %v1075
      %v1214 = vunpack.c.l.b16 %v1076
      %v1215 = vunpack.c.l.b16 %v1077
      %v1216 = vunpack.c.l.b16 %v1078
      %v1217 = vunpack.c.l.b16 %v1079
      %v1218 = vunpack.c.l.b16 %v1080
      %v1219 = vunpack.c.l.b16 %v1081
      %v1220 = vunpack.c.l.b16 %v1082
      %v1221 = vunpack.c.l.b16 %v1083
      %v1222 = vunpack.c.l.b16 %v1084
      %v1223 = vunpack.c.l.b16 %v1085
      %v1224 = vunpack.c.l.b16 %v1086
      %v1225 = vunpack.c.l.b16 %v1087
      %v1226 = vunpack.c.l.b16 %v1088
      %v1227 = vunpack.c.l.b16 %v1089
      %v1228 = vunpack.c.l.b16 %v1090
      %v1229 = vpack.c.b16 %v1214, %v1213
      %v1230 = vpack.c.b16 %v1216, %v1215
      %v1231 = vpack.c.b16 %v1218, %v1217
      %v1232 = vpack.c.b16 %v1220, %v1219
      %v1233 = vpack.c.b16 %v1222, %v1221
      %v1234 = vpack.c.b16 %v1224, %v1223
      %v1235 = vpack.c.b16 %v1226, %v1225
      %v1236 = vpack.c.b16 %v1228, %v1227
      %1245 = vmatprep.subr.bf16.mxu0 0
      %1246 = vmatpush1.bf16.msra.mxu0 %v1229
      %1247 = vmatprep.subr.bf16.mxu0 0
      %1248 = vmatpush1.bf16.msra.mxu0 %v1230
      %1249 = vmatprep.subr.bf16.mxu0 0
      %1250 = vmatpush1.bf16.msra.mxu0 %v1231
      %1251 = vmatprep.subr.bf16.mxu0 0
      %1252 = vmatpush1.bf16.msra.mxu0 %v1232
      %1253 = vmatprep.subr.bf16.mxu0 0
      %1254 = vmatpush1.bf16.msra.mxu0 %v1233
      %1255 = vmatprep.subr.bf16.mxu0 0
      %1256 = vmatpush1.bf16.msra.mxu0 %v1234
      %1257 = vmatprep.subr.bf16.mxu0 0
      %1258 = vmatpush1.bf16.msra.mxu0 %v1235
      %1259 = vmatprep.subr.bf16.mxu0 0
      %1260 = vmatpush1.bf16.msra.mxu0 %v1236
      %1261 = vmatprep.subr.bf16.mxu0 0
      %1262 = vmatpush1.bf16.msra.mxu0 0
      %1263 = vmatprep.subr.bf16.mxu0 0
      %1264 = vmatpush1.bf16.msra.mxu0 0
      %1265 = vmatprep.subr.bf16.mxu0 0
      %1266 = vmatpush1.bf16.msra.mxu0 0
      %1267 = vmatprep.subr.bf16.mxu0 0
      %1268 = vmatpush1.bf16.msra.mxu0 0
      %1269 = vmatprep.subr.bf16.mxu0 0
      %1270 = vmatpush1.bf16.msra.mxu0 0
      %1271 = vmatprep.subr.bf16.mxu0 0
      %1272 = vmatpush1.bf16.msra.mxu0 0
      %1273 = vmatprep.subr.bf16.mxu0 0
      %1274 = vmatpush1.bf16.msra.mxu0 0
      %1275 = vmatprep.subr.bf16.mxu0 0
      %1276 = vmatpush1.bf16.msra.mxu0 0
      %1277 = vmatprep.mubr.bf16.mxu0 0
      %1278 = vmatmul.mubr.bf16.gmra.mrb[0].mxu0 %v1190
      %v1279 = vpop.f32.mrb[0].mxu0
      %v1280 = vadd.f32 %v1195, %v1279
      %v1281 = vpop.f32.mrb[0].mxu0
      %v1282 = vpop.f32.mrb[0].mxu0
      %v1283 = vpop.f32.mrb[0].mxu0
      %1284 = vdwg.mxu0
      %v1285 = vmul.f32 %v1280, 0.5
      %v1286 = vadd.f32 %v1067, %v1285
      %v1287 = vld [vmem:[%s15] sm:$0x1]
      %v1288 = vld [vmem:[%s17] sm:$0x1]
      %v1289 = vsel %vm1092, %v1286, 0.0
      %1290 = vadd.xlane.f32.xlu0 %v1289
      %v1291 = vpop.xlane.xlu0 %1290
      %v1292 = vmul.f32 %v1291, %v1096
      %v1293 = vsub.f32 %v1286, %v1292
      %v1294 = vmul.f32 %v1293, %v1293
      %v1295 = vsel %vm1092, %v1294, 0.0
      %1296 = vadd.xlane.f32.xlu0 %v1295
      %v1297 = vpop.xlane.xlu0 %1296
      %v1298 = vmul.f32 %v1297, %v1096
      %v1299 = vadd.f32 %v1298, 1e-05
      %v1300 = vrsqrt.pop %v1299
      %v1301 = vmul.f32 %v1293, %v1300
      %v1303 = vlaneseq
      %v1304 = vshrl.u32 %v1303, 7
      %v1305 = vsub.s32 0, %v1304
      %v1306 = vrot.slane %v1287, %v1305
      %v1308 = vmul.f32 %v1301, %v1306
      %v1310 = vlaneseq
      %v1311 = vshrl.u32 %v1310, 7
      %v1312 = vsub.s32 0, %v1311
      %v1313 = vrot.slane %v1288, %v1312
      %v1315 = vadd.f32 %v1308, %v1313
      %v1316 = vpack.c.bf16 %v1315, %v1315
      %v1317 = vld [vmem:[%s19] sm:$0xf]
      %v1318 = vld [vmem:[%s19 + $0x4] sm:$0xf]
      %v1319 = vld [vmem:[%s19 + $0x8] sm:$0xf]
      %v1320 = vld [vmem:[%s19 + $0xc] sm:$0xf]
      %v1325 = vunpack.c.l.b16 %v1317
      %v1326 = vunpack.c.l.b16 %v1318
      %v1327 = vunpack.c.l.b16 %v1319
      %v1328 = vunpack.c.l.b16 %v1320
      %v1329 = vpack.c.b16 %v1326, %v1325
      %v1330 = vpack.c.b16 %v1328, %v1327
      %v1334 = vsel %vm1092, %v1316, 0
      %1336 = vmatprep.subr.bf16.mxu0 0
      %1337 = vmatpush1.bf16.msra.mxu0 %v1329
      %1338 = vmatprep.subr.bf16.mxu0 0
      %1339 = vmatpush1.bf16.msra.mxu0 %v1330
      %1340 = vmatprep.subr.bf16.mxu0 0
      %1341 = vmatpush1.bf16.msra.mxu0 0
      %1342 = vmatprep.subr.bf16.mxu0 0
      %1343 = vmatpush1.bf16.msra.mxu0 0
      %1344 = vmatprep.subr.bf16.mxu0 0
      %1345 = vmatpush1.bf16.msra.mxu0 0
      %1346 = vmatprep.subr.bf16.mxu0 0
      %1347 = vmatpush1.bf16.msra.mxu0 0
      %1348 = vmatprep.subr.bf16.mxu0 0
      %1349 = vmatpush1.bf16.msra.mxu0 0
      %1350 = vmatprep.subr.bf16.mxu0 0
      %1351 = vmatpush1.bf16.msra.mxu0 0
      %1352 = vmatprep.subr.bf16.mxu0 0
      %1353 = vmatpush1.bf16.msra.mxu0 0
      %1354 = vmatprep.subr.bf16.mxu0 0
      %1355 = vmatpush1.bf16.msra.mxu0 0
      %1356 = vmatprep.subr.bf16.mxu0 0
      %1357 = vmatpush1.bf16.msra.mxu0 0
      %1358 = vmatprep.subr.bf16.mxu0 0
      %1359 = vmatpush1.bf16.msra.mxu0 0
      %1360 = vmatprep.subr.bf16.mxu0 0
      %1361 = vmatpush1.bf16.msra.mxu0 0
      %1362 = vmatprep.subr.bf16.mxu0 0
      %1363 = vmatpush1.bf16.msra.mxu0 0
      %1364 = vmatprep.subr.bf16.mxu0 0
      %1365 = vmatpush1.bf16.msra.mxu0 0
      %1366 = vmatprep.subr.bf16.mxu0 0
      %1367 = vmatpush1.bf16.msra.mxu0 0
      %1368 = vmatprep.mubr.bf16.mxu0 0
      %1369 = vmatmul.mubr.bf16.gmra.mrb[0].mxu0 %v1334
      %v1370 = vpop.f32.mrb[0].mxu0
      %v1371 = vadd.f32 0.0, %v1370
      %v1372 = vpop.f32.mrb[0].mxu0
      %v1373 = vpop.f32.mrb[0].mxu0
      %v1374 = vpop.f32.mrb[0].mxu0
      %1375 = vdwg.mxu0
      %v1376 = vld [vmem:[%s21] sm:$0xf]
      %v1377 = vld [vmem:[%s21 + $0x4] sm:$0xf]
      %v1378 = vld [vmem:[%s21 + $0x8] sm:$0xf]
      %v1379 = vld [vmem:[%s21 + $0xc] sm:$0xf]
      %v1384 = vunpack.c.l.b16 %v1376
      %v1385 = vunpack.c.l.b16 %v1377
      %v1386 = vunpack.c.l.b16 %v1378
      %v1387 = vunpack.c.l.b16 %v1379
      %v1388 = vpack.c.b16 %v1385, %v1384
      %v1389 = vpack.c.b16 %v1387, %v1386
      %1392 = vmatprep.subr.bf16.mxu0 0
      %1393 = vmatpush1.bf16.msra.mxu0 %v1388
      %1394 = vmatprep.subr.bf16.mxu0 0
      %1395 = vmatpush1.bf16.msra.mxu0 %v1389
      %1396 = vmatprep.subr.bf16.mxu0 0
      %1397 = vmatpush1.bf16.msra.mxu0 0
      %1398 = vmatprep.subr.bf16.mxu0 0
      %1399 = vmatpush1.bf16.msra.mxu0 0
      %1400 = vmatprep.subr.bf16.mxu0 0
      %1401 = vmatpush1.bf16.msra.mxu0 0
      %1402 = vmatprep.subr.bf16.mxu0 0
      %1403 = vmatpush1.bf16.msra.mxu0 0
      %1404 = vmatprep.subr.bf16.mxu0 0
      %1405 = vmatpush1.bf16.msra.mxu0 0
      %1406 = vmatprep.subr.bf16.mxu0 0
      %1407 = vmatpush1.bf16.msra.mxu0 0
      %1408 = vmatprep.subr.bf16.mxu0 0
      %1409 = vmatpush1.bf16.msra.mxu0 0
      %1410 = vmatprep.subr.bf16.mxu0 0
      %1411 = vmatpush1.bf16.msra.mxu0 0
      %1412 = vmatprep.subr.bf16.mxu0 0
      %1413 = vmatpush1.bf16.msra.mxu0 0
      %1414 = vmatprep.subr.bf16.mxu0 0
      %1415 = vmatpush1.bf16.msra.mxu0 0
      %1416 = vmatprep.subr.bf16.mxu0 0
      %1417 = vmatpush1.bf16.msra.mxu0 0
      %1418 = vmatprep.subr.bf16.mxu0 0
      %1419 = vmatpush1.bf16.msra.mxu0 0
      %1420 = vmatprep.subr.bf16.mxu0 0
      %1421 = vmatpush1.bf16.msra.mxu0 0
      %1422 = vmatprep.subr.bf16.mxu0 0
      %1423 = vmatpush1.bf16.msra.mxu0 0
      %1424 = vmatprep.mubr.bf16.mxu0 0
      %1425 = vmatmul.mubr.bf16.gmra.mrb[0].mxu0 %v1334
      %v1426 = vpop.f32.mrb[0].mxu0
      %v1427 = vadd.f32 0.0, %v1426
      %v1428 = vpop.f32.mrb[0].mxu0
      %v1429 = vpop.f32.mrb[0].mxu0
      %v1430 = vpop.f32.mrb[0].mxu0
      %1431 = vdwg.mxu0
      %v1432 = vld [vmem:[%s23] sm:$0xf]
      %v1433 = vld [vmem:[%s23 + $0x4] sm:$0xf]
      %v1434 = vld [vmem:[%s23 + $0x8] sm:$0xf]
      %v1435 = vld [vmem:[%s23 + $0xc] sm:$0xf]
      %v1440 = vunpack.c.l.b16 %v1432
      %v1441 = vunpack.c.l.b16 %v1433
      %v1442 = vunpack.c.l.b16 %v1434
      %v1443 = vunpack.c.l.b16 %v1435
      %v1444 = vpack.c.b16 %v1441, %v1440
      %v1445 = vpack.c.b16 %v1443, %v1442
      %1448 = vmatprep.subr.bf16.mxu0 0
      %1449 = vmatpush1.bf16.msra.mxu0 %v1444
      %1450 = vmatprep.subr.bf16.mxu0 0
      %1451 = vmatpush1.bf16.msra.mxu0 %v1445
      %1452 = vmatprep.subr.bf16.mxu0 0
      %1453 = vmatpush1.bf16.msra.mxu0 0
      %1454 = vmatprep.subr.bf16.mxu0 0
      %1455 = vmatpush1.bf16.msra.mxu0 0
      %1456 = vmatprep.subr.bf16.mxu0 0
      %1457 = vmatpush1.bf16.msra.mxu0 0
      %1458 = vmatprep.subr.bf16.mxu0 0
      %1459 = vmatpush1.bf16.msra.mxu0 0
      %1460 = vmatprep.subr.bf16.mxu0 0
      %1461 = vmatpush1.bf16.msra.mxu0 0
      %1462 = vmatprep.subr.bf16.mxu0 0
      %1463 = vmatpush1.bf16.msra.mxu0 0
      %1464 = vmatprep.subr.bf16.mxu0 0
      %1465 = vmatpush1.bf16.msra.mxu0 0
      %1466 = vmatprep.subr.bf16.mxu0 0
      %1467 = vmatpush1.bf16.msra.mxu0 0
      %1468 = vmatprep.subr.bf16.mxu0 0
      %1469 = vmatpush1.bf16.msra.mxu0 0
      %1470 = vmatprep.subr.bf16.mxu0 0
      %1471 = vmatpush1.bf16.msra.mxu0 0
      %1472 = vmatprep.subr.bf16.mxu0 0
      %1473 = vmatpush1.bf16.msra.mxu0 0
      %1474 = vmatprep.subr.bf16.mxu0 0
      %1475 = vmatpush1.bf16.msra.mxu0 0
      %1476 = vmatprep.subr.bf16.mxu0 0
      %1477 = vmatpush1.bf16.msra.mxu0 0
      %1478 = vmatprep.subr.bf16.mxu0 0
      %1479 = vmatpush1.bf16.msra.mxu0 0
      %1480 = vmatprep.mubr.bf16.mxu0 0
      %1481 = vmatmul.mubr.bf16.gmra.mrb[0].mxu0 %v1334
      %v1482 = vpop.f32.mrb[0].mxu0
      %v1483 = vadd.f32 0.0, %v1482
      %v1484 = vpop.f32.mrb[0].mxu0
      %v1485 = vpop.f32.mrb[0].mxu0
      %v1486 = vpop.f32.mrb[0].mxu0
      %1487 = vdwg.mxu0
      %v1488 = vld [vmem:[%s29] sm:$0xff]
      %v1489 = vld [vmem:[%s29 + $0x8] sm:$0xff]
      %v1490 = vld [vmem:[%s29 + $0x10] sm:$0xff]
      %v1491 = vld [vmem:[%s29 + $0x18] sm:$0xff]
      %v1492 = vld [vmem:[%s29 + $0x20] sm:$0xff]
      %v1493 = vld [vmem:[%s29 + $0x28] sm:$0xff]
      %v1494 = vld [vmem:[%s29 + $0x30] sm:$0xff]
      %v1495 = vld [vmem:[%s29 + $0x38] sm:$0xff]
      %v1496 = vpack.c.bf16 %v1371, %v1371
      %v1497 = vpack.c.bf16 %v1427, %v1427
      %vm1498 = vcmask 64512
      %v1500 = vsel %vm1498, %v1496, 0
      %v1503 = vsel %vm1498, %v1497, 0
      %1505 = vmatprep.subr.bf16.mxu0 0
      %1506 = vmatpush1.bf16.xpose.msra.mxu0 %v1503
      %1507 = vmatprep.subr.bf16.mxu0 0
      %1508 = vmatpush1.bf16.xpose.msra.mxu0 0
      %1509 = vmatprep.subr.bf16.mxu0 0
      %1510 = vmatpush1.bf16.xpose.msra.mxu0 0
      %1511 = vmatprep.subr.bf16.mxu0 0
      %1512 = vmatpush1.bf16.xpose.msra.mxu0 0
      %1513 = vmatprep.subr.bf16.mxu0 0
      %1514 = vmatpush1.bf16.xpose.msra.mxu0 0
      %1515 = vmatprep.subr.bf16.mxu0 0
      %1516 = vmatpush1.bf16.xpose.msra.mxu0 0
      %1517 = vmatprep.subr.bf16.mxu0 0
      %1518 = vmatpush1.bf16.xpose.msra.mxu0 0
      %1519 = vmatprep.subr.bf16.mxu0 0
      %1520 = vmatpush1.bf16.xpose.msra.mxu0 0
      %1521 = vmatprep.subr.bf16.mxu0 0
      %1522 = vmatpush1.bf16.xpose.msra.mxu0 0
      %1523 = vmatprep.subr.bf16.mxu0 0
      %1524 = vmatpush1.bf16.xpose.msra.mxu0 0
      %1525 = vmatprep.subr.bf16.mxu0 0
      %1526 = vmatpush1.bf16.xpose.msra.mxu0 0
      %1527 = vmatprep.subr.bf16.mxu0 0
      %1528 = vmatpush1.bf16.xpose.msra.mxu0 0
      %1529 = vmatprep.subr.bf16.mxu0 0
      %1530 = vmatpush1.bf16.xpose.msra.mxu0 0
      %1531 = vmatprep.subr.bf16.mxu0 0
      %1532 = vmatpush1.bf16.xpose.msra.mxu0 0
      %1533 = vmatprep.subr.bf16.mxu0 0
      %1534 = vmatpush1.bf16.xpose.msra.mxu0 0
      %1535 = vmatprep.subr.bf16.mxu0 0
      %1536 = vmatpush1.bf16.xpose.msra.mxu0 0
      %1537 = vmatprep.mubr.bf16.mxu0 0
      %1538 = vmatmul.mubr.bf16.gmra.mrb[0].mxu0 %v1500
      %v1539 = vpop.f32.mrb[0].mxu0
      %v1540 = vadd.f32 0.0, %v1539
      %v1541 = vpop.f32.mrb[0].mxu0
      %v1542 = vpop.f32.mrb[0].mxu0
      %v1543 = vpop.f32.mrb[0].mxu0
      %1544 = vdwg.mxu0
      %v1545 = vmul.f32 %v1540, 0.35355338
      %v1547 = vcombine.high %v1371, %v1371
      %v1549 = vunpack.c.l.s4 1966171168
      %v1550 = vunpack.c.0.s8 %v1549
      %v1551 = vlaneseq
      %v1552 = vshrl.u32 %v1551, 7
      %v1553 = vsub.s32 %v1550, %v1552
      %v1554 = vrot.slane %v1371, %v1553
      %v1556 = vunpack.c.l.s4 1966171168
      %v1557 = vunpack.c.0.s8 %v1556
      %v1558 = vlaneseq
      %v1559 = vshrl.u32 %v1558, 7
      %v1560 = vsub.s32 %v1557, %v1559
      %v1561 = vrot.slane %v1547, %v1560
      %v1562 = vcombine.high %v1554, %v1554
      %v1563 = vcombine.high %v1561, %v1561
      %v1565 = vunpack.c.l.s4 1966171168
      %v1566 = vunpack.c.0.s8 %v1565
      %v1567 = vlaneseq
      %v1568 = vshrl.u32 %v1567, 7
      %v1569 = vsub.s32 %v1566, %v1568
      %v1570 = vrot.slane %v1554, %v1569
      %v1572 = vunpack.c.l.s4 1966171168
      %v1573 = vunpack.c.0.s8 %v1572
      %v1574 = vlaneseq
      %v1575 = vshrl.u32 %v1574, 7
      %v1576 = vsub.s32 %v1573, %v1575
      %v1577 = vrot.slane %v1561, %v1576
      %v1579 = vunpack.c.l.s4 1966171168
      %v1580 = vunpack.c.0.s8 %v1579
      %v1581 = vlaneseq
      %v1582 = vshrl.u32 %v1581, 7
      %v1583 = vsub.s32 %v1580, %v1582
      %v1584 = vrot.slane %v1562, %v1583
      %v1586 = vunpack.c.l.s4 1966171168
      %v1587 = vunpack.c.0.s8 %v1586
      %v1588 = vlaneseq
      %v1589 = vshrl.u32 %v1588, 7
      %v1590 = vsub.s32 %v1587, %v1589
      %v1591 = vrot.slane %v1563, %v1590
      %v1592 = vcombine.high %v1570, %v1570
      %v1593 = vcombine.high %v1577, %v1577
      %v1594 = vcombine.high %v1584, %v1584
      %v1595 = vcombine.high %v1591, %v1591
      %v1596 = vlaneseq
      %v1597 = vshrl.u32 %v1596, 7
      %v1598 = vsub.s32 0, %v1597
      %v1599 = vrot.slane %v1570, %v1598
      %v1600 = vlaneseq
      %v1601 = vshrl.u32 %v1600, 7
      %v1602 = vsub.s32 0, %v1601
      %v1603 = vrot.slane %v1584, %v1602
      %v1604 = vlaneseq
      %v1605 = vshrl.u32 %v1604, 7
      %v1606 = vsub.s32 0, %v1605
      %v1607 = vrot.slane %v1592, %v1606
      %v1608 = vlaneseq
      %v1609 = vshrl.u32 %v1608, 7
      %v1610 = vsub.s32 0, %v1609
      %v1611 = vrot.slane %v1594, %v1610
      %v1612 = vlaneseq
      %v1613 = vshrl.u32 %v1612, 7
      %v1614 = vsub.s32 0, %v1613
      %v1615 = vrot.slane %v1577, %v1614
      %v1616 = vlaneseq
      %v1617 = vshrl.u32 %v1616, 7
      %v1618 = vsub.s32 0, %v1617
      %v1619 = vrot.slane %v1591, %v1618
      %v1620 = vlaneseq
      %v1621 = vshrl.u32 %v1620, 7
      %v1622 = vsub.s32 0, %v1621
      %v1623 = vrot.slane %v1593, %v1622
      %v1624 = vlaneseq
      %v1625 = vshrl.u32 %v1624, 7
      %v1626 = vsub.s32 0, %v1625
      %v1627 = vrot.slane %v1595, %v1626
      %v1636 = vmul.f32 %v1599, %v1488
      %v1637 = vmul.f32 %v1603, %v1489
      %v1638 = vmul.f32 %v1607, %v1490
      %v1639 = vmul.f32 %v1611, %v1491
      %v1640 = vmul.f32 %v1615, %v1492
      %v1641 = vmul.f32 %v1619, %v1493
      %v1642 = vmul.f32 %v1623, %v1494
      %v1643 = vmul.f32 %v1627, %v1495
      %v1644 = vsel %vm1498, %v1636, 0.0
      %1645 = vadd.xlane.f32.xlu0 %v1644
      %v1646 = vpop.xlane.xlu0 %1645
      %v1647 = vsel %vm1498, %v1637, 0.0
      %1648 = vadd.xlane.f32.xlu0 %v1647
      %v1649 = vpop.xlane.xlu0 %1648
      %v1650 = vsel %vm1498, %v1638, 0.0
      %1651 = vadd.xlane.f32.xlu0 %v1650
      %v1652 = vpop.xlane.xlu0 %1651
      %v1653 = vsel %vm1498, %v1639, 0.0
      %1654 = vadd.xlane.f32.xlu0 %v1653
      %v1655 = vpop.xlane.xlu0 %1654
      %v1656 = vsel %vm1498, %v1640, 0.0
      %1657 = vadd.xlane.f32.xlu0 %v1656
      %v1658 = vpop.xlane.xlu0 %1657
      %v1659 = vsel %vm1498, %v1641, 0.0
      %1660 = vadd.xlane.f32.xlu0 %v1659
      %v1661 = vpop.xlane.xlu0 %1660
      %v1662 = vsel %vm1498, %v1642, 0.0
      %1663 = vadd.xlane.f32.xlu0 %v1662
      %v1664 = vpop.xlane.xlu0 %1663
      %v1665 = vsel %vm1498, %v1643, 0.0
      %1666 = vadd.xlane.f32.xlu0 %v1665
      %v1667 = vpop.xlane.xlu0 %1666
      %v1668 = vmul.f32 %v1646, 0.35355338
      %v1669 = vmul.f32 %v1649, 0.35355338
      %v1670 = vmul.f32 %v1652, 0.35355338
      %v1671 = vmul.f32 %v1655, 0.35355338
      %v1672 = vmul.f32 %v1658, 0.35355338
      %v1673 = vmul.f32 %v1661, 0.35355338
      %v1674 = vmul.f32 %v1664, 0.35355338
      %v1675 = vmul.f32 %v1667, 0.35355338
      %v1684 = vlaneseq
      %v1685 = vand.u32 %v1684, 127
      %v1686 = vlaneseq
      %v1687 = vshrl.u32 %v1686, 7
      %v1688 = vsub.s32 %v1685, %v1687
      %v1689 = vrot.slane %v1668, %v1688
      %v1690 = vlaneseq
      %v1691 = vshrl.u32 %v1690, 7
      %v1692 = vsub.s32 %v1685, %v1691
      %v1693 = vrot.slane %v1669, %v1692
      %v1694 = vlaneseq
      %v1695 = vshrl.u32 %v1694, 7
      %v1696 = vsub.s32 %v1685, %v1695
      %v1697 = vrot.slane %v1670, %v1696
      %v1698 = vlaneseq
      %v1699 = vshrl.u32 %v1698, 7
      %v1700 = vsub.s32 %v1685, %v1699
      %v1701 = vrot.slane %v1671, %v1700
      %v1702 = vlaneseq
      %v1703 = vshrl.u32 %v1702, 7
      %v1704 = vsub.s32 %v1685, %v1703
      %v1705 = vrot.slane %v1672, %v1704
      %v1706 = vlaneseq
      %v1707 = vshrl.u32 %v1706, 7
      %v1708 = vsub.s32 %v1685, %v1707
      %v1709 = vrot.slane %v1673, %v1708
      %v1710 = vlaneseq
      %v1711 = vshrl.u32 %v1710, 7
      %v1712 = vsub.s32 %v1685, %v1711
      %v1713 = vrot.slane %v1674, %v1712
      %v1714 = vlaneseq
      %v1715 = vshrl.u32 %v1714, 7
      %v1716 = vsub.s32 %v1685, %v1715
      %v1717 = vrot.slane %v1675, %v1716
      %vm1718 = vcmask 1041409
      %v1719 = vsel %vm1718, %v1693, %v1689
      %vm1720 = vcmask 1042434
      %v1721 = vsel %vm1720, %v1697, %v1719
      %vm1722 = vcmask 1043459
      %v1723 = vsel %vm1722, %v1701, %v1721
      %vm1724 = vcmask 1044484
      %v1725 = vsel %vm1724, %v1705, %v1723
      %vm1726 = vcmask 1045509
      %v1727 = vsel %vm1726, %v1709, %v1725
      %vm1728 = vcmask 1046534
      %v1729 = vsel %vm1728, %v1713, %v1727
      %vm1730 = vcmask 1047559
      %v1731 = vsel %vm1730, %v1717, %v1729
      %v1733 = vadd.f32 %v1545, %v1731
      %v1734 = vsel %vm1498, %v1733, -inf
      %1735 = vmax.xlane.f32.xlu0 %v1734
      %v1736 = vpop.xlane.xlu0 %1735
      %v1737 = vsub.f32 %v1733, %v1736
      %v1738 = vmul.f32 %v1737, 1.442695
      %v1739 = vpow.pop %v1738
      %v1740 = vsel %vm1498, %v1739, 0.0
      %1741 = vadd.xlane.f32.xlu0 %v1740
      %v1742 = vpop.xlane.xlu0 %1741
      %v1743 = vrcp.pop %v1742
      %v1744 = vmul.f32 %v1739, %v1743
      %v1745 = vpack.c.bf16 %v1744, %v1744
      %v1746 = vpack.c.bf16 %v1483, %v1483
      %v1748 = vsel %vm1498, %v1745, 0
      %vm1750 = vcmask 1043456
      %v1752 = vsel %vm1750, %v1746, 0
      %1754 = vmatprep.subr.bf16.mxu0 0
      %1755 = vmatpush1.bf16.msra.mxu0 %v1752
      %1756 = vmatprep.subr.bf16.mxu0 0
      %1757 = vmatpush1.bf16.msra.mxu0 0
      %1758 = vmatprep.subr.bf16.mxu0 0
      %1759 = vmatpush1.bf16.msra.mxu0 0
      %1760 = vmatprep.subr.bf16.mxu0 0
      %1761 = vmatpush1.bf16.msra.mxu0 0
      %1762 = vmatprep.subr.bf16.mxu0 0
      %1763 = vmatpush1.bf16.msra.mxu0 0
      %1764 = vmatprep.subr.bf16.mxu0 0
      %1765 = vmatpush1.bf16.msra.mxu0 0
      %1766 = vmatprep.subr.bf16.mxu0 0
      %1767 = vmatpush1.bf16.msra.mxu0 0
      %1768 = vmatprep.subr.bf16.mxu0 0
      %1769 = vmatpush1.bf16.msra.mxu0 0
      %1770 = vmatprep.subr.bf16.mxu0 0
      %1771 = vmatpush1.bf16.msra.mxu0 0
      %1772 = vmatprep.subr.bf16.mxu0 0
      %1773 = vmatpush1.bf16.msra.mxu0 0
      %1774 = vmatprep.subr.bf16.mxu0 0
      %1775 = vmatpush1.bf16.msra.mxu0 0
      %1776 = vmatprep.subr.bf16.mxu0 0
      %1777 = vmatpush1.bf16.msra.mxu0 0
      %1778 = vmatprep.subr.bf16.mxu0 0
      %1779 = vmatpush1.bf16.msra.mxu0 0
      %1780 = vmatprep.subr.bf16.mxu0 0
      %1781 = vmatpush1.bf16.msra.mxu0 0
      %1782 = vmatprep.subr.bf16.mxu0 0
      %1783 = vmatpush1.bf16.msra.mxu0 0
      %1784 = vmatprep.subr.bf16.mxu0 0
      %1785 = vmatpush1.bf16.msra.mxu0 0
      %1786 = vmatprep.mubr.bf16.mxu0 0
      %1787 = vmatmul.mubr.bf16.gmra.mrb[0].mxu0 %v1748
      %v1788 = vpop.f32.mrb[0].mxu0
      %v1789 = vadd.f32 0.0, %v1788
      %v1790 = vpop.f32.mrb[0].mxu0
      %v1791 = vpop.f32.mrb[0].mxu0
      %v1792 = vpop.f32.mrb[0].mxu0
      %1793 = vdwg.mxu0
      %1795 = vrot.lane.b32.xlu0 %v1496, 120
      %v1796 = vpop.permute.xlu0 %1795
      %1798 = vrot.lane.b32.xlu0 %v1497, 120
      %v1799 = vpop.permute.xlu0 %1798
      %v1801 = vsel %vm1498, %v1796, 0
      %v1804 = vsel %vm1498, %v1799, 0
      %1806 = vmatprep.subr.bf16.mxu0 0
      %1807 = vmatpush1.bf16.xpose.msra.mxu0 %v1804
      %1808 = vmatprep.subr.bf16.mxu0 0
      %1809 = vmatpush1.bf16.xpose.msra.mxu0 0
      %1810 = vmatprep.subr.bf16.mxu0 0
      %1811 = vmatpush1.bf16.xpose.msra.mxu0 0
      %1812 = vmatprep.subr.bf16.mxu0 0
      %1813 = vmatpush1.bf16.xpose.msra.mxu0 0
      %1814 = vmatprep.subr.bf16.mxu0 0
      %1815 = vmatpush1.bf16.xpose.msra.mxu0 0
      %1816 = vmatprep.subr.bf16.mxu0 0
      %1817 = vmatpush1.bf16.xpose.msra.mxu0 0
      %1818 = vmatprep.subr.bf16.mxu0 0
      %1819 = vmatpush1.bf16.xpose.msra.mxu0 0
      %1820 = vmatprep.subr.bf16.mxu0 0
      %1821 = vmatpush1.bf16.xpose.msra.mxu0 0
      %1822 = vmatprep.subr.bf16.mxu0 0
      %1823 = vmatpush1.bf16.xpose.msra.mxu0 0
      %1824 = vmatprep.subr.bf16.mxu0 0
      %1825 = vmatpush1.bf16.xpose.msra.mxu0 0
      %1826 = vmatprep.subr.bf16.mxu0 0
      %1827 = vmatpush1.bf16.xpose.msra.mxu0 0
      %1828 = vmatprep.subr.bf16.mxu0 0
      %1829 = vmatpush1.bf16.xpose.msra.mxu0 0
      %1830 = vmatprep.subr.bf16.mxu0 0
      %1831 = vmatpush1.bf16.xpose.msra.mxu0 0
      %1832 = vmatprep.subr.bf16.mxu0 0
      %1833 = vmatpush1.bf16.xpose.msra.mxu0 0
      %1834 = vmatprep.subr.bf16.mxu0 0
      %1835 = vmatpush1.bf16.xpose.msra.mxu0 0
      %1836 = vmatprep.subr.bf16.mxu0 0
      %1837 = vmatpush1.bf16.xpose.msra.mxu0 0
      %1838 = vmatprep.mubr.bf16.mxu0 0
      %1839 = vmatmul.mubr.bf16.gmra.mrb[0].mxu0 %v1801
      %v1840 = vpop.f32.mrb[0].mxu0
      %v1841 = vadd.f32 0.0, %v1840
      %v1842 = vpop.f32.mrb[0].mxu0
      %v1843 = vpop.f32.mrb[0].mxu0
      %v1844 = vpop.f32.mrb[0].mxu0
      %1845 = vdwg.mxu0
      %v1846 = vmul.f32 %v1841, 0.35355338
      %1855 = vrot.lane.b32.xlu0 %v1488, 8
      %v1856 = vpop.permute.xlu0 %1855
      %1857 = vrot.lane.b32.xlu0 %v1489, 8
      %v1858 = vpop.permute.xlu0 %1857
      %1859 = vrot.lane.b32.xlu0 %v1490, 8
      %v1860 = vpop.permute.xlu0 %1859
      %1861 = vrot.lane.b32.xlu0 %v1491, 8
      %v1862 = vpop.permute.xlu0 %1861
      %1863 = vrot.lane.b32.xlu0 %v1492, 8
      %v1864 = vpop.permute.xlu0 %1863
      %1865 = vrot.lane.b32.xlu0 %v1493, 8
      %v1866 = vpop.permute.xlu0 %1865
      %1867 = vrot.lane.b32.xlu0 %v1494, 8
      %v1868 = vpop.permute.xlu0 %1867
      %1869 = vrot.lane.b32.xlu0 %v1495, 8
      %v1870 = vpop.permute.xlu0 %1869
      %v1879 = vmul.f32 %v1599, %v1856
      %v1880 = vmul.f32 %v1603, %v1858
      %v1881 = vmul.f32 %v1607, %v1860
      %v1882 = vmul.f32 %v1611, %v1862
      %v1883 = vmul.f32 %v1615, %v1864
      %v1884 = vmul.f32 %v1619, %v1866
      %v1885 = vmul.f32 %v1623, %v1868
      %v1886 = vmul.f32 %v1627, %v1870
      %1895 = vrot.lane.b32.xlu0 %v1879, 120
      %v1896 = vpop.permute.xlu0 %1895
      %1897 = vrot.lane.b32.xlu0 %v1880, 120
      %v1898 = vpop.permute.xlu0 %1897
      %1899 = vrot.lane.b32.xlu0 %v1881, 120
      %v1900 = vpop.permute.xlu0 %1899
      %1901 = vrot.lane.b32.xlu0 %v1882, 120
      %v1902 = vpop.permute.xlu0 %1901
      %1903 = vrot.lane.b32.xlu0 %v1883, 120
      %v1904 = vpop.permute.xlu0 %1903
      %1905 = vrot.lane.b32.xlu0 %v1884, 120
      %v1906 = vpop.permute.xlu0 %1905
      %1907 = vrot.lane.b32.xlu0 %v1885, 120
      %v1908 = vpop.permute.xlu0 %1907
      %1909 = vrot.lane.b32.xlu0 %v1886, 120
      %v1910 = vpop.permute.xlu0 %1909
      %v1919 = vsel %vm1498, %v1896, 0.0
      %1920 = vadd.xlane.f32.xlu0 %v1919
      %v1921 = vpop.xlane.xlu0 %1920
      %v1922 = vsel %vm1498, %v1898, 0.0
      %1923 = vadd.xlane.f32.xlu0 %v1922
      %v1924 = vpop.xlane.xlu0 %1923
      %v1925 = vsel %vm1498, %v1900, 0.0
      %1926 = vadd.xlane.f32.xlu0 %v1925
      %v1927 = vpop.xlane.xlu0 %1926
      %v1928 = vsel %vm1498, %v1902, 0.0
      %1929 = vadd.xlane.f32.xlu0 %v1928
      %v1930 = vpop.xlane.xlu0 %1929
      %v1931 = vsel %vm1498, %v1904, 0.0
      %1932 = vadd.xlane.f32.xlu0 %v1931
      %v1933 = vpop.xlane.xlu0 %1932
      %v1934 = vsel %vm1498, %v1906, 0.0
      %1935 = vadd.xlane.f32.xlu0 %v1934
      %v1936 = vpop.xlane.xlu0 %1935
      %v1937 = vsel %vm1498, %v1908, 0.0
      %1938 = vadd.xlane.f32.xlu0 %v1937
      %v1939 = vpop.xlane.xlu0 %1938
      %v1940 = vsel %vm1498, %v1910, 0.0
      %1941 = vadd.xlane.f32.xlu0 %v1940
      %v1942 = vpop.xlane.xlu0 %1941
      %v1943 = vmul.f32 %v1921, 0.35355338
      %v1944 = vmul.f32 %v1924, 0.35355338
      %v1945 = vmul.f32 %v1927, 0.35355338
      %v1946 = vmul.f32 %v1930, 0.35355338
      %v1947 = vmul.f32 %v1933, 0.35355338
      %v1948 = vmul.f32 %v1936, 0.35355338
      %v1949 = vmul.f32 %v1939, 0.35355338
      %v1950 = vmul.f32 %v1942, 0.35355338
      %v1959 = vlaneseq
      %v1960 = vshrl.u32 %v1959, 7
      %v1961 = vsub.s32 %v1685, %v1960
      %v1962 = vrot.slane %v1943, %v1961
      %v1963 = vlaneseq
      %v1964 = vshrl.u32 %v1963, 7
      %v1965 = vsub.s32 %v1685, %v1964
      %v1966 = vrot.slane %v1944, %v1965
      %v1967 = vlaneseq
      %v1968 = vshrl.u32 %v1967, 7
      %v1969 = vsub.s32 %v1685, %v1968
      %v1970 = vrot.slane %v1945, %v1969
      %v1971 = vlaneseq
      %v1972 = vshrl.u32 %v1971, 7
      %v1973 = vsub.s32 %v1685, %v1972
      %v1974 = vrot.slane %v1946, %v1973
      %v1975 = vlaneseq
      %v1976 = vshrl.u32 %v1975, 7
      %v1977 = vsub.s32 %v1685, %v1976
      %v1978 = vrot.slane %v1947, %v1977
      %v1979 = vlaneseq
      %v1980 = vshrl.u32 %v1979, 7
      %v1981 = vsub.s32 %v1685, %v1980
      %v1982 = vrot.slane %v1948, %v1981
      %v1983 = vlaneseq
      %v1984 = vshrl.u32 %v1983, 7
      %v1985 = vsub.s32 %v1685, %v1984
      %v1986 = vrot.slane %v1949, %v1985
      %v1987 = vlaneseq
      %v1988 = vshrl.u32 %v1987, 7
      %v1989 = vsub.s32 %v1685, %v1988
      %v1990 = vrot.slane %v1950, %v1989
      %v1991 = vsel %vm1718, %v1966, %v1962
      %v1992 = vsel %vm1720, %v1970, %v1991
      %v1993 = vsel %vm1722, %v1974, %v1992
      %v1994 = vsel %vm1724, %v1978, %v1993
      %v1995 = vsel %vm1726, %v1982, %v1994
      %v1996 = vsel %vm1728, %v1986, %v1995
      %v1997 = vsel %vm1730, %v1990, %v1996
      %v1999 = vadd.f32 %v1846, %v1997
      %v2000 = vsel %vm1498, %v1999, -inf
      %2001 = vmax.xlane.f32.xlu0 %v2000
      %v2002 = vpop.xlane.xlu0 %2001
      %v2003 = vsub.f32 %v1999, %v2002
      %v2004 = vmul.f32 %v2003, 1.442695
      %v2005 = vpow.pop %v2004
      %v2006 = vsel %vm1498, %v2005, 0.0
      %2007 = vadd.xlane.f32.xlu0 %v2006
      %v2008 = vpop.xlane.xlu0 %2007
      %v2009 = vrcp.pop %v2008
      %v2010 = vmul.f32 %v2005, %v2009
      %v2011 = vpack.c.bf16 %v2010, %v2010
      %2013 = vrot.lane.b32.xlu0 %v1746, 120
      %v2014 = vpop.permute.xlu0 %2013
      %v2016 = vsel %vm1498, %v2011, 0
      %v2019 = vsel %vm1750, %v2014, 0
      %2021 = vmatprep.subr.bf16.mxu0 0
      %2022 = vmatpush1.bf16.msra.mxu0 %v2019
      %2023 = vmatprep.subr.bf16.mxu0 0
      %2024 = vmatpush1.bf16.msra.mxu0 0
      %2025 = vmatprep.subr.bf16.mxu0 0
      %2026 = vmatpush1.bf16.msra.mxu0 0
      %2027 = vmatprep.subr.bf16.mxu0 0
      %2028 = vmatpush1.bf16.msra.mxu0 0
      %2029 = vmatprep.subr.bf16.mxu0 0
      %2030 = vmatpush1.bf16.msra.mxu0 0
      %2031 = vmatprep.subr.bf16.mxu0 0
      %2032 = vmatpush1.bf16.msra.mxu0 0
      %2033 = vmatprep.subr.bf16.mxu0 0
      %2034 = vmatpush1.bf16.msra.mxu0 0
      %2035 = vmatprep.subr.bf16.mxu0 0
      %2036 = vmatpush1.bf16.msra.mxu0 0
      %2037 = vmatprep.subr.bf16.mxu0 0
      %2038 = vmatpush1.bf16.msra.mxu0 0
      %2039 = vmatprep.subr.bf16.mxu0 0
      %2040 = vmatpush1.bf16.msra.mxu0 0
      %2041 = vmatprep.subr.bf16.mxu0 0
      %2042 = vmatpush1.bf16.msra.mxu0 0
      %2043 = vmatprep.subr.bf16.mxu0 0
      %2044 = vmatpush1.bf16.msra.mxu0 0
      %2045 = vmatprep.subr.bf16.mxu0 0
      %2046 = vmatpush1.bf16.msra.mxu0 0
      %2047 = vmatprep.subr.bf16.mxu0 0
      %2048 = vmatpush1.bf16.msra.mxu0 0
      %2049 = vmatprep.subr.bf16.mxu0 0
      %2050 = vmatpush1.bf16.msra.mxu0 0
      %2051 = vmatprep.subr.bf16.mxu0 0
      %2052 = vmatpush1.bf16.msra.mxu0 0
      %2053 = vmatprep.mubr.bf16.mxu0 0
      %2054 = vmatmul.mubr.bf16.gmra.mrb[0].mxu0 %v2016
      %v2055 = vpop.f32.mrb[0].mxu0
      %v2056 = vadd.f32 0.0, %v2055
      %v2057 = vpop.f32.mrb[0].mxu0
      %v2058 = vpop.f32.mrb[0].mxu0
      %v2059 = vpop.f32.mrb[0].mxu0
      %2060 = vdwg.mxu0
      %2061 = vrot.lane.b32.xlu0 %v1496, 112
      %v2062 = vpop.permute.xlu0 %2061
      %2063 = vrot.lane.b32.xlu0 %v1497, 112
      %v2064 = vpop.permute.xlu0 %2063
      %v2066 = vsel %vm1498, %v2062, 0
      %v2069 = vsel %vm1498, %v2064, 0
      %2071 = vmatprep.subr.bf16.mxu0 0
      %2072 = vmatpush1.bf16.xpose.msra.mxu0 %v2069
      %2073 = vmatprep.subr.bf16.mxu0 0
      %2074 = vmatpush1.bf16.xpose.msra.mxu0 0
      %2075 = vmatprep.subr.bf16.mxu0 0
      %2076 = vmatpush1.bf16.xpose.msra.mxu0 0
      %2077 = vmatprep.subr.bf16.mxu0 0
      %2078 = vmatpush1.bf16.xpose.msra.mxu0 0
      %2079 = vmatprep.subr.bf16.mxu0 0
      %2080 = vmatpush1.bf16.xpose.msra.mxu0 0
      %2081 = vmatprep.subr.bf16.mxu0 0
      %2082 = vmatpush1.bf16.xpose.msra.mxu0 0
      %2083 = vmatprep.subr.bf16.mxu0 0
      %2084 = vmatpush1.bf16.xpose.msra.mxu0 0
      %2085 = vmatprep.subr.bf16.mxu0 0
      %2086 = vmatpush1.bf16.xpose.msra.mxu0 0
      %2087 = vmatprep.subr.bf16.mxu0 0
      %2088 = vmatpush1.bf16.xpose.msra.mxu0 0
      %2089 = vmatprep.subr.bf16.mxu0 0
      %2090 = vmatpush1.bf16.xpose.msra.mxu0 0
      %2091 = vmatprep.subr.bf16.mxu0 0
      %2092 = vmatpush1.bf16.xpose.msra.mxu0 0
      %2093 = vmatprep.subr.bf16.mxu0 0
      %2094 = vmatpush1.bf16.xpose.msra.mxu0 0
      %2095 = vmatprep.subr.bf16.mxu0 0
      %2096 = vmatpush1.bf16.xpose.msra.mxu0 0
      %2097 = vmatprep.subr.bf16.mxu0 0
      %2098 = vmatpush1.bf16.xpose.msra.mxu0 0
      %2099 = vmatprep.subr.bf16.mxu0 0
      %2100 = vmatpush1.bf16.xpose.msra.mxu0 0
      %2101 = vmatprep.subr.bf16.mxu0 0
      %2102 = vmatpush1.bf16.xpose.msra.mxu0 0
      %2103 = vmatprep.mubr.bf16.mxu0 0
      %2104 = vmatmul.mubr.bf16.gmra.mrb[0].mxu0 %v2066
      %v2105 = vpop.f32.mrb[0].mxu0
      %v2106 = vadd.f32 0.0, %v2105
      %v2107 = vpop.f32.mrb[0].mxu0
      %v2108 = vpop.f32.mrb[0].mxu0
      %v2109 = vpop.f32.mrb[0].mxu0
      %2110 = vdwg.mxu0
      %v2111 = vmul.f32 %v2106, 0.35355338
      %2112 = vrot.lane.b32.xlu0 %v1488, 16
      %v2113 = vpop.permute.xlu0 %2112
      %2114 = vrot.lane.b32.xlu0 %v1489, 16
      %v2115 = vpop.permute.xlu0 %2114
      %2116 = vrot.lane.b32.xlu0 %v1490, 16
      %v2117 = vpop.permute.xlu0 %2116
      %2118 = vrot.lane.b32.xlu0 %v1491, 16
      %v2119 = vpop.permute.xlu0 %2118
      %2120 = vrot.lane.b32.xlu0 %v1492, 16
      %v2121 = vpop.permute.xlu0 %2120
      %2122 = vrot.lane.b32.xlu0 %v1493, 16
      %v2123 = vpop.permute.xlu0 %2122
      %2124 = vrot.lane.b32.xlu0 %v1494, 16
      %v2125 = vpop.permute.xlu0 %2124
      %2126 = vrot.lane.b32.xlu0 %v1495, 16
      %v2127 = vpop.permute.xlu0 %2126
      %v2136 = vmul.f32 %v1599, %v2113
      %v2137 = vmul.f32 %v1603, %v2115
      %v2138 = vmul.f32 %v1607, %v2117
      %v2139 = vmul.f32 %v1611, %v2119
      %v2140 = vmul.f32 %v1615, %v2121
      %v2141 = vmul.f32 %v1619, %v2123
      %v2142 = vmul.f32 %v1623, %v2125
      %v2143 = vmul.f32 %v1627, %v2127
      %2152 = vrot.lane.b32.xlu0 %v2136, 112
      %v2153 = vpop.permute.xlu0 %2152
      %2154 = vrot.lane.b32.xlu0 %v2137, 112
      %v2155 = vpop.permute.xlu0 %2154
      %2156 = vrot.lane.b32.xlu0 %v2138, 112
      %v2157 = vpop.permute.xlu0 %2156
      %2158 = vrot.lane.b32.xlu0 %v2139, 112
      %v2159 = vpop.permute.xlu0 %2158
      %2160 = vrot.lane.b32.xlu0 %v2140, 112
      %v2161 = vpop.permute.xlu0 %2160
      %2162 = vrot.lane.b32.xlu0 %v2141, 112
      %v2163 = vpop.permute.xlu0 %2162
      %2164 = vrot.lane.b32.xlu0 %v2142, 112
      %v2165 = vpop.permute.xlu0 %2164
      %2166 = vrot.lane.b32.xlu0 %v2143, 112
      %v2167 = vpop.permute.xlu0 %2166
      %v2176 = vsel %vm1498, %v2153, 0.0
      %2177 = vadd.xlane.f32.xlu0 %v2176
      %v2178 = vpop.xlane.xlu0 %2177
      %v2179 = vsel %vm1498, %v2155, 0.0
      %2180 = vadd.xlane.f32.xlu0 %v2179
      %v2181 = vpop.xlane.xlu0 %2180
      %v2182 = vsel %vm1498, %v2157, 0.0
      %2183 = vadd.xlane.f32.xlu0 %v2182
      %v2184 = vpop.xlane.xlu0 %2183
      %v2185 = vsel %vm1498, %v2159, 0.0
      %2186 = vadd.xlane.f32.xlu0 %v2185
      %v2187 = vpop.xlane.xlu0 %2186
      %v2188 = vsel %vm1498, %v2161, 0.0
      %2189 = vadd.xlane.f32.xlu0 %v2188
      %v2190 = vpop.xlane.xlu0 %2189
      %v2191 = vsel %vm1498, %v2163, 0.0
      %2192 = vadd.xlane.f32.xlu0 %v2191
      %v2193 = vpop.xlane.xlu0 %2192
      %v2194 = vsel %vm1498, %v2165, 0.0
      %2195 = vadd.xlane.f32.xlu0 %v2194
      %v2196 = vpop.xlane.xlu0 %2195
      %v2197 = vsel %vm1498, %v2167, 0.0
      %2198 = vadd.xlane.f32.xlu0 %v2197
      %v2199 = vpop.xlane.xlu0 %2198
      %v2200 = vmul.f32 %v2178, 0.35355338
      %v2201 = vmul.f32 %v2181, 0.35355338
      %v2202 = vmul.f32 %v2184, 0.35355338
      %v2203 = vmul.f32 %v2187, 0.35355338
      %v2204 = vmul.f32 %v2190, 0.35355338
      %v2205 = vmul.f32 %v2193, 0.35355338
      %v2206 = vmul.f32 %v2196, 0.35355338
      %v2207 = vmul.f32 %v2199, 0.35355338
      %v2216 = vlaneseq
      %v2217 = vshrl.u32 %v2216, 7
      %v2218 = vsub.s32 %v1685, %v2217
      %v2219 = vrot.slane %v2200, %v2218
      %v2220 = vlaneseq
      %v2221 = vshrl.u32 %v2220, 7
      %v2222 = vsub.s32 %v1685, %v2221
      %v2223 = vrot.slane %v2201, %v2222
      %v2224 = vlaneseq
      %v2225 = vshrl.u32 %v2224, 7
      %v2226 = vsub.s32 %v1685, %v2225
      %v2227 = vrot.slane %v2202, %v2226
      %v2228 = vlaneseq
      %v2229 = vshrl.u32 %v2228, 7
      %v2230 = vsub.s32 %v1685, %v2229
      %v2231 = vrot.slane %v2203, %v2230
      %v2232 = vlaneseq
      %v2233 = vshrl.u32 %v2232, 7
      %v2234 = vsub.s32 %v1685, %v2233
      %v2235 = vrot.slane %v2204, %v2234
      %v2236 = vlaneseq
      %v2237 = vshrl.u32 %v2236, 7
      %v2238 = vsub.s32 %v1685, %v2237
      %v2239 = vrot.slane %v2205, %v2238
      %v2240 = vlaneseq
      %v2241 = vshrl.u32 %v2240, 7
      %v2242 = vsub.s32 %v1685, %v2241
      %v2243 = vrot.slane %v2206, %v2242
      %v2244 = vlaneseq
      %v2245 = vshrl.u32 %v2244, 7
      %v2246 = vsub.s32 %v1685, %v2245
      %v2247 = vrot.slane %v2207, %v2246
      %v2248 = vsel %vm1718, %v2223, %v2219
      %v2249 = vsel %vm1720, %v2227, %v2248
      %v2250 = vsel %vm1722, %v2231, %v2249
      %v2251 = vsel %vm1724, %v2235, %v2250
      %v2252 = vsel %vm1726, %v2239, %v2251
      %v2253 = vsel %vm1728, %v2243, %v2252
      %v2254 = vsel %vm1730, %v2247, %v2253
      %v2256 = vadd.f32 %v2111, %v2254
      %v2257 = vsel %vm1498, %v2256, -inf
      %2258 = vmax.xlane.f32.xlu0 %v2257
      %v2259 = vpop.xlane.xlu0 %2258
      %v2260 = vsub.f32 %v2256, %v2259
      %v2261 = vmul.f32 %v2260, 1.442695
      %v2262 = vpow.pop %v2261
      %v2263 = vsel %vm1498, %v2262, 0.0
      %2264 = vadd.xlane.f32.xlu0 %v2263
      %v2265 = vpop.xlane.xlu0 %2264
      %v2266 = vrcp.pop %v2265
      %v2267 = vmul.f32 %v2262, %v2266
      %v2268 = vpack.c.bf16 %v2267, %v2267
      %2269 = vrot.lane.b32.xlu0 %v1746, 112
      %v2270 = vpop.permute.xlu0 %2269
      %v2272 = vsel %vm1498, %v2268, 0
      %v2275 = vsel %vm1750, %v2270, 0
      %2277 = vmatprep.subr.bf16.mxu0 0
      %2278 = vmatpush1.bf16.msra.mxu0 %v2275
      %2279 = vmatprep.subr.bf16.mxu0 0
      %2280 = vmatpush1.bf16.msra.mxu0 0
      %2281 = vmatprep.subr.bf16.mxu0 0
      %2282 = vmatpush1.bf16.msra.mxu0 0
      %2283 = vmatprep.subr.bf16.mxu0 0
      %2284 = vmatpush1.bf16.msra.mxu0 0
      %2285 = vmatprep.subr.bf16.mxu0 0
      %2286 = vmatpush1.bf16.msra.mxu0 0
      %2287 = vmatprep.subr.bf16.mxu0 0
      %2288 = vmatpush1.bf16.msra.mxu0 0
      %2289 = vmatprep.subr.bf16.mxu0 0
      %2290 = vmatpush1.bf16.msra.mxu0 0
      %2291 = vmatprep.subr.bf16.mxu0 0
      %2292 = vmatpush1.bf16.msra.mxu0 0
      %2293 = vmatprep.subr.bf16.mxu0 0
      %2294 = vmatpush1.bf16.msra.mxu0 0
      %2295 = vmatprep.subr.bf16.mxu0 0
      %2296 = vmatpush1.bf16.msra.mxu0 0
      %2297 = vmatprep.subr.bf16.mxu0 0
      %2298 = vmatpush1.bf16.msra.mxu0 0
      %2299 = vmatprep.subr.bf16.mxu0 0
      %2300 = vmatpush1.bf16.msra.mxu0 0
      %2301 = vmatprep.subr.bf16.mxu0 0
      %2302 = vmatpush1.bf16.msra.mxu0 0
      %2303 = vmatprep.subr.bf16.mxu0 0
      %2304 = vmatpush1.bf16.msra.mxu0 0
      %2305 = vmatprep.subr.bf16.mxu0 0
      %2306 = vmatpush1.bf16.msra.mxu0 0
      %2307 = vmatprep.subr.bf16.mxu0 0
      %2308 = vmatpush1.bf16.msra.mxu0 0
      %2309 = vmatprep.mubr.bf16.mxu0 0
      %2310 = vmatmul.mubr.bf16.gmra.mrb[0].mxu0 %v2272
      %v2311 = vpop.f32.mrb[0].mxu0
      %v2312 = vadd.f32 0.0, %v2311
      %v2313 = vpop.f32.mrb[0].mxu0
      %v2314 = vpop.f32.mrb[0].mxu0
      %v2315 = vpop.f32.mrb[0].mxu0
      %2316 = vdwg.mxu0
      %2317 = vrot.lane.b32.xlu0 %v1496, 104
      %v2318 = vpop.permute.xlu0 %2317
      %2319 = vrot.lane.b32.xlu0 %v1497, 104
      %v2320 = vpop.permute.xlu0 %2319
      %v2322 = vsel %vm1498, %v2318, 0
      %v2325 = vsel %vm1498, %v2320, 0
      %2327 = vmatprep.subr.bf16.mxu0 0
      %2328 = vmatpush1.bf16.xpose.msra.mxu0 %v2325
      %2329 = vmatprep.subr.bf16.mxu0 0
      %2330 = vmatpush1.bf16.xpose.msra.mxu0 0
      %2331 = vmatprep.subr.bf16.mxu0 0
      %2332 = vmatpush1.bf16.xpose.msra.mxu0 0
      %2333 = vmatprep.subr.bf16.mxu0 0
      %2334 = vmatpush1.bf16.xpose.msra.mxu0 0
      %2335 = vmatprep.subr.bf16.mxu0 0
      %2336 = vmatpush1.bf16.xpose.msra.mxu0 0
      %2337 = vmatprep.subr.bf16.mxu0 0
      %2338 = vmatpush1.bf16.xpose.msra.mxu0 0
      %2339 = vmatprep.subr.bf16.mxu0 0
      %2340 = vmatpush1.bf16.xpose.msra.mxu0 0
      %2341 = vmatprep.subr.bf16.mxu0 0
      %2342 = vmatpush1.bf16.xpose.msra.mxu0 0
      %2343 = vmatprep.subr.bf16.mxu0 0
      %2344 = vmatpush1.bf16.xpose.msra.mxu0 0
      %2345 = vmatprep.subr.bf16.mxu0 0
      %2346 = vmatpush1.bf16.xpose.msra.mxu0 0
      %2347 = vmatprep.subr.bf16.mxu0 0
      %2348 = vmatpush1.bf16.xpose.msra.mxu0 0
      %2349 = vmatprep.subr.bf16.mxu0 0
      %2350 = vmatpush1.bf16.xpose.msra.mxu0 0
      %2351 = vmatprep.subr.bf16.mxu0 0
      %2352 = vmatpush1.bf16.xpose.msra.mxu0 0
      %2353 = vmatprep.subr.bf16.mxu0 0
      %2354 = vmatpush1.bf16.xpose.msra.mxu0 0
      %2355 = vmatprep.subr.bf16.mxu0 0
      %2356 = vmatpush1.bf16.xpose.msra.mxu0 0
      %2357 = vmatprep.subr.bf16.mxu0 0
      %2358 = vmatpush1.bf16.xpose.msra.mxu0 0
      %2359 = vmatprep.mubr.bf16.mxu0 0
      %2360 = vmatmul.mubr.bf16.gmra.mrb[0].mxu0 %v2322
      %v2361 = vpop.f32.mrb[0].mxu0
      %v2362 = vadd.f32 0.0, %v2361
      %v2363 = vpop.f32.mrb[0].mxu0
      %v2364 = vpop.f32.mrb[0].mxu0
      %v2365 = vpop.f32.mrb[0].mxu0
      %2366 = vdwg.mxu0
      %v2367 = vmul.f32 %v2362, 0.35355338
      %2368 = vrot.lane.b32.xlu0 %v1488, 24
      %v2369 = vpop.permute.xlu0 %2368
      %2370 = vrot.lane.b32.xlu0 %v1489, 24
      %v2371 = vpop.permute.xlu0 %2370
      %2372 = vrot.lane.b32.xlu0 %v1490, 24
      %v2373 = vpop.permute.xlu0 %2372
      %2374 = vrot.lane.b32.xlu0 %v1491, 24
      %v2375 = vpop.permute.xlu0 %2374
      %2376 = vrot.lane.b32.xlu0 %v1492, 24
      %v2377 = vpop.permute.xlu0 %2376
      %2378 = vrot.lane.b32.xlu0 %v1493, 24
      %v2379 = vpop.permute.xlu0 %2378
      %2380 = vrot.lane.b32.xlu0 %v1494, 24
      %v2381 = vpop.permute.xlu0 %2380
      %2382 = vrot.lane.b32.xlu0 %v1495, 24
      %v2383 = vpop.permute.xlu0 %2382
      %v2392 = vmul.f32 %v1599, %v2369
      %v2393 = vmul.f32 %v1603, %v2371
      %v2394 = vmul.f32 %v1607, %v2373
      %v2395 = vmul.f32 %v1611, %v2375
      %v2396 = vmul.f32 %v1615, %v2377
      %v2397 = vmul.f32 %v1619, %v2379
      %v2398 = vmul.f32 %v1623, %v2381
      %v2399 = vmul.f32 %v1627, %v2383
      %2408 = vrot.lane.b32.xlu0 %v2392, 104
      %v2409 = vpop.permute.xlu0 %2408
      %2410 = vrot.lane.b32.xlu0 %v2393, 104
      %v2411 = vpop.permute.xlu0 %2410
      %2412 = vrot.lane.b32.xlu0 %v2394, 104
      %v2413 = vpop.permute.xlu0 %2412
      %2414 = vrot.lane.b32.xlu0 %v2395, 104
      %v2415 = vpop.permute.xlu0 %2414
      %2416 = vrot.lane.b32.xlu0 %v2396, 104
      %v2417 = vpop.permute.xlu0 %2416
      %2418 = vrot.lane.b32.xlu0 %v2397, 104
      %v2419 = vpop.permute.xlu0 %2418
      %2420 = vrot.lane.b32.xlu0 %v2398, 104
      %v2421 = vpop.permute.xlu0 %2420
      %2422 = vrot.lane.b32.xlu0 %v2399, 104
      %v2423 = vpop.permute.xlu0 %2422
      %v2432 = vsel %vm1498, %v2409, 0.0
      %2433 = vadd.xlane.f32.xlu0 %v2432
      %v2434 = vpop.xlane.xlu0 %2433
      %v2435 = vsel %vm1498, %v2411, 0.0
      %2436 = vadd.xlane.f32.xlu0 %v2435
      %v2437 = vpop.xlane.xlu0 %2436
      %v2438 = vsel %vm1498, %v2413, 0.0
      %2439 = vadd.xlane.f32.xlu0 %v2438
      %v2440 = vpop.xlane.xlu0 %2439
      %v2441 = vsel %vm1498, %v2415, 0.0
      %2442 = vadd.xlane.f32.xlu0 %v2441
      %v2443 = vpop.xlane.xlu0 %2442
      %v2444 = vsel %vm1498, %v2417, 0.0
      %2445 = vadd.xlane.f32.xlu0 %v2444
      %v2446 = vpop.xlane.xlu0 %2445
      %v2447 = vsel %vm1498, %v2419, 0.0
      %2448 = vadd.xlane.f32.xlu0 %v2447
      %v2449 = vpop.xlane.xlu0 %2448
      %v2450 = vsel %vm1498, %v2421, 0.0
      %2451 = vadd.xlane.f32.xlu0 %v2450
      %v2452 = vpop.xlane.xlu0 %2451
      %v2453 = vsel %vm1498, %v2423, 0.0
      %2454 = vadd.xlane.f32.xlu0 %v2453
      %v2455 = vpop.xlane.xlu0 %2454
      %v2456 = vmul.f32 %v2434, 0.35355338
      %v2457 = vmul.f32 %v2437, 0.35355338
      %v2458 = vmul.f32 %v2440, 0.35355338
      %v2459 = vmul.f32 %v2443, 0.35355338
      %v2460 = vmul.f32 %v2446, 0.35355338
      %v2461 = vmul.f32 %v2449, 0.35355338
      %v2462 = vmul.f32 %v2452, 0.35355338
      %v2463 = vmul.f32 %v2455, 0.35355338
      %v2472 = vlaneseq
      %v2473 = vshrl.u32 %v2472, 7
      %v2474 = vsub.s32 %v1685, %v2473
      %v2475 = vrot.slane %v2456, %v2474
      %v2476 = vlaneseq
      %v2477 = vshrl.u32 %v2476, 7
      %v2478 = vsub.s32 %v1685, %v2477
      %v2479 = vrot.slane %v2457, %v2478
      %v2480 = vlaneseq
      %v2481 = vshrl.u32 %v2480, 7
      %v2482 = vsub.s32 %v1685, %v2481
      %v2483 = vrot.slane %v2458, %v2482
      %v2484 = vlaneseq
      %v2485 = vshrl.u32 %v2484, 7
      %v2486 = vsub.s32 %v1685, %v2485
      %v2487 = vrot.slane %v2459, %v2486
      %v2488 = vlaneseq
      %v2489 = vshrl.u32 %v2488, 7
      %v2490 = vsub.s32 %v1685, %v2489
      %v2491 = vrot.slane %v2460, %v2490
      %v2492 = vlaneseq
      %v2493 = vshrl.u32 %v2492, 7
      %v2494 = vsub.s32 %v1685, %v2493
      %v2495 = vrot.slane %v2461, %v2494
      %v2496 = vlaneseq
      %v2497 = vshrl.u32 %v2496, 7
      %v2498 = vsub.s32 %v1685, %v2497
      %v2499 = vrot.slane %v2462, %v2498
      %v2500 = vlaneseq
      %v2501 = vshrl.u32 %v2500, 7
      %v2502 = vsub.s32 %v1685, %v2501
      %v2503 = vrot.slane %v2463, %v2502
      %v2504 = vsel %vm1718, %v2479, %v2475
      %v2505 = vsel %vm1720, %v2483, %v2504
      %v2506 = vsel %vm1722, %v2487, %v2505
      %v2507 = vsel %vm1724, %v2491, %v2506
      %v2508 = vsel %vm1726, %v2495, %v2507
      %v2509 = vsel %vm1728, %v2499, %v2508
      %v2510 = vsel %vm1730, %v2503, %v2509
      %v2512 = vadd.f32 %v2367, %v2510
      %v2513 = vsel %vm1498, %v2512, -inf
      %2514 = vmax.xlane.f32.xlu0 %v2513
      %v2515 = vpop.xlane.xlu0 %2514
      %v2516 = vsub.f32 %v2512, %v2515
      %v2517 = vmul.f32 %v2516, 1.442695
      %v2518 = vpow.pop %v2517
      %v2519 = vsel %vm1498, %v2518, 0.0
      %2520 = vadd.xlane.f32.xlu0 %v2519
      %v2521 = vpop.xlane.xlu0 %2520
      %v2522 = vrcp.pop %v2521
      %v2523 = vmul.f32 %v2518, %v2522
      %v2524 = vpack.c.bf16 %v2523, %v2523
      %2525 = vrot.lane.b32.xlu0 %v1746, 104
      %v2526 = vpop.permute.xlu0 %2525
      %v2528 = vsel %vm1498, %v2524, 0
      %v2531 = vsel %vm1750, %v2526, 0
      %2533 = vmatprep.subr.bf16.mxu0 0
      %2534 = vmatpush1.bf16.msra.mxu0 %v2531
      %2535 = vmatprep.subr.bf16.mxu0 0
      %2536 = vmatpush1.bf16.msra.mxu0 0
      %2537 = vmatprep.subr.bf16.mxu0 0
      %2538 = vmatpush1.bf16.msra.mxu0 0
      %2539 = vmatprep.subr.bf16.mxu0 0
      %2540 = vmatpush1.bf16.msra.mxu0 0
      %2541 = vmatprep.subr.bf16.mxu0 0
      %2542 = vmatpush1.bf16.msra.mxu0 0
      %2543 = vmatprep.subr.bf16.mxu0 0
      %2544 = vmatpush1.bf16.msra.mxu0 0
      %2545 = vmatprep.subr.bf16.mxu0 0
      %2546 = vmatpush1.bf16.msra.mxu0 0
      %2547 = vmatprep.subr.bf16.mxu0 0
      %2548 = vmatpush1.bf16.msra.mxu0 0
      %2549 = vmatprep.subr.bf16.mxu0 0
      %2550 = vmatpush1.bf16.msra.mxu0 0
      %2551 = vmatprep.subr.bf16.mxu0 0
      %2552 = vmatpush1.bf16.msra.mxu0 0
      %2553 = vmatprep.subr.bf16.mxu0 0
      %2554 = vmatpush1.bf16.msra.mxu0 0
      %2555 = vmatprep.subr.bf16.mxu0 0
      %2556 = vmatpush1.bf16.msra.mxu0 0
      %2557 = vmatprep.subr.bf16.mxu0 0
      %2558 = vmatpush1.bf16.msra.mxu0 0
      %2559 = vmatprep.subr.bf16.mxu0 0
      %2560 = vmatpush1.bf16.msra.mxu0 0
      %2561 = vmatprep.subr.bf16.mxu0 0
      %2562 = vmatpush1.bf16.msra.mxu0 0
      %2563 = vmatprep.subr.bf16.mxu0 0
      %2564 = vmatpush1.bf16.msra.mxu0 0
      %2565 = vmatprep.mubr.bf16.mxu0 0
      %2566 = vmatmul.mubr.bf16.gmra.mrb[0].mxu0 %v2528
      %v2567 = vpop.f32.mrb[0].mxu0
      %v2568 = vadd.f32 0.0, %v2567
      %v2569 = vpop.f32.mrb[0].mxu0
      %v2570 = vpop.f32.mrb[0].mxu0
      %v2571 = vpop.f32.mrb[0].mxu0
      %2572 = vdwg.mxu0
      %2574 = vrot.lane.b32.xlu0 %v2056, 8
      %v2575 = vpop.permute.xlu0 %2574
      %2578 = vrot.lane.b32.xlu0 %v2312, 16
      %v2579 = vpop.permute.xlu0 %2578
      %2582 = vrot.lane.b32.xlu0 %v2568, 24
      %v2583 = vpop.permute.xlu0 %2582
      %v2585 = vsel %vm1498, %v1789, %v2575
      %vm2586 = vcmask 130048
      %v2587 = vsel %vm2586, %v2585, %v2579
      %vm2588 = vcmask 195584
      %v2589 = vsel %vm2588, %v2587, %v2583
      %v2590 = vpack.c.bf16 %v2589, %v2589
      %v2591 = vld [vmem:[%s25] sm:$0xf]
      %v2592 = vld [vmem:[%s25 + $0x4] sm:$0xf]
      %v2593 = vld [vmem:[%s25 + $0x8] sm:$0xf]
      %v2594 = vld [vmem:[%s25 + $0xc] sm:$0xf]
      %v2599 = vunpack.c.l.b16 %v2591
      %v2600 = vunpack.c.l.b16 %v2592
      %v2601 = vunpack.c.l.b16 %v2593
      %v2602 = vunpack.c.l.b16 %v2594
      %v2603 = vpack.c.b16 %v2600, %v2599
      %v2604 = vpack.c.b16 %v2602, %v2601
      %v2608 = vsel %vm1092, %v2590, 0
      %2610 = vmatprep.subr.bf16.mxu0 0
      %2611 = vmatpush1.bf16.msra.mxu0 %v2603
      %2612 = vmatprep.subr.bf16.mxu0 0
      %2613 = vmatpush1.bf16.msra.mxu0 %v2604
      %2614 = vmatprep.subr.bf16.mxu0 0
      %2615 = vmatpush1.bf16.msra.mxu0 0
      %2616 = vmatprep.subr.bf16.mxu0 0
      %2617 = vmatpush1.bf16.msra.mxu0 0
      %2618 = vmatprep.subr.bf16.mxu0 0
      %2619 = vmatpush1.bf16.msra.mxu0 0
      %2620 = vmatprep.subr.bf16.mxu0 0
      %2621 = vmatpush1.bf16.msra.mxu0 0
      %2622 = vmatprep.subr.bf16.mxu0 0
      %2623 = vmatpush1.bf16.msra.mxu0 0
      %2624 = vmatprep.subr.bf16.mxu0 0
      %2625 = vmatpush1.bf16.msra.mxu0 0
      %2626 = vmatprep.subr.bf16.mxu0 0
      %2627 = vmatpush1.bf16.msra.mxu0 0
      %2628 = vmatprep.subr.bf16.mxu0 0
      %2629 = vmatpush1.bf16.msra.mxu0 0
      %2630 = vmatprep.subr.bf16.mxu0 0
      %2631 = vmatpush1.bf16.msra.mxu0 0
      %2632 = vmatprep.subr.bf16.mxu0 0
      %2633 = vmatpush1.bf16.msra.mxu0 0
      %2634 = vmatprep.subr.bf16.mxu0 0
      %2635 = vmatpush1.bf16.msra.mxu0 0
      %2636 = vmatprep.subr.bf16.mxu0 0
      %2637 = vmatpush1.bf16.msra.mxu0 0
      %2638 = vmatprep.subr.bf16.mxu0 0
      %2639 = vmatpush1.bf16.msra.mxu0 0
      %2640 = vmatprep.subr.bf16.mxu0 0
      %2641 = vmatpush1.bf16.msra.mxu0 0
      %2642 = vmatprep.mubr.bf16.mxu0 0
      %2643 = vmatmul.mubr.bf16.gmra.mrb[0].mxu0 %v2608
      %v2644 = vpop.f32.mrb[0].mxu0
      %v2645 = vadd.f32 0.0, %v2644
      %v2646 = vpop.f32.mrb[0].mxu0
      %v2647 = vpop.f32.mrb[0].mxu0
      %v2648 = vpop.f32.mrb[0].mxu0
      %2649 = vdwg.mxu0
      %v2650 = vadd.f32 %v1286, %v2645
      %v2651 = vld [vmem:[%s27] sm:$0x1]
      %v2653 = vlaneseq
      %v2654 = vshrl.u32 %v2653, 7
      %v2655 = vsub.s32 0, %v2654
      %v2656 = vrot.slane %v2651, %v2655
      %v2658 = vadd.f32 %v2650, %v2656
      %v2659 = vld [vmem:[%s31] sm:$0x1]
      %v2660 = vld [vmem:[%s33] sm:$0x1]
      %v2661 = vsel %vm1092, %v2658, 0.0
      %2662 = vadd.xlane.f32.xlu0 %v2661
      %v2663 = vpop.xlane.xlu0 %2662
      %v2664 = vmul.f32 %v2663, %v1096
      %v2665 = vsub.f32 %v2658, %v2664
      %v2666 = vmul.f32 %v2665, %v2665
      %v2667 = vsel %vm1092, %v2666, 0.0
      %2668 = vadd.xlane.f32.xlu0 %v2667
      %v2669 = vpop.xlane.xlu0 %2668
      %v2670 = vmul.f32 %v2669, %v1096
      %v2671 = vadd.f32 %v2670, 1e-05
      %v2672 = vrsqrt.pop %v2671
      %v2673 = vmul.f32 %v2665, %v2672
      %v2675 = vlaneseq
      %v2676 = vshrl.u32 %v2675, 7
      %v2677 = vsub.s32 0, %v2676
      %v2678 = vrot.slane %v2659, %v2677
      %v2680 = vmul.f32 %v2673, %v2678
      %v2682 = vlaneseq
      %v2683 = vshrl.u32 %v2682, 7
      %v2684 = vsub.s32 0, %v2683
      %v2685 = vrot.slane %v2660, %v2684
      %v2687 = vadd.f32 %v2680, %v2685
      %v2688 = vpack.c.bf16 %v2687, %v2687
      %v2689 = vld [vmem:[%s35] sm:$0xf]
      %v2690 = vld [vmem:[%s35 + $0x4] sm:$0xf]
      %v2691 = vld [vmem:[%s35 + $0x8] sm:$0xf]
      %v2692 = vld [vmem:[%s35 + $0xc] sm:$0xf]
      %v2693 = vld [vmem:[%s37] sm:$0x1]
      %v2695 = vlaneseq
      %v2696 = vshrl.u32 %v2695, 7
      %v2697 = vsub.s32 0, %v2696
      %v2698 = vrot.slane %v2693, %v2697
      %v2704 = vunpack.c.l.b16 %v2689
      %v2705 = vunpack.c.l.b16 %v2690
      %v2706 = vunpack.c.l.b16 %v2691
      %v2707 = vunpack.c.l.b16 %v2692
      %v2708 = vpack.c.b16 %v2705, %v2704
      %v2709 = vpack.c.b16 %v2707, %v2706
      %v2713 = vsel %vm1092, %v2688, 0
      %2715 = vmatprep.subr.bf16.mxu0 0
      %2716 = vmatpush1.bf16.msra.mxu0 %v2708
      %2717 = vmatprep.subr.bf16.mxu0 0
      %2718 = vmatpush1.bf16.msra.mxu0 %v2709
      %2719 = vmatprep.subr.bf16.mxu0 0
      %2720 = vmatpush1.bf16.msra.mxu0 0
      %2721 = vmatprep.subr.bf16.mxu0 0
      %2722 = vmatpush1.bf16.msra.mxu0 0
      %2723 = vmatprep.subr.bf16.mxu0 0
      %2724 = vmatpush1.bf16.msra.mxu0 0
      %2725 = vmatprep.subr.bf16.mxu0 0
      %2726 = vmatpush1.bf16.msra.mxu0 0
      %2727 = vmatprep.subr.bf16.mxu0 0
      %2728 = vmatpush1.bf16.msra.mxu0 0
      %2729 = vmatprep.subr.bf16.mxu0 0
      %2730 = vmatpush1.bf16.msra.mxu0 0
      %2731 = vmatprep.subr.bf16.mxu0 0
      %2732 = vmatpush1.bf16.msra.mxu0 0
      %2733 = vmatprep.subr.bf16.mxu0 0
      %2734 = vmatpush1.bf16.msra.mxu0 0
      %2735 = vmatprep.subr.bf16.mxu0 0
      %2736 = vmatpush1.bf16.msra.mxu0 0
      %2737 = vmatprep.subr.bf16.mxu0 0
      %2738 = vmatpush1.bf16.msra.mxu0 0
      %2739 = vmatprep.subr.bf16.mxu0 0
      %2740 = vmatpush1.bf16.msra.mxu0 0
      %2741 = vmatprep.subr.bf16.mxu0 0
      %2742 = vmatpush1.bf16.msra.mxu0 0
      %2743 = vmatprep.subr.bf16.mxu0 0
      %2744 = vmatpush1.bf16.msra.mxu0 0
      %2745 = vmatprep.subr.bf16.mxu0 0
      %2746 = vmatpush1.bf16.msra.mxu0 0
      %2747 = vmatprep.mubr.bf16.mxu0 0
      %2748 = vmatmul.mubr.bf16.gmra.mrb[0].mxu0 %v2713
      %v2749 = vpop.f32.mrb[0].mxu0
      %v2750 = vadd.f32 %v2698, %v2749
      %v2751 = vpop.f32.mrb[0].mxu0
      %v2752 = vpop.f32.mrb[0].mxu0
      %v2753 = vpop.f32.mrb[0].mxu0
      %2754 = vdwg.mxu0
      %v2755 = vld [vmem:[%s39] sm:$0xf]
      %v2756 = vld [vmem:[%s39 + $0x4] sm:$0xf]
      %v2757 = vld [vmem:[%s39 + $0x8] sm:$0xf]
      %v2758 = vld [vmem:[%s39 + $0xc] sm:$0xf]
      %v2759 = vld [vmem:[%s41] sm:$0x1]
      %v2761 = vlaneseq
      %v2762 = vshrl.u32 %v2761, 7
      %v2763 = vsub.s32 0, %v2762
      %v2764 = vrot.slane %v2759, %v2763
      %v2770 = vunpack.c.l.b16 %v2755
      %v2771 = vunpack.c.l.b16 %v2756
      %v2772 = vunpack.c.l.b16 %v2757
      %v2773 = vunpack.c.l.b16 %v2758
      %v2774 = vpack.c.b16 %v2771, %v2770
      %v2775 = vpack.c.b16 %v2773, %v2772
      %2778 = vmatprep.subr.bf16.mxu0 0
      %2779 = vmatpush1.bf16.msra.mxu0 %v2774
      %2780 = vmatprep.subr.bf16.mxu0 0
      %2781 = vmatpush1.bf16.msra.mxu0 %v2775
      %2782 = vmatprep.subr.bf16.mxu0 0
      %2783 = vmatpush1.bf16.msra.mxu0 0
      %2784 = vmatprep.subr.bf16.mxu0 0
      %2785 = vmatpush1.bf16.msra.mxu0 0
      %2786 = vmatprep.subr.bf16.mxu0 0
      %2787 = vmatpush1.bf16.msra.mxu0 0
      %2788 = vmatprep.subr.bf16.mxu0 0
      %2789 = vmatpush1.bf16.msra.mxu0 0
      %2790 = vmatprep.subr.bf16.mxu0 0
      %2791 = vmatpush1.bf16.msra.mxu0 0
      %2792 = vmatprep.subr.bf16.mxu0 0
      %2793 = vmatpush1.bf16.msra.mxu0 0
      %2794 = vmatprep.subr.bf16.mxu0 0
      %2795 = vmatpush1.bf16.msra.mxu0 0
      %2796 = vmatprep.subr.bf16.mxu0 0
      %2797 = vmatpush1.bf16.msra.mxu0 0
      %2798 = vmatprep.subr.bf16.mxu0 0
      %2799 = vmatpush1.bf16.msra.mxu0 0
      %2800 = vmatprep.subr.bf16.mxu0 0
      %2801 = vmatpush1.bf16.msra.mxu0 0
      %2802 = vmatprep.subr.bf16.mxu0 0
      %2803 = vmatpush1.bf16.msra.mxu0 0
      %2804 = vmatprep.subr.bf16.mxu0 0
      %2805 = vmatpush1.bf16.msra.mxu0 0
      %2806 = vmatprep.subr.bf16.mxu0 0
      %2807 = vmatpush1.bf16.msra.mxu0 0
      %2808 = vmatprep.subr.bf16.mxu0 0
      %2809 = vmatpush1.bf16.msra.mxu0 0
      %2810 = vmatprep.mubr.bf16.mxu0 0
      %2811 = vmatmul.mubr.bf16.gmra.mrb[0].mxu0 %v2713
      %v2812 = vpop.f32.mrb[0].mxu0
      %v2813 = vadd.f32 %v2764, %v2812
      %v2814 = vpop.f32.mrb[0].mxu0
      %v2815 = vpop.f32.mrb[0].mxu0
      %v2816 = vpop.f32.mrb[0].mxu0
      %2817 = vdwg.mxu0
      %v2818 = vxor.u32 %v2813, 2147483648
      %v2819 = vmul.f32 %v2818, 1.442695
      %v2820 = vpow.pop %v2819
      %v2821 = vadd.f32 %v2820, 1.0
      %v2822 = vrcp.pop %v2821
      %v2823 = vmul.f32 1.0, %v2822
      %v2824 = vmul.f32 %v2750, %v2823
      %v2826 = vrot.slane %v2824, 5
      %vm2828 = vcmask 1042432
      %v2829 = vsel %vm2828, 0.0, %v2826
      %v2830 = vsel %vm2828, %v2826, 0.0
      %v2831 = vld [vmem:[%s43] sm:$0x7f]
      %v2832 = vlaneseq
      %v2833 = vshrl.u32 %v2832, 7
      %v2834 = vsub.s32 0, %v2833
      %v2835 = vrot.slane %v2831, %v2834
      %v2836 = vmul.f32 %v2829, %v2835
      %v2837 = vadd.f32 %v2836, 0.0
      %v2838 = vlaneseq
      %v2839 = vshrl.u32 %v2838, 7
      %v2840 = vsub.s32 1, %v2839
      %v2841 = vrot.slane %v2831, %v2840
      %v2842 = vmul.f32 %v2829, %v2841
      %v2843 = vmul.f32 %v2830, %v2841
      %vm2846 = vcmask 1046528
      %v2847 = vrot.slane %v2842, 1
      %v2848 = vrot.slane %v2843, 1
      %v2849 = vsel %vm2846, %v2847, %v2848
      %v2851 = vadd.f32 %v2837, %v2849
      %v2852 = vlaneseq
      %v2853 = vshrl.u32 %v2852, 7
      %v2854 = vsub.s32 2, %v2853
      %v2855 = vrot.slane %v2831, %v2854
      %v2856 = vmul.f32 %v2829, %v2855
      %v2857 = vmul.f32 %v2830, %v2855
      %vm2860 = vcmask 1045504
      %v2861 = vrot.slane %v2856, 2
      %v2862 = vrot.slane %v2857, 2
      %v2863 = vsel %vm2860, %v2861, %v2862
      %v2865 = vadd.f32 %v2851, %v2863
      %v2866 = vlaneseq
      %v2867 = vshrl.u32 %v2866, 7
      %v2868 = vsub.s32 3, %v2867
      %v2869 = vrot.slane %v2831, %v2868
      %v2870 = vmul.f32 %v2829, %v2869
      %v2871 = vmul.f32 %v2830, %v2869
      %vm2874 = vcmask 1044480
      %v2875 = vrot.slane %v2870, 3
      %v2876 = vrot.slane %v2871, 3
      %v2877 = vsel %vm2874, %v2875, %v2876
      %v2879 = vadd.f32 %v2865, %v2877
      %v2880 = vlaneseq
      %v2881 = vshrl.u32 %v2880, 7
      %v2882 = vsub.s32 4, %v2881
      %v2883 = vrot.slane %v2831, %v2882
      %v2884 = vmul.f32 %v2829, %v2883
      %v2885 = vmul.f32 %v2830, %v2883
      %v2888 = vrot.slane %v2884, 4
      %v2889 = vrot.slane %v2885, 4
      %v2890 = vsel %vm1750, %v2888, %v2889
      %v2892 = vadd.f32 %v2879, %v2890
      %v2893 = vlaneseq
      %v2894 = vshrl.u32 %v2893, 7
      %v2895 = vsub.s32 5, %v2894
      %v2896 = vrot.slane %v2831, %v2895
      %v2897 = vmul.f32 %v2829, %v2896
      %v2898 = vmul.f32 %v2830, %v2896
      %v2901 = vrot.slane %v2897, 5
      %v2902 = vrot.slane %v2898, 5
      %v2903 = vsel %vm2828, %v2901, %v2902
      %v2905 = vadd.f32 %v2892, %v2903
      %v2906 = vlaneseq
      %v2907 = vshrl.u32 %v2906, 7
      %v2908 = vsub.s32 6, %v2907
      %v2909 = vrot.slane %v2831, %v2908
      %v2910 = vmul.f32 %v2829, %v2909
      %v2911 = vmul.f32 %v2830, %v2909
      %vm2914 = vcmask 1041408
      %v2915 = vrot.slane %v2910, 6
      %v2916 = vrot.slane %v2911, 6
      %v2917 = vsel %vm2914, %v2915, %v2916
      %v2919 = vadd.f32 %v2905, %v2917
      %v2920 = vld [vmem:[%s45] sm:$0x1]
      %v2922 = vlaneseq
      %v2923 = vshrl.u32 %v2922, 7
      %v2924 = vsub.s32 0, %v2923
      %v2925 = vrot.slane %v2920, %v2924
      %v2927 = vadd.f32 %v2919, %v2925
      %v2928 = vld [vmem:[%s47] sm:$0x1]
      %v2930 = vlaneseq
      %v2931 = vshrl.u32 %v2930, 7
      %v2932 = vsub.s32 0, %v2931
      %v2933 = vrot.slane %v2928, %v2932
      %v2935 = vmul.f32 %v2927, %v2933
      %v2936 = vld [vmem:[%s49] sm:$0x1]
      %v2938 = vlaneseq
      %v2939 = vshrl.u32 %v2938, 7
      %v2940 = vsub.s32 0, %v2939
      %v2941 = vrot.slane %v2936, %v2940
      %v2943 = vadd.f32 %v2935, %v2941
      %v2944 = vxor.u32 %v2943, 2147483648
      %v2945 = vmul.f32 %v2944, 1.442695
      %v2946 = vpow.pop %v2945
      %v2947 = vadd.f32 %v2946, 1.0
      %v2948 = vrcp.pop %v2947
      %v2949 = vmul.f32 1.0, %v2948
      %v2950 = vmul.f32 %v2943, %v2949
      %v2951 = vpack.c.bf16 %v2950, %v2950
      %v2952 = vld [vmem:[%s51] sm:$0xf]
      %v2953 = vld [vmem:[%s51 + $0x4] sm:$0xf]
      %v2954 = vld [vmem:[%s51 + $0x8] sm:$0xf]
      %v2955 = vld [vmem:[%s51 + $0xc] sm:$0xf]
      %v2956 = vld [vmem:[%s51 + $0x10] sm:$0xf]
      %v2957 = vld [vmem:[%s51 + $0x14] sm:$0xf]
      %v2958 = vld [vmem:[%s51 + $0x18] sm:$0xf]
      %v2959 = vld [vmem:[%s51 + $0x1c] sm:$0xf]
      %v2960 = vld [vmem:[%s53] sm:$0x1]
      %v2962 = vlaneseq
      %v2963 = vshrl.u32 %v2962, 7
      %v2964 = vsub.s32 0, %v2963
      %v2965 = vrot.slane %v2960, %v2964
      %v2975 = vunpack.c.l.b16 %v2952
      %v2976 = vunpack.c.l.b16 %v2953
      %v2977 = vunpack.c.l.b16 %v2954
      %v2978 = vunpack.c.l.b16 %v2955
      %v2979 = vunpack.c.l.b16 %v2956
      %v2980 = vunpack.c.l.b16 %v2957
      %v2981 = vunpack.c.l.b16 %v2958
      %v2982 = vunpack.c.l.b16 %v2959
      %v2983 = vpack.c.b16 %v2976, %v2975
      %v2984 = vpack.c.b16 %v2978, %v2977
      %v2985 = vpack.c.b16 %v2980, %v2979
      %v2986 = vpack.c.b16 %v2982, %v2981
      %vm2991 = vcmask 523264
      %v2993 = vsel %vm2991, %v2951, 0
      %2995 = vmatprep.subr.bf16.mxu0 0
      %2996 = vmatpush1.bf16.msra.mxu0 %v2983
      %2997 = vmatprep.subr.bf16.mxu0 0
      %2998 = vmatpush1.bf16.msra.mxu0 %v2984
      %2999 = vmatprep.subr.bf16.mxu0 0
      %3000 = vmatpush1.bf16.msra.mxu0 %v2985
      %3001 = vmatprep.subr.bf16.mxu0 0
      %3002 = vmatpush1.bf16.msra.mxu0 %v2986
      %3003 = vmatprep.subr.bf16.mxu0 0
      %3004 = vmatpush1.bf16.msra.mxu0 0
      %3005 = vmatprep.subr.bf16.mxu0 0
      %3006 = vmatpush1.bf16.msra.mxu0 0
      %3007 = vmatprep.subr.bf16.mxu0 0
      %3008 = vmatpush1.bf16.msra.mxu0 0
      %3009 = vmatprep.subr.bf16.mxu0 0
      %3010 = vmatpush1.bf16.msra.mxu0 0
      %3011 = vmatprep.subr.bf16.mxu0 0
      %3012 = vmatpush1.bf16.msra.mxu0 0
      %3013 = vmatprep.subr.bf16.mxu0 0
      %3014 = vmatpush1.bf16.msra.mxu0 0
      %3015 = vmatprep.subr.bf16.mxu0 0
      %3016 = vmatpush1.bf16.msra.mxu0 0
      %3017 = vmatprep.subr.bf16.mxu0 0
      %3018 = vmatpush1.bf16.msra.mxu0 0
      %3019 = vmatprep.subr.bf16.mxu0 0
      %3020 = vmatpush1.bf16.msra.mxu0 0
      %3021 = vmatprep.subr.bf16.mxu0 0
      %3022 = vmatpush1.bf16.msra.mxu0 0
      %3023 = vmatprep.subr.bf16.mxu0 0
      %3024 = vmatpush1.bf16.msra.mxu0 0
      %3025 = vmatprep.subr.bf16.mxu0 0
      %3026 = vmatpush1.bf16.msra.mxu0 0
      %3027 = vmatprep.mubr.bf16.mxu0 0
      %3028 = vmatmul.mubr.bf16.gmra.mrb[0].mxu0 %v2993
      %v3029 = vpop.f32.mrb[0].mxu0
      %v3030 = vadd.f32 %v2965, %v3029
      %v3031 = vpop.f32.mrb[0].mxu0
      %v3032 = vpop.f32.mrb[0].mxu0
      %v3033 = vpop.f32.mrb[0].mxu0
      %3034 = vdwg.mxu0
      %v3035 = vadd.f32 %v2658, %v3030
      %v3036 = vld [vmem:[%s55] sm:$0x1]
      %v3037 = vld [vmem:[%s57] sm:$0x1]
      %v3038 = vld [vmem:[%s59] sm:$0xf]
      %v3039 = vld [vmem:[%s59 + $0x4] sm:$0xf]
      %v3040 = vld [vmem:[%s59 + $0x8] sm:$0xf]
      %v3041 = vld [vmem:[%s59 + $0xc] sm:$0xf]
      %v3042 = vld [vmem:[%s61] sm:$0x1]
      %v3043 = vld [vmem:[%s63] sm:$0xf]
      %v3044 = vld [vmem:[%s63 + $0x4] sm:$0xf]
      %v3045 = vld [vmem:[%s63 + $0x8] sm:$0xf]
      %v3046 = vld [vmem:[%s63 + $0xc] sm:$0xf]
      %v3047 = vld [vmem:[%s63 + $0x10] sm:$0xf]
      %v3048 = vld [vmem:[%s63 + $0x14] sm:$0xf]
      %v3049 = vld [vmem:[%s63 + $0x18] sm:$0xf]
      %v3050 = vld [vmem:[%s63 + $0x1c] sm:$0xf]
      %v3051 = vld [vmem:[%s63 + $0x20] sm:$0xf]
      %v3052 = vld [vmem:[%s63 + $0x24] sm:$0xf]
      %v3053 = vld [vmem:[%s63 + $0x28] sm:$0xf]
      %v3054 = vld [vmem:[%s63 + $0x2c] sm:$0xf]
      %v3055 = vld [vmem:[%s63 + $0x30] sm:$0xf]
      %v3056 = vld [vmem:[%s63 + $0x34] sm:$0xf]
      %v3057 = vld [vmem:[%s63 + $0x38] sm:$0xf]
      %v3058 = vld [vmem:[%s63 + $0x3c] sm:$0xf]
      %v3059 = vld [vmem:[%s65] sm:$0x1]
      %v3060 = vsel %vm1092, %v3035, 0.0
      %3061 = vadd.xlane.f32.xlu0 %v3060
      %v3062 = vpop.xlane.xlu0 %3061
      %v3063 = vmul.f32 %v3062, %v1096
      %v3064 = vsub.f32 %v3035, %v3063
      %v3065 = vmul.f32 %v3064, %v3064
      %v3066 = vsel %vm1092, %v3065, 0.0
      %3067 = vadd.xlane.f32.xlu0 %v3066
      %v3068 = vpop.xlane.xlu0 %3067
      %v3069 = vmul.f32 %v3068, %v1096
      %v3070 = vadd.f32 %v3069, 1e-05
      %v3071 = vrsqrt.pop %v3070
      %v3072 = vmul.f32 %v3064, %v3071
      %v3074 = vlaneseq
      %v3075 = vshrl.u32 %v3074, 7
      %v3076 = vsub.s32 0, %v3075
      %v3077 = vrot.slane %v3036, %v3076
      %v3079 = vmul.f32 %v3072, %v3077
      %v3081 = vlaneseq
      %v3082 = vshrl.u32 %v3081, 7
      %v3083 = vsub.s32 0, %v3082
      %v3084 = vrot.slane %v3037, %v3083
      %v3086 = vadd.f32 %v3079, %v3084
      %v3087 = vpack.c.bf16 %v3086, %v3086
      %v3089 = vlaneseq
      %v3090 = vshrl.u32 %v3089, 7
      %v3091 = vsub.s32 0, %v3090
      %v3092 = vrot.slane %v3042, %v3091
      %v3098 = vunpack.c.l.b16 %v3038
      %v3099 = vunpack.c.l.b16 %v3039
      %v3100 = vunpack.c.l.b16 %v3040
      %v3101 = vunpack.c.l.b16 %v3041
      %v3102 = vpack.c.b16 %v3099, %v3098
      %v3103 = vpack.c.b16 %v3101, %v3100
      %v3107 = vsel %vm1092, %v3087, 0
      %3109 = vmatprep.subr.bf16.mxu0 0
      %3110 = vmatpush1.bf16.msra.mxu0 %v3102
      %3111 = vmatprep.subr.bf16.mxu0 0
      %3112 = vmatpush1.bf16.msra.mxu0 %v3103
      %3113 = vmatprep.subr.bf16.mxu0 0
      %3114 = vmatpush1.bf16.msra.mxu0 0
      %3115 = vmatprep.subr.bf16.mxu0 0
      %3116 = vmatpush1.bf16.msra.mxu0 0
      %3117 = vmatprep.subr.bf16.mxu0 0
      %3118 = vmatpush1.bf16.msra.mxu0 0
      %3119 = vmatprep.subr.bf16.mxu0 0
      %3120 = vmatpush1.bf16.msra.mxu0 0
      %3121 = vmatprep.subr.bf16.mxu0 0
      %3122 = vmatpush1.bf16.msra.mxu0 0
      %3123 = vmatprep.subr.bf16.mxu0 0
      %3124 = vmatpush1.bf16.msra.mxu0 0
      %3125 = vmatprep.subr.bf16.mxu0 0
      %3126 = vmatpush1.bf16.msra.mxu0 0
      %3127 = vmatprep.subr.bf16.mxu0 0
      %3128 = vmatpush1.bf16.msra.mxu0 0
      %3129 = vmatprep.subr.bf16.mxu0 0
      %3130 = vmatpush1.bf16.msra.mxu0 0
      %3131 = vmatprep.subr.bf16.mxu0 0
      %3132 = vmatpush1.bf16.msra.mxu0 0
      %3133 = vmatprep.subr.bf16.mxu0 0
      %3134 = vmatpush1.bf16.msra.mxu0 0
      %3135 = vmatprep.subr.bf16.mxu0 0
      %3136 = vmatpush1.bf16.msra.mxu0 0
      %3137 = vmatprep.subr.bf16.mxu0 0
      %3138 = vmatpush1.bf16.msra.mxu0 0
      %3139 = vmatprep.subr.bf16.mxu0 0
      %3140 = vmatpush1.bf16.msra.mxu0 0
      %3141 = vmatprep.mubr.bf16.mxu0 0
      %3142 = vmatmul.mubr.bf16.gmra.mrb[0].mxu0 %v3107
      %v3143 = vpop.f32.mrb[0].mxu0
      %v3144 = vadd.f32 %v3092, %v3143
      %v3145 = vpop.f32.mrb[0].mxu0
      %v3146 = vpop.f32.mrb[0].mxu0
      %v3147 = vpop.f32.mrb[0].mxu0
      %3148 = vdwg.mxu0
      %v3149 = vxor.u32 %v3144, 2147483648
      %v3150 = vmul.f32 %v3149, 1.442695
      %v3151 = vpow.pop %v3150
      %v3152 = vadd.f32 %v3151, 1.0
      %v3153 = vrcp.pop %v3152
      %v3154 = vmul.f32 1.0, %v3153
      %v3155 = vmul.f32 %v3144, %v3154
      %v3156 = vpack.c.bf16 %v3155, %v3155
      %v3158 = vlaneseq
      %v3159 = vshrl.u32 %v3158, 7
      %v3160 = vsub.s32 0, %v3159
      %v3161 = vrot.slane %v3059, %v3160
      %v3179 = vunpack.c.l.b16 %v3043
      %v3180 = vunpack.c.l.b16 %v3044
      %v3181 = vunpack.c.l.b16 %v3045
      %v3182 = vunpack.c.l.b16 %v3046
      %v3183 = vunpack.c.l.b16 %v3047
      %v3184 = vunpack.c.l.b16 %v3048
      %v3185 = vunpack.c.l.b16 %v3049
      %v3186 = vunpack.c.l.b16 %v3050
      %v3187 = vunpack.c.l.b16 %v3051
      %v3188 = vunpack.c.l.b16 %v3052
      %v3189 = vunpack.c.l.b16 %v3053
      %v3190 = vunpack.c.l.b16 %v3054
      %v3191 = vunpack.c.l.b16 %v3055
      %v3192 = vunpack.c.l.b16 %v3056
      %v3193 = vunpack.c.l.b16 %v3057
      %v3194 = vunpack.c.l.b16 %v3058
      %v3195 = vpack.c.b16 %v3180, %v3179
      %v3196 = vpack.c.b16 %v3182, %v3181
      %v3197 = vpack.c.b16 %v3184, %v3183
      %v3198 = vpack.c.b16 %v3186, %v3185
      %v3199 = vpack.c.b16 %v3188, %v3187
      %v3200 = vpack.c.b16 %v3190, %v3189
      %v3201 = vpack.c.b16 %v3192, %v3191
      %v3202 = vpack.c.b16 %v3194, %v3193
      %3211 = vmatprep.subr.bf16.mxu0 0
      %3212 = vmatpush1.bf16.msra.mxu0 %v3195
      %3213 = vmatprep.subr.bf16.mxu0 0
      %3214 = vmatpush1.bf16.msra.mxu0 %v3196
      %3215 = vmatprep.subr.bf16.mxu0 0
      %3216 = vmatpush1.bf16.msra.mxu0 %v3197
      %3217 = vmatprep.subr.bf16.mxu0 0
      %3218 = vmatpush1.bf16.msra.mxu0 %v3198
      %3219 = vmatprep.subr.bf16.mxu0 0
      %3220 = vmatpush1.bf16.msra.mxu0 %v3199
      %3221 = vmatprep.subr.bf16.mxu0 0
      %3222 = vmatpush1.bf16.msra.mxu0 %v3200
      %3223 = vmatprep.subr.bf16.mxu0 0
      %3224 = vmatpush1.bf16.msra.mxu0 %v3201
      %3225 = vmatprep.subr.bf16.mxu0 0
      %3226 = vmatpush1.bf16.msra.mxu0 %v3202
      %3227 = vmatprep.subr.bf16.mxu0 0
      %3228 = vmatpush1.bf16.msra.mxu0 0
      %3229 = vmatprep.subr.bf16.mxu0 0
      %3230 = vmatpush1.bf16.msra.mxu0 0
      %3231 = vmatprep.subr.bf16.mxu0 0
      %3232 = vmatpush1.bf16.msra.mxu0 0
      %3233 = vmatprep.subr.bf16.mxu0 0
      %3234 = vmatpush1.bf16.msra.mxu0 0
      %3235 = vmatprep.subr.bf16.mxu0 0
      %3236 = vmatpush1.bf16.msra.mxu0 0
      %3237 = vmatprep.subr.bf16.mxu0 0
      %3238 = vmatpush1.bf16.msra.mxu0 0
      %3239 = vmatprep.subr.bf16.mxu0 0
      %3240 = vmatpush1.bf16.msra.mxu0 0
      %3241 = vmatprep.subr.bf16.mxu0 0
      %3242 = vmatpush1.bf16.msra.mxu0 0
      %3243 = vmatprep.mubr.bf16.mxu0 0
      %3244 = vmatmul.mubr.bf16.gmra.mrb[0].mxu0 %v3156
      %v3245 = vpop.f32.mrb[0].mxu0
      %v3246 = vadd.f32 %v3161, %v3245
      %v3247 = vpop.f32.mrb[0].mxu0
      %v3248 = vpop.f32.mrb[0].mxu0
      %v3249 = vpop.f32.mrb[0].mxu0
      %3250 = vdwg.mxu0
      %v3251 = vmul.f32 %v3246, 0.5
      %v3252 = vadd.f32 %v3035, %v3251
      %v3253 = vld [vmem:[%s67] sm:$0x1]
      %v3254 = vld [vmem:[%s69] sm:$0x1]
      %v3255 = vsel %vm1092, %v3252, 0.0
      %3256 = vadd.xlane.f32.xlu0 %v3255
      %v3257 = vpop.xlane.xlu0 %3256
      %v3258 = vmul.f32 %v3257, %v1096
      %v3259 = vsub.f32 %v3252, %v3258
      %v3260 = vmul.f32 %v3259, %v3259
      %v3261 = vsel %vm1092, %v3260, 0.0
      %3262 = vadd.xlane.f32.xlu0 %v3261
      %v3263 = vpop.xlane.xlu0 %3262
      %v3264 = vmul.f32 %v3263, %v1096
      %v3265 = vadd.f32 %v3264, 1e-05
      %v3266 = vrsqrt.pop %v3265
      %v3267 = vmul.f32 %v3259, %v3266
      %v3269 = vlaneseq
      %v3270 = vshrl.u32 %v3269, 7
      %v3271 = vsub.s32 0, %v3270
      %v3272 = vrot.slane %v3253, %v3271
      %v3274 = vmul.f32 %v3267, %v3272
      %v3276 = vlaneseq
      %v3277 = vshrl.u32 %v3276, 7
      %v3278 = vsub.s32 0, %v3277
      %v3279 = vrot.slane %v3254, %v3278
      %v3281 = vadd.f32 %v3274, %v3279
      %3282 = vst.msk [vmem:[%s1065] sm:$0xff] %vm1092, %v3281
      %p3283 = scmp.lt.s32.totalorder %s82, 1
      %s3284 = scalar_select %p3283, %s82, 1
      %s3285 = smul.addr %s3284, 8
      %s3286 = scalar_lea.vmem %s71, %s3285
      // Predicated region
      $region161: #{conformer_block.1} parent=159 // pred_check
        %p3287 = pneg %p840
      $region162: #{conformer_block.1} parent=159 // pred_check_branch
        %3289 = sbr.rel (%p3287) target = $region164
      $region163: #{conformer_block.1} parent=159 // pred_region
        _
      $region164: #{conformer_block.1} parent=159 // pred_fallthru
        _
    $region160: #{conformer_block.1} parent=5 // pred_fallthru
      _
    %p3290 = scmp.le.s32.totalorder 2, %s77
    // Predicated region
    $region165: #{conformer_block.1} parent=5 // pred_check
      %p3291 = pneg %p3290
    $region166: #{conformer_block.1} parent=5 // pred_check_branch
      %3293 = sbr.rel (%p3291) target = $region168
    $region167: #{conformer_block.1} parent=5 // pred_region
      %s3294 = ssub.s32 %s77, 2
      // Predicated region
      $region169: #{conformer_block.1} parent=167 // pred_check
        %p3295 = pneg %p846
      $region170: #{conformer_block.1} parent=167 // pred_check_branch
        %3297 = sbr.rel (%p3295) target = $region172
      $region171: #{conformer_block.1} parent=167 // pred_region
        %p3298 = scmp.lt.s32.totalorder %s83, 1
        %s3299 = scalar_select %p3298, %s83, 1
        %s3300 = smul.addr %s3299, 8
        %s3301 = scalar_lea.vmem %s71, %s3300
      $region172: #{conformer_block.1} parent=167 // pred_fallthru
        _
    $region168: #{conformer_block.1} parent=5 // pred_fallthru
      _
  $region6: #{conformer_block.1} parent=0 // loop_footer
    %s81 = sadd.s32 1, %s77
  $region7: #{conformer_block.1} parent=0 // loop_footer_branch
    %76 = sbr.rel target = $region3
  $region8: #{conformer_block.1} parent=0 // loop_exit
    _

</llo_original>
